<compile_context>
chip_gen: v5e
topology: v5e:2x2
jax: 0.10.0
libtpu: 0.0.40
codegen_flags: <defaults>
</compile_context>

<pallas_src>
import functools

import jax
import jax.numpy as jnp
from jax.experimental import pallas as pl
from jax.experimental.pallas import tpu as pltpu


def _silu(x):
    return x * jax.nn.sigmoid(x)


def _round_up(x, m):
    return ((x + m - 1) // m) * m


def _tile_rows(n, cap):
    """Largest multiple of 8 that divides n and is <= cap (fallback 8)."""
    best = 8
    d = 8
    limit = min(n, cap)
    while d <= limit:
        if n % d == 0:
            best = d
        d += 8
    return best


def _vmem_limit_bytes():
    """Per-generation VMEM budget with headroom below physical capacity."""
    try:
        cap = int(pltpu.get_tpu_info().vmem_capacity_bytes)
    except Exception:
        cap = 64 * 1024 * 1024  # conservative fallback (v7x per-core physical size)
    return int(max(32 * 1024 * 1024,
                   min(cap - 16 * 1024 * 1024, 100 * 1024 * 1024)))


# --------------------------- Pallas kernels ---------------------------------

def _mlp_kernel(x_ref, w1_ref, b1_ref, w2_ref, b2_ref, out_ref):
    # interatomic_context_net: Dense(act=silu) -> Dense(act=None)
    h = jnp.dot(x_ref[...], w1_ref[...], preferred_element_type=jnp.float32) + b1_ref[...]
    h = _silu(h)
    out_ref[...] = jnp.dot(h, w2_ref[...], preferred_element_type=jnp.float32) + b2_ref[...]


def _interaction_kernel(posi_ref, posjT_ref, q_ref, mui_ref, x_ref, muj_ref,
                        off_ref, wt_ref, b0_ref, bd_ref, dq_ref, dmu_ref,
                        *, F, ti, tj, coeff, cutoff, resident):
    # Fused: pair geometry + radius-graph mask + filter net (RBF -> MXU matmul -> bias
    # -> cutoff scaling) + per-edge message + scatter_add over receivers, accumulated
    # over the sender grid axis.  dq/dmu are initialized from q/mu (folds q+dq, mu+dmu).
    i = pl.program_id(0)
    j = pl.program_id(1)

    @pl.when(j == 0)
    def _():
        dq_ref[...] = q_ref[...]
        dmu_ref[...] = mui_ref[...]

    posi = posi_ref[...]                                   # (ti, 5): x, y, z, batch, z_type
    posjT = posjT_ref[...]                                 # (5, tj)

    # r_ij = pos[idx_i] - pos[idx_j] (matches the reference sign convention)
    rx = posi[:, 0:1] - posjT[0:1, :]                      # (ti, tj)
    ry = posi[:, 1:2] - posjT[1:2, :]
    rz = posi[:, 2:3] - posjT[2:3, :]
    d = jnp.sqrt(rx * rx + ry * ry + rz * rz)              # (ti, tj)
    inv = pl.reciprocal(d + 1e-6, approx=True)             # EUP, off the VALU slot
    dir_x = rx * inv
    dir_y = ry * inv
    dir_z = rz * inv

    # radius_graph mask: within cutoff, same molecule, no self edges.
    # TODO(synk): radius_graph's max_num_neighbors=32 cap is not enforced.
    row = i * ti + jax.lax.broadcasted_iota(jnp.int32, (ti, tj), 0)
    col = j * tj + jax.lax.broadcasted_iota(jnp.int32, (ti, tj), 1)
    same_batch = posi[:, 3:4] == posjT[3:4, :]
    valid = (d < cutoff) & same_batch & (row != col)
    fcut = 0.5 * (jnp.cos((jnp.pi / cutoff) * d) + 1.0)
    scale = jnp.where(valid, fcut, 0.0)                    # (ti, tj)
    # inter/intra xor of z_type in {0,1}: a ^ b == a + b - 2ab
    xor = posi[:, 4:5] + posjT[4:5, :] - 2.0 * (posi[:, 4:5] * posjT[4:5, :])

    # Fused filter net: Gaussian RBF -> (R, 3F) MXU matmul -> io-emb bias -> cutoff scale.
    off = off_ref[...]                                     # (1, R)
    rbf = jnp.exp(coeff * (d[:, :, None] - off[None, :, :]) ** 2)      # (ti, tj, R)
    R = off.shape[1]
    w = jnp.dot(rbf.reshape(ti * tj, R), wt_ref[...],
                preferred_element_type=jnp.float32).reshape(ti, tj, 3 * F)
    w = (w + b0_ref[...] + xor[:, :, None] * bd_ref[...]) * scale[:, :, None]

    if resident:
        j0 = pl.multiple_of(j * tj, tj)
        xj = x_ref[pl.ds(j0, tj), :]                       # (tj, 3F)
        mu_j = muj_ref[:, pl.ds(j0, tj), :]                # (3, tj, F)
    else:
        xj = x_ref[...]
        mu_j = muj_ref[...]

    m = w * xj[None, :, :]                                 # (ti, tj, 3F)

    # dq contribution: sum over senders of the first feature split
    dq_ref[...] += jnp.sum(m[:, :, :F], axis=1)

    wdmuR = m[:, :, F:2 * F]                               # (ti, tj, F)
    wdmumu = m[:, :, 2 * F:]                               # (ti, tj, F)
    dirs = (dir_x, dir_y, dir_z)
    dmu_acc = [
        jnp.sum(wdmuR * dirs[c][:, :, None] + wdmumu * mu_j[c][None, :, :], axis=1)
        for c in range(3)
    ]
    dmu_ref[...] += jnp.stack(dmu_acc, axis=0)             # single (3, ti, F) RMW


def _mixing_kernel(q_ref, mu_ref, wmix_ref, w1_ref, b1_ref, w2_ref, b2_ref,
                   gamma_ref, beta_ref, qo_ref, muo_ref, *, F, eps):
    tn = q_ref.shape[0]
    q = q_ref[...]                                         # (tn, F)
    mu = mu_ref[...]                                       # (3, tn, F)

    # mu_channel_mix: one fused (3*tn, F)@(F, 2F) MXU matmul
    mix = jnp.dot(mu.reshape(3 * tn, F), wmix_ref[...],
                  preferred_element_type=jnp.float32).reshape(3, tn, 2 * F)
    V = mix[:, :, :F]                                      # mu_V: (3, tn, F)
    W = mix[:, :, F:]                                      # mu_W: (3, tn, F)
    mu_Vn = jnp.sqrt(jnp.sum(V * V, axis=0) + eps)         # (tn, F)

    # intraatomic context net: single (tn, 2F)@(2F, F) matmul (lane concat at F boundary)
    ctx = jnp.concatenate([q, mu_Vn], axis=-1)             # (tn, 2F)
    h = _silu(jnp.dot(ctx, w1_ref[...], preferred_element_type=jnp.float32) + b1_ref[...])
    x = jnp.dot(h, w2_ref[...], preferred_element_type=jnp.float32) + b2_ref[...]  # (tn, 3F)

    dq_intra = x[:, :F]
    dmu_intra = x[:, F:2 * F]
    dqmu_intra = x[:, 2 * F:]

    vw = jnp.sum(V * W, axis=0)                            # <mu_V, mu_W> over spatial axis

    # LayerNorm(q + dq_intra + dqmu_intra * <mu_V, mu_W>), eps = 1e-5 (torch default)
    qn = q + dq_intra + dqmu_intra * vw
    mean = jnp.mean(qn, axis=-1, keepdims=True)
    var = jnp.mean((qn - mean) ** 2, axis=-1, keepdims=True)
    qn = (qn - mean) * jax.lax.rsqrt(var + 1e-5)
    qo_ref[...] = qn * gamma_ref[...] + beta_ref[...]

    # TODO(synk): VectorNorm is not defined in the reference module; assumed to be
    # L2 normalization over the spatial (dim=-2) axis with the same epsilon.
    mnew = mu + dmu_intra[None, :, :] * W                  # (3, tn, F)
    inv_n = jax.lax.rsqrt(jnp.sum(mnew * mnew, axis=0) + eps)
    muo_ref[...] = mnew * inv_n[None, :, :]


# --------------------------- pallas_call wrappers ----------------------------

def _pcall_mlp(x, w1, b1, w2, b2, *, tn, vmem_limit):
    N_pad, Fin = x.shape
    Fh = w1.shape[1]
    Fout = w2.shape[1]
    return pl.pallas_call(
        _mlp_kernel,
        out_shape=jax.ShapeDtypeStruct((N_pad, Fout), jnp.float32),
        grid=(N_pad // tn,),
        in_specs=[
            pl.BlockSpec((tn, Fin), lambda i: (i, 0)),
            pl.BlockSpec((Fin, Fh), lambda i: (0, 0)),
            pl.BlockSpec((1, Fh), lambda i: (0, 0)),
            pl.BlockSpec((Fh, Fout), lambda i: (0, 0)),
            pl.BlockSpec((1, Fout), lambda i: (0, 0)),
        ],
        out_specs=pl.BlockSpec((tn, Fout), lambda i: (i, 0)),
        compiler_params=pltpu.CompilerParams(
            dimension_semantics=("parallel",), vmem_limit_bytes=vmem_limit),
    )(x, w1, b1.reshape(1, Fh), w2, b2.reshape(1, Fout))


def _pcall_interaction(pos5, pos5T, q, mu, x, off, wt, b0, bd, *, F, R, ti, tj,
                       coeff, cutoff, resident, vmem_limit):
    N_pad = q.shape[0]
    kernel = functools.partial(_interaction_kernel, F=F, ti=ti, tj=tj, coeff=coeff,
                               cutoff=cutoff, resident=resident)
    if resident:
        x_spec = pl.BlockSpec((N_pad, 3 * F), lambda i, j: (0, 0))
        muj_spec = pl.BlockSpec((3, N_pad, F), lambda i, j: (0, 0, 0))
    else:
        x_spec = pl.BlockSpec((tj, 3 * F), lambda i, j: (j, 0))
        muj_spec = pl.BlockSpec((3, tj, F), lambda i, j: (0, j, 0))
    return pl.pallas_call(
        kernel,
        out_shape=(jax.ShapeDtypeStruct((N_pad, F), jnp.float32),
                   jax.ShapeDtypeStruct((3, N_pad, F), jnp.float32)),
        grid=(N_pad // ti, N_pad // tj),
        in_specs=[
            pl.BlockSpec((ti, 5), lambda i, j: (i, 0)),        # pos/batch/z_type rows i
            pl.BlockSpec((5, tj), lambda i, j: (0, j)),        # transposed, cols j
            pl.BlockSpec((ti, F), lambda i, j: (i, 0)),        # q (for dq init)
            pl.BlockSpec((3, ti, F), lambda i, j: (0, i, 0)),  # mu (for dmu init)
            x_spec,                                            # x (sender features)
            muj_spec,                                          # mu (sender vectors)
            pl.BlockSpec((1, R), lambda i, j: (0, 0)),         # rbf offsets
            pl.BlockSpec((R, 3 * F), lambda i, j: (0, 0)),     # filter weight (this t)
            pl.BlockSpec((1, 3 * F), lambda i, j: (0, 0)),     # bias + io_emb[0] proj
            pl.BlockSpec((1, 3 * F), lambda i, j: (0, 0)),     # (io_emb[1]-io_emb[0]) proj
        ],
        out_specs=(pl.BlockSpec((ti, F), lambda i, j: (i, 0)),
                   pl.BlockSpec((3, ti, F), lambda i, j: (0, i, 0))),
        compiler_params=pltpu.CompilerParams(
            dimension_semantics=("parallel", "arbitrary"),
            vmem_limit_bytes=vmem_limit),
    )(pos5, pos5T, q, mu, x, mu, off, wt, b0, bd)


def _pcall_mixing(q, mu, p, *, F, eps, tn, vmem_limit):
    N_pad = q.shape[0]
    kernel = functools.partial(_mixing_kernel, F=F, eps=eps)
    return pl.pallas_call(
        kernel,
        out_shape=(jax.ShapeDtypeStruct((N_pad, F), jnp.float32),
                   jax.ShapeDtypeStruct((3, N_pad, F), jnp.float32)),
        grid=(N_pad // tn,),
        in_specs=[
            pl.BlockSpec((tn, F), lambda i: (i, 0)),
            pl.BlockSpec((3, tn, F), lambda i: (0, i, 0)),
            pl.BlockSpec((F, 2 * F), lambda i: (0, 0)),
            pl.BlockSpec((2 * F, F), lambda i: (0, 0)),
            pl.BlockSpec((1, F), lambda i: (0, 0)),
            pl.BlockSpec((F, 3 * F), lambda i: (0, 0)),
            pl.BlockSpec((1, 3 * F), lambda i: (0, 0)),
            pl.BlockSpec((1, F), lambda i: (0, 0)),
            pl.BlockSpec((1, F), lambda i: (0, 0)),
        ],
        out_specs=(pl.BlockSpec((tn, F), lambda i: (i, 0)),
                   pl.BlockSpec((3, tn, F), lambda i: (0, i, 0))),
        compiler_params=pltpu.CompilerParams(
            dimension_semantics=("parallel",), vmem_limit_bytes=vmem_limit),
    )(q, mu, p["wmix"], p["w1"], p["b1"].reshape(1, F), p["w2"],
      p["b2"].reshape(1, 3 * F), p["gamma"].reshape(1, F), p["beta"].reshape(1, F))


# --------------------------- forward pass ------------------------------------

def painn_forward(params, z, pos, z_type, z_res, batch, *, cutoff, n_atom_basis,
                  n_rbf, n_interactions, epsilon=1e-8):
    F = n_atom_basis
    T = n_interactions
    R = n_rbf
    N = z.shape[0]

    # ---- pad atom count for TPU-friendly tiling (pads contribute exactly zero) ----
    N_pad = _round_up(N, 8) if N <= 128 else _round_up(N, 128)
    pad = N_pad - N
    pos_p = pos.astype(jnp.float32)
    batch_p = batch.astype(jnp.int32)
    z_p, z_type_p, z_res_p = z, z_type, z_res
    if pad:
        far = 1e6 * jnp.arange(1, pad + 1, dtype=jnp.float32)[:, None] * jnp.ones((1, 3), jnp.float32)
        pos_p = jnp.concatenate([pos_p, far], axis=0)
        batch_p = jnp.concatenate([batch_p, -jnp.arange(1, pad + 1, dtype=jnp.int32)])
        z_p = jnp.concatenate([z, jnp.zeros((pad,), z.dtype)])
        z_type_p = jnp.concatenate([z_type, jnp.zeros((pad,), z_type.dtype)])
        z_res_p = jnp.concatenate([z_res, jnp.zeros((pad,), z_res.dtype)])

    # per-atom geometry block [x, y, z, batch, z_type] consumed by the fused kernel
    pos5 = jnp.concatenate(
        [pos_p, batch_p[:, None].astype(jnp.float32), z_type_p[:, None].astype(jnp.float32)],
        axis=1)                                             # (N_pad, 5)
    pos5T = pos5.T                                          # (5, N_pad)

    # ---- filter-net constants (host-side per-interaction weight slices) ----
    # TODO(synk): radial_basis / cutoff_fn are constructor args in the reference;
    # assumed GaussianRBF over linspace(0, cutoff, n_rbf) and a cosine cutoff.
    width = cutoff / max(R - 1, 1)
    coeff = -0.5 / (width * width)
    offsets = jnp.asarray([cutoff * r / max(R - 1, 1) for r in range(R)],
                          jnp.float32).reshape(1, R)
    io0 = params["io_emb"][0]
    iod = params["io_emb"][1] - io0
    bio0_all = io0 @ params["filt_w"] + params["filt_b"]    # (T*3F,)
    biod_all = iod @ params["filt_w"]                       # (T*3F,)

    # ---- atom features ----
    q = (params["emb"][z_p] + params["res_emb"][z_res_p]).astype(jnp.float32)  # (N_pad, F)
    mu = jnp.zeros((3, N_pad, F), jnp.float32)

    # ---- tile sizing from the per-generation VMEM budget ----
    vmem_limit = _vmem_limit_bytes()
    tn = _tile_rows(N_pad, 256)
    tj = N_pad if N_pad <= 128 else 128
    # per-(i,j)-tile temporaries: rbf (R), filter + message (2*3F), dmu temps (~3F), scalars
    row_bytes = tj * 4 * (R + 9 * F + 16)
    temp_budget = max(2 * 1024 * 1024, vmem_limit // 3)
    ti_cap = max(8, min(128, temp_budget // row_bytes))
    if N_pad >= 16:
        ti_cap = min(ti_cap, max(8, N_pad // 2))            # keep >=2 i-steps (v7x megacore)
    ti = _tile_rows(N_pad, ti_cap)
    # x / mu VMEM-resident in the interaction kernel when they fit a modest budget
    resident_bytes = 2 * (N_pad * 3 * F * 4 + 3 * N_pad * F * 4)
    resident = resident_bytes <= max(4 * 1024 * 1024, vmem_limit // 4)

    for t in range(T):
        ip = params["inter"][t]
        x = _pcall_mlp(q, ip["w1"], ip["b1"], ip["w2"], ip["b2"],
                       tn=tn, vmem_limit=vmem_limit)        # (N_pad, 3F)
        wt = params["filt_w"][:, t * 3 * F:(t + 1) * 3 * F]              # (R, 3F)
        b0 = bio0_all[t * 3 * F:(t + 1) * 3 * F].reshape(1, 3 * F)
        bd = biod_all[t * 3 * F:(t + 1) * 3 * F].reshape(1, 3 * F)
        # outputs are already q + dq and mu + dmu (folded into the kernel)
        q, mu = _pcall_interaction(pos5, pos5T, q, mu, x, offsets, wt, b0, bd,
                                   F=F, R=R, ti=ti, tj=tj, coeff=coeff, cutoff=cutoff,
                                   resident=resident, vmem_limit=vmem_limit)
        q, mu = _pcall_mixing(q, mu, params["mix"][t], F=F, eps=epsilon,
                              tn=tn, vmem_limit=vmem_limit)

    q_out = q[:N][:, None, :]                               # (N, 1, F) to match torch
    mu_out = jnp.transpose(mu, (1, 0, 2))[:N]               # (N, 3, F)
    return q_out, mu_out


# --------------------------- parameter init ----------------------------------

def _xavier(key, fan_in, fan_out):
    bound = (6.0 / (fan_in + fan_out)) ** 0.5
    return jax.random.uniform(key, (fan_in, fan_out), jnp.float32, -bound, bound)


def make_params(key, F, R, T, max_z):
    keys = iter(jax.random.split(key, 64))
    params = {
        "emb": 0.1 * jax.random.normal(next(keys), (max_z, F), jnp.float32),
        "res_emb": 0.1 * jax.random.normal(next(keys), (max_z, F), jnp.float32),
        "io_emb": 0.1 * jax.random.normal(next(keys), (2, R), jnp.float32),
        "filt_w": _xavier(next(keys), R, T * 3 * F),
        "filt_b": jnp.zeros((T * 3 * F,), jnp.float32),
        "inter": [],
        "mix": [],
    }
    for _ in range(T):
        params["inter"].append({
            "w1": _xavier(next(keys), F, F),
            "b1": jnp.zeros((F,), jnp.float32),
            "w2": _xavier(next(keys), F, 3 * F),
            "b2": jnp.zeros((3 * F,), jnp.float32),
        })
    for _ in range(T):
        params["mix"].append({
            "wmix": _xavier(next(keys), F, 2 * F),
            "w1": _xavier(next(keys), 2 * F, F),
            "b1": jnp.zeros((F,), jnp.float32),
            "w2": _xavier(next(keys), F, 3 * F),
            "b2": jnp.zeros((3 * F,), jnp.float32),
            "gamma": jnp.ones((F,), jnp.float32),
            "beta": jnp.zeros((F,), jnp.float32),
        })
    return params


# --------------------------- demo --------------------------------------------

if __name__ == "__main__":
    key = jax.random.PRNGKey(0)
    # F=128 keeps all feature splits lane-tile aligned; N=20 exercises the padding path.
    N, F, R, T, max_z, cutoff = 20, 128, 16, 2, 10, 5.0
    kz, kp, kt, kr, kparam = jax.random.split(key, 5)

    z = jax.random.randint(kz, (N,), 1, max_z)
    pos = 2.0 * jax.random.normal(kp, (N, 3), jnp.float32)
    z_type = jax.random.randint(kt, (N,), 0, 2)
    z_res = jax.random.randint(kr, (N,), 0, max_z)
    batch = jnp.zeros((N,), jnp.int32)

    params = make_params(kparam, F, R, T, max_z)

    fwd = jax.jit(functools.partial(painn_forward, cutoff=cutoff, n_atom_basis=F,
                                    n_rbf=R, n_interactions=T))
    q_out, mu_out = fwd(params, z, pos, z_type, z_res, batch)
    jax.block_until_ready((q_out, mu_out))

    assert q_out.shape == (N, 1, F) and mu_out.shape == (N, 3, F)
    assert bool(jnp.all(jnp.isfinite(q_out))) and bool(jnp.all(jnp.isfinite(mu_out)))
    print("KERNEL_OK")
</pallas_src>

<mosaic_0001>
module attributes {stable_mosaic.version = 11 : i64} {
  func.func @_mixing_kernel(%arg0: i32, %arg1: memref<24x128xf32, #tpu.memory_space<vmem>>, %arg2: memref<3x24x128xf32, #tpu.memory_space<vmem>>, %arg3: memref<128x256xf32, #tpu.memory_space<vmem>>, %arg4: memref<256x128xf32, #tpu.memory_space<vmem>>, %arg5: memref<1x128xf32, #tpu.memory_space<vmem>>, %arg6: memref<128x384xf32, #tpu.memory_space<vmem>>, %arg7: memref<1x384xf32, #tpu.memory_space<vmem>>, %arg8: memref<1x128xf32, #tpu.memory_space<vmem>>, %arg9: memref<1x128xf32, #tpu.memory_space<vmem>>, %arg10: memref<24x128xf32, #tpu.memory_space<vmem>>, %arg11: memref<3x24x128xf32, #tpu.memory_space<vmem>>) attributes {dimension_semantics = [#tpu.dimension_semantics<parallel>], iteration_bounds = array<i64: 1>, scalar_prefetch = 0 : i64, scratch_operands = 0 : i64, tpu.core_type = #tpu.core_type<tc>, window_params = [{transform_indices = @transform_0, window_bounds = array<i64: 24, 128>}, {transform_indices = @transform_1, window_bounds = array<i64: 3, 24, 128>}, {pipeline_mode = #tpu.pipeline_mode<synchronous>, transform_indices = @transform_2, window_bounds = array<i64: 128, 256>}, {pipeline_mode = #tpu.pipeline_mode<synchronous>, transform_indices = @transform_3, window_bounds = array<i64: 256, 128>}, {pipeline_mode = #tpu.pipeline_mode<synchronous>, transform_indices = @transform_4, window_bounds = array<i64: 1, 128>}, {pipeline_mode = #tpu.pipeline_mode<synchronous>, transform_indices = @transform_5, window_bounds = array<i64: 128, 384>}, {pipeline_mode = #tpu.pipeline_mode<synchronous>, transform_indices = @transform_6, window_bounds = array<i64: 1, 384>}, {pipeline_mode = #tpu.pipeline_mode<synchronous>, transform_indices = @transform_7, window_bounds = array<i64: 1, 128>}, {pipeline_mode = #tpu.pipeline_mode<synchronous>, transform_indices = @transform_8, window_bounds = array<i64: 1, 128>}, {transform_indices = @transform_9, window_bounds = array<i64: 24, 128>}, {transform_indices = @transform_10, window_bounds = array<i64: 3, 24, 128>}]} {
    %c0 = arith.constant 0 : index
    %c0_0 = arith.constant 0 : index
    %0 = vector.load %arg1[%c0, %c0_0] : memref<24x128xf32, #tpu.memory_space<vmem>>, vector<24x128xf32>
    %c0_1 = arith.constant 0 : index
    %c0_2 = arith.constant 0 : index
    %c0_3 = arith.constant 0 : index
    %1 = vector.load %arg2[%c0_1, %c0_2, %c0_3] : memref<3x24x128xf32, #tpu.memory_space<vmem>>, vector<3x24x128xf32>
    %2 = vector.shape_cast %1 : vector<3x24x128xf32> to vector<72x128xf32>
    %c0_4 = arith.constant 0 : index
    %c0_5 = arith.constant 0 : index
    %3 = vector.load %arg3[%c0_4, %c0_5] : memref<128x256xf32, #tpu.memory_space<vmem>>, vector<128x256xf32>
    %cst = arith.constant dense<0.000000e+00> : vector<72x256xf32>
    %4 = tpu.matmul %2, %3, %cst {dimension_numbers = #tpu.dot_dimension_numbers<[1], [0], [0], [1], [0, 0, 1, 1], [], []>} : vector<72x128xf32>, vector<128x256xf32>, vector<72x256xf32> -> vector<72x256xf32>
    %5 = vector.shape_cast %4 : vector<72x256xf32> to vector<3x24x256xf32>
    %6 = vector.extract_strided_slice %5 {offsets = [0, 0, 0], sizes = [3, 24, 128], strides = [1, 1, 1]} : vector<3x24x256xf32> to vector<3x24x128xf32>
    %7 = vector.extract_strided_slice %5 {offsets = [0, 0, 128], sizes = [3, 24, 128], strides = [1, 1, 1]} : vector<3x24x256xf32> to vector<3x24x128xf32>
    %8 = arith.mulf %6, %6 : vector<3x24x128xf32>
    %cst_6 = arith.constant dense<0.000000e+00> : vector<24x128xf32>
    %9 = vector.multi_reduction <add>, %8, %cst_6 [0] : vector<3x24x128xf32> to vector<24x128xf32>
    %cst_7 = arith.constant 9.99999993E-9 : f32
    %10 = vector.broadcast %cst_7 : f32 to vector<24x128xf32>
    %11 = arith.addf %9, %10 : vector<24x128xf32>
    %12 = math.sqrt %11 : vector<24x128xf32>
    %13 = tpu.concatenate %0, %12 in 1 : vector<24x128xf32>, vector<24x128xf32> -> vector<24x256xf32>
    %c0_8 = arith.constant 0 : index
    %c0_9 = arith.constant 0 : index
    %14 = vector.load %arg4[%c0_8, %c0_9] : memref<256x128xf32, #tpu.memory_space<vmem>>, vector<256x128xf32>
    %cst_10 = arith.constant dense<0.000000e+00> : vector<24x128xf32>
    %15 = tpu.matmul %13, %14, %cst_10 {dimension_numbers = #tpu.dot_dimension_numbers<[1], [0], [0], [1], [0, 0, 1, 1], [], []>} : vector<24x256xf32>, vector<256x128xf32>, vector<24x128xf32> -> vector<24x128xf32>
    %c0_11 = arith.constant 0 : index
    %c0_12 = arith.constant 0 : index
    %16 = vector.load %arg5[%c0_11, %c0_12] : memref<1x128xf32, #tpu.memory_space<vmem>>, vector<1x128xf32>
    %17 = vector.broadcast %16 : vector<1x128xf32> to vector<24x128xf32>
    %18 = arith.addf %15, %17 : vector<24x128xf32>
    %19 = arith.negf %18 : vector<24x128xf32>
    %20 = math.exp %19 : vector<24x128xf32>
    %cst_13 = arith.constant 1.000000e+00 : f32
    %21 = vector.broadcast %cst_13 : f32 to vector<24x128xf32>
    %22 = arith.addf %21, %20 : vector<24x128xf32>
    %23 = arith.divf %21, %22 : vector<24x128xf32>
    %24 = arith.mulf %18, %23 : vector<24x128xf32>
    %c0_14 = arith.constant 0 : index
    %c0_15 = arith.constant 0 : index
    %25 = vector.load %arg6[%c0_14, %c0_15] : memref<128x384xf32, #tpu.memory_space<vmem>>, vector<128x384xf32>
    %cst_16 = arith.constant dense<0.000000e+00> : vector<24x384xf32>
    %26 = tpu.matmul %24, %25, %cst_16 {dimension_numbers = #tpu.dot_dimension_numbers<[1], [0], [0], [1], [0, 0, 1, 1], [], []>} : vector<24x128xf32>, vector<128x384xf32>, vector<24x384xf32> -> vector<24x384xf32>
    %c0_17 = arith.constant 0 : index
    %c0_18 = arith.constant 0 : index
    %27 = vector.load %arg7[%c0_17, %c0_18] : memref<1x384xf32, #tpu.memory_space<vmem>>, vector<1x384xf32>
    %28 = vector.broadcast %27 : vector<1x384xf32> to vector<24x384xf32>
    %29 = arith.addf %26, %28 : vector<24x384xf32>
    %30 = vector.extract_strided_slice %29 {offsets = [0, 0], sizes = [24, 128], strides = [1, 1]} : vector<24x384xf32> to vector<24x128xf32>
    %31 = vector.extract_strided_slice %29 {offsets = [0, 128], sizes = [24, 128], strides = [1, 1]} : vector<24x384xf32> to vector<24x128xf32>
    %32 = vector.extract_strided_slice %29 {offsets = [0, 256], sizes = [24, 128], strides = [1, 1]} : vector<24x384xf32> to vector<24x128xf32>
    %33 = arith.mulf %6, %7 : vector<3x24x128xf32>
    %cst_19 = arith.constant dense<0.000000e+00> : vector<24x128xf32>
    %34 = vector.multi_reduction <add>, %33, %cst_19 [0] : vector<3x24x128xf32> to vector<24x128xf32>
    %35 = arith.addf %0, %30 : vector<24x128xf32>
    %36 = arith.mulf %32, %34 : vector<24x128xf32>
    %37 = arith.addf %35, %36 : vector<24x128xf32>
    %cst_20 = arith.constant dense<0.000000e+00> : vector<24xf32>
    %38 = vector.multi_reduction <add>, %37, %cst_20 [1] : vector<24x128xf32> to vector<24xf32>
    %39 = vector.shape_cast %38 : vector<24xf32> to vector<24x1xf32>
    %cst_21 = arith.constant 1.280000e+02 : f32
    %40 = vector.broadcast %cst_21 : f32 to vector<24x1xf32>
    %41 = arith.divf %39, %40 : vector<24x1xf32>
    %42 = vector.broadcast %41 : vector<24x1xf32> to vector<24x128xf32>
    %43 = arith.subf %37, %42 : vector<24x128xf32>
    %44 = arith.mulf %43, %43 : vector<24x128xf32>
    %cst_22 = arith.constant dense<0.000000e+00> : vector<24xf32>
    %45 = vector.multi_reduction <add>, %44, %cst_22 [1] : vector<24x128xf32> to vector<24xf32>
    %46 = vector.shape_cast %45 : vector<24xf32> to vector<24x1xf32>
    %cst_23 = arith.constant 1.280000e+02 : f32
    %47 = vector.broadcast %cst_23 : f32 to vector<24x1xf32>
    %48 = arith.divf %46, %47 : vector<24x1xf32>
    %49 = vector.broadcast %41 : vector<24x1xf32> to vector<24x128xf32>
    %50 = arith.subf %37, %49 : vector<24x128xf32>
    %cst_24 = arith.constant 9.99999974E-6 : f32
    %51 = vector.broadcast %cst_24 : f32 to vector<24x1xf32>
    %52 = arith.addf %48, %51 : vector<24x1xf32>
    %53 = math.rsqrt %52 : vector<24x1xf32>
    %54 = vector.broadcast %53 : vector<24x1xf32> to vector<24x128xf32>
    %55 = arith.mulf %50, %54 : vector<24x128xf32>
    %c0_25 = arith.constant 0 : index
    %c0_26 = arith.constant 0 : index
    %56 = vector.load %arg8[%c0_25, %c0_26] : memref<1x128xf32, #tpu.memory_space<vmem>>, vector<1x128xf32>
    %57 = vector.broadcast %56 : vector<1x128xf32> to vector<24x128xf32>
    %58 = arith.mulf %55, %57 : vector<24x128xf32>
    %c0_27 = arith.constant 0 : index
    %c0_28 = arith.constant 0 : index
    %59 = vector.load %arg9[%c0_27, %c0_28] : memref<1x128xf32, #tpu.memory_space<vmem>>, vector<1x128xf32>
    %60 = vector.broadcast %59 : vector<1x128xf32> to vector<24x128xf32>
    %61 = arith.addf %58, %60 : vector<24x128xf32>
    %c0_29 = arith.constant 0 : index
    %c0_30 = arith.constant 0 : index
    %62 = vector.load %arg10[%c0_29, %c0_30] : memref<24x128xf32, #tpu.memory_space<vmem>>, vector<24x128xf32>
    tpu.vector_store %arg10[%c0_29, %c0_30], %61 {strides = array<i32>} : memref<24x128xf32, #tpu.memory_space<vmem>>, vector<24x128xf32>,
    %63 = vector.shape_cast %31 : vector<24x128xf32> to vector<1x24x128xf32>
    %64 = vector.broadcast %63 : vector<1x24x128xf32> to vector<3x24x128xf32>
    %65 = arith.mulf %64, %7 : vector<3x24x128xf32>
    %66 = arith.addf %1, %65 : vector<3x24x128xf32>
    %67 = arith.mulf %66, %66 : vector<3x24x128xf32>
    %cst_31 = arith.constant dense<0.000000e+00> : vector<24x128xf32>
    %68 = vector.multi_reduction <add>, %67, %cst_31 [0] : vector<3x24x128xf32> to vector<24x128xf32>
    %cst_32 = arith.constant 9.99999993E-9 : f32
    %69 = vector.broadcast %cst_32 : f32 to vector<24x128xf32>
    %70 = arith.addf %68, %69 : vector<24x128xf32>
    %71 = math.rsqrt %70 : vector<24x128xf32>
    %72 = vector.shape_cast %71 : vector<24x128xf32> to vector<1x24x128xf32>
    %73 = vector.broadcast %72 : vector<1x24x128xf32> to vector<3x24x128xf32>
    %74 = arith.mulf %66, %73 : vector<3x24x128xf32>
    %c0_33 = arith.constant 0 : index
    %c0_34 = arith.constant 0 : index
    %c0_35 = arith.constant 0 : index
    %75 = vector.load %arg11[%c0_33, %c0_34, %c0_35] : memref<3x24x128xf32, #tpu.memory_space<vmem>>, vector<3x24x128xf32>
    tpu.vector_store %arg11[%c0_33, %c0_34, %c0_35], %74 {strides = array<i32>} : memref<3x24x128xf32, #tpu.memory_space<vmem>>, vector<3x24x128xf32>,
    return
  }
  func.func @transform_0(%arg0: i32) -> (i32, i32) {
    %c0_i32 = arith.constant 0 : i32
    %c0_i32_0 = arith.constant 0 : i32
    return %arg0, %c0_i32 : i32, i32
  }
  func.func @transform_1(%arg0: i32) -> (i32, i32, i32) {
    %c0_i32 = arith.constant 0 : i32
    %c0_i32_0 = arith.constant 0 : i32
    %c0_i32_1 = arith.constant 0 : i32
    return %c0_i32, %arg0, %c0_i32_0 : i32, i32, i32
  }
  func.func @transform_2(%arg0: i32) -> (i32, i32) {
    %c0_i32 = arith.constant 0 : i32
    %c0_i32_0 = arith.constant 0 : i32
    %c0_i32_1 = arith.constant 0 : i32
    return %c0_i32, %c0_i32_0 : i32, i32
  }
  func.func @transform_3(%arg0: i32) -> (i32, i32) {
    %c0_i32 = arith.constant 0 : i32
    %c0_i32_0 = arith.constant 0 : i32
    %c0_i32_1 = arith.constant 0 : i32
    return %c0_i32, %c0_i32_0 : i32, i32
  }
  func.func @transform_4(%arg0: i32) -> (i32, i32) {
    %c0_i32 = arith.constant 0 : i32
    %c0_i32_0 = arith.constant 0 : i32
    %c0_i32_1 = arith.constant 0 : i32
    return %c0_i32, %c0_i32_0 : i32, i32
  }
  func.func @transform_5(%arg0: i32) -> (i32, i32) {
    %c0_i32 = arith.constant 0 : i32
    %c0_i32_0 = arith.constant 0 : i32
    %c0_i32_1 = arith.constant 0 : i32
    return %c0_i32, %c0_i32_0 : i32, i32
  }
  func.func @transform_6(%arg0: i32) -> (i32, i32) {
    %c0_i32 = arith.constant 0 : i32
    %c0_i32_0 = arith.constant 0 : i32
    %c0_i32_1 = arith.constant 0 : i32
    return %c0_i32, %c0_i32_0 : i32, i32
  }
  func.func @transform_7(%arg0: i32) -> (i32, i32) {
    %c0_i32 = arith.constant 0 : i32
    %c0_i32_0 = arith.constant 0 : i32
    %c0_i32_1 = arith.constant 0 : i32
    return %c0_i32, %c0_i32_0 : i32, i32
  }
  func.func @transform_8(%arg0: i32) -> (i32, i32) {
    %c0_i32 = arith.constant 0 : i32
    %c0_i32_0 = arith.constant 0 : i32
    %c0_i32_1 = arith.constant 0 : i32
    return %c0_i32, %c0_i32_0 : i32, i32
  }
  func.func @transform_9(%arg0: i32) -> (i32, i32) {
    %c0_i32 = arith.constant 0 : i32
    %c0_i32_0 = arith.constant 0 : i32
    return %arg0, %c0_i32 : i32, i32
  }
  func.func @transform_10(%arg0: i32) -> (i32, i32, i32) {
    %c0_i32 = arith.constant 0 : i32
    %c0_i32_0 = arith.constant 0 : i32
    %c0_i32_1 = arith.constant 0 : i32
    return %c0_i32, %arg0, %c0_i32_0 : i32, i32, i32
  }
}

module attributes {stable_mosaic.version = 11 : i64} {
  func.func @_interaction_kernel(%arg0: i32, %arg1: i32, %arg2: memref<8x5xf32, #tpu.memory_space<vmem>>, %arg3: memref<5x24xf32, #tpu.memory_space<vmem>>, %arg4: memref<8x128xf32, #tpu.memory_space<vmem>>, %arg5: memref<3x8x128xf32, #tpu.memory_space<vmem>>, %arg6: memref<24x384xf32, #tpu.memory_space<vmem>>, %arg7: memref<3x24x128xf32, #tpu.memory_space<vmem>>, %arg8: memref<1x16xf32, #tpu.memory_space<vmem>>, %arg9: memref<16x384xf32, #tpu.memory_space<vmem>>, %arg10: memref<1x384xf32, #tpu.memory_space<vmem>>, %arg11: memref<1x384xf32, #tpu.memory_space<vmem>>, %arg12: memref<8x128xf32, #tpu.memory_space<vmem>>, %arg13: memref<3x8x128xf32, #tpu.memory_space<vmem>>) attributes {dimension_semantics = [#tpu.dimension_semantics<parallel>, #tpu.dimension_semantics<arbitrary>], iteration_bounds = array<i64: 3, 1>, scalar_prefetch = 0 : i64, scratch_operands = 0 : i64, tpu.core_type = #tpu.core_type<tc>, window_params = [{transform_indices = @transform_0, window_bounds = array<i64: 8, 5>}, {transform_indices = @transform_1, window_bounds = array<i64: 5, 24>}, {transform_indices = @transform_2, window_bounds = array<i64: 8, 128>}, {transform_indices = @transform_3, window_bounds = array<i64: 3, 8, 128>}, {pipeline_mode = #tpu.pipeline_mode<synchronous>, transform_indices = @transform_4, window_bounds = array<i64: 24, 384>}, {pipeline_mode = #tpu.pipeline_mode<synchronous>, transform_indices = @transform_5, window_bounds = array<i64: 3, 24, 128>}, {pipeline_mode = #tpu.pipeline_mode<synchronous>, transform_indices = @transform_6, window_bounds = array<i64: 1, 16>}, {pipeline_mode = #tpu.pipeline_mode<synchronous>, transform_indices = @transform_7, window_bounds = array<i64: 16, 384>}, {pipeline_mode = #tpu.pipeline_mode<synchronous>, transform_indices = @transform_8, window_bounds = array<i64: 1, 384>}, {pipeline_mode = #tpu.pipeline_mode<synchronous>, transform_indices = @transform_9, window_bounds = array<i64: 1, 384>}, {transform_indices = @transform_10, window_bounds = array<i64: 8, 128>}, {transform_indices = @transform_11, window_bounds = array<i64: 3, 8, 128>}]} {
    %c0_i32 = arith.constant 0 : i32
    %0 = arith.cmpi eq, %arg1, %c0_i32 : i32
    %1 = arith.extui %0 : i1 to i32
    %c0_i32_0 = arith.constant 0 : i32
    %2 = arith.cmpi ne, %1, %c0_i32_0 : i32
    scf.if %2 {
      %c0_38 = arith.constant 0 : index
      %c0_39 = arith.constant 0 : index
      %153 = vector.load %arg4[%c0_38, %c0_39] : memref<8x128xf32, #tpu.memory_space<vmem>>, vector<8x128xf32>
      %c0_40 = arith.constant 0 : index
      %c0_41 = arith.constant 0 : index
      %154 = vector.load %arg12[%c0_40, %c0_41] : memref<8x128xf32, #tpu.memory_space<vmem>>, vector<8x128xf32>
      tpu.vector_store %arg12[%c0_40, %c0_41], %153 {strides = array<i32>} : memref<8x128xf32, #tpu.memory_space<vmem>>, vector<8x128xf32>,
      %c0_42 = arith.constant 0 : index
      %c0_43 = arith.constant 0 : index
      %c0_44 = arith.constant 0 : index
      %155 = vector.load %arg5[%c0_42, %c0_43, %c0_44] : memref<3x8x128xf32, #tpu.memory_space<vmem>>, vector<3x8x128xf32>
      %c0_45 = arith.constant 0 : index
      %c0_46 = arith.constant 0 : index
      %c0_47 = arith.constant 0 : index
      %156 = vector.load %arg13[%c0_45, %c0_46, %c0_47] : memref<3x8x128xf32, #tpu.memory_space<vmem>>, vector<3x8x128xf32>
      tpu.vector_store %arg13[%c0_45, %c0_46, %c0_47], %155 {strides = array<i32>} : memref<3x8x128xf32, #tpu.memory_space<vmem>>, vector<3x8x128xf32>,
    } else {
    }
    %c0 = arith.constant 0 : index
    %c0_1 = arith.constant 0 : index
    %3 = vector.load %arg2[%c0, %c0_1] : memref<8x5xf32, #tpu.memory_space<vmem>>, vector<8x5xf32>
    %c0_2 = arith.constant 0 : index
    %c0_3 = arith.constant 0 : index
    %4 = vector.load %arg3[%c0_2, %c0_3] : memref<5x24xf32, #tpu.memory_space<vmem>>, vector<5x24xf32>
    %5 = vector.extract_strided_slice %3 {offsets = [0, 0], sizes = [8, 1], strides = [1, 1]} : vector<8x5xf32> to vector<8x1xf32>
    %6 = vector.extract_strided_slice %4 {offsets = [0, 0], sizes = [1, 24], strides = [1, 1]} : vector<5x24xf32> to vector<1x24xf32>
    %7 = vector.broadcast %5 : vector<8x1xf32> to vector<8x24xf32>
    %8 = vector.broadcast %6 : vector<1x24xf32> to vector<8x24xf32>
    %9 = arith.subf %7, %8 : vector<8x24xf32>
    %10 = vector.extract_strided_slice %3 {offsets = [0, 1], sizes = [8, 1], strides = [1, 1]} : vector<8x5xf32> to vector<8x1xf32>
    %11 = vector.extract_strided_slice %4 {offsets = [1, 0], sizes = [1, 24], strides = [1, 1]} : vector<5x24xf32> to vector<1x24xf32>
    %12 = vector.broadcast %10 : vector<8x1xf32> to vector<8x24xf32>
    %13 = vector.broadcast %11 : vector<1x24xf32> to vector<8x24xf32>
    %14 = arith.subf %12, %13 : vector<8x24xf32>
    %15 = vector.extract_strided_slice %3 {offsets = [0, 2], sizes = [8, 1], strides = [1, 1]} : vector<8x5xf32> to vector<8x1xf32>
    %16 = vector.extract_strided_slice %4 {offsets = [2, 0], sizes = [1, 24], strides = [1, 1]} : vector<5x24xf32> to vector<1x24xf32>
    %17 = vector.broadcast %15 : vector<8x1xf32> to vector<8x24xf32>
    %18 = vector.broadcast %16 : vector<1x24xf32> to vector<8x24xf32>
    %19 = arith.subf %17, %18 : vector<8x24xf32>
    %20 = arith.mulf %9, %9 : vector<8x24xf32>
    %21 = arith.mulf %14, %14 : vector<8x24xf32>
    %22 = arith.addf %20, %21 : vector<8x24xf32>
    %23 = arith.mulf %19, %19 : vector<8x24xf32>
    %24 = arith.addf %22, %23 : vector<8x24xf32>
    %25 = math.sqrt %24 : vector<8x24xf32>
    %cst = arith.constant 9.99999997E-7 : f32
    %26 = vector.broadcast %cst : f32 to vector<8x24xf32>
    %27 = arith.addf %25, %26 : vector<8x24xf32>
    %28 = tpu.reciprocal %27 {approx = true} : vector<8x24xf32> -> vector<8x24xf32>
    %29 = arith.mulf %9, %28 : vector<8x24xf32>
    %30 = arith.mulf %14, %28 : vector<8x24xf32>
    %31 = arith.mulf %19, %28 : vector<8x24xf32>
    %c8_i32 = arith.constant 8 : i32
    %32 = arith.muli %arg0, %c8_i32 : i32
    %33 = tpu.iota {dimensions = array<i32: 0>} : vector<8x24xi32>
    %34 = vector.broadcast %32 : i32 to vector<8x24xi32>
    %35 = arith.addi %34, %33 : vector<8x24xi32>
    %c24_i32 = arith.constant 24 : i32
    %36 = arith.muli %arg1, %c24_i32 : i32
    %37 = tpu.iota {dimensions = array<i32: 1>} : vector<8x24xi32>
    %38 = vector.broadcast %36 : i32 to vector<8x24xi32>
    %39 = arith.addi %38, %37 : vector<8x24xi32>
    %40 = vector.extract_strided_slice %3 {offsets = [0, 3], sizes = [8, 1], strides = [1, 1]} : vector<8x5xf32> to vector<8x1xf32>
    %41 = vector.extract_strided_slice %4 {offsets = [3, 0], sizes = [1, 24], strides = [1, 1]} : vector<5x24xf32> to vector<1x24xf32>
    %42 = vector.broadcast %40 : vector<8x1xf32> to vector<8x24xf32>
    %43 = vector.broadcast %41 : vector<1x24xf32> to vector<8x24xf32>
    %44 = arith.cmpf oeq, %42, %43 : vector<8x24xf32>
    %cst_4 = arith.constant 5.000000e+00 : f32
    %45 = vector.broadcast %cst_4 : f32 to vector<8x24xf32>
    %46 = arith.cmpf olt, %25, %45 : vector<8x24xf32>
    %47 = arith.andi %46, %44 : vector<8x24xi1>
    %48 = arith.cmpi ne, %35, %39 : vector<8x24xi32>
    %49 = arith.andi %47, %48 : vector<8x24xi1>
    %cst_5 = arith.constant 0.628318548 : f32
    %50 = vector.broadcast %cst_5 : f32 to vector<8x24xf32>
    %51 = arith.mulf %50, %25 : vector<8x24xf32>
    %52 = math.cos %51 : vector<8x24xf32>
    %cst_6 = arith.constant 1.000000e+00 : f32
    %53 = vector.broadcast %cst_6 : f32 to vector<8x24xf32>
    %54 = arith.addf %52, %53 : vector<8x24xf32>
    %cst_7 = arith.constant 5.000000e-01 : f32
    %55 = vector.broadcast %cst_7 : f32 to vector<8x24xf32>
    %56 = arith.mulf %55, %54 : vector<8x24xf32>
    %cst_8 = arith.constant 0.000000e+00 : f32
    %57 = vector.broadcast %cst_8 : f32 to vector<8x24xf32>
    %58 = arith.select %49, %56, %57 : vector<8x24xi1>, vector<8x24xf32>
    %59 = vector.extract_strided_slice %3 {offsets = [0, 4], sizes = [8, 1], strides = [1, 1]} : vector<8x5xf32> to vector<8x1xf32>
    %60 = vector.extract_strided_slice %4 {offsets = [4, 0], sizes = [1, 24], strides = [1, 1]} : vector<5x24xf32> to vector<1x24xf32>
    %61 = vector.broadcast %59 : vector<8x1xf32> to vector<8x24xf32>
    %62 = vector.broadcast %60 : vector<1x24xf32> to vector<8x24xf32>
    %63 = arith.addf %61, %62 : vector<8x24xf32>
    %64 = vector.extract_strided_slice %3 {offsets = [0, 4], sizes = [8, 1], strides = [1, 1]} : vector<8x5xf32> to vector<8x1xf32>
    %65 = vector.extract_strided_slice %4 {offsets = [4, 0], sizes = [1, 24], strides = [1, 1]} : vector<5x24xf32> to vector<1x24xf32>
    %66 = vector.broadcast %64 : vector<8x1xf32> to vector<8x24xf32>
    %67 = vector.broadcast %65 : vector<1x24xf32> to vector<8x24xf32>
    %68 = arith.mulf %66, %67 : vector<8x24xf32>
    %cst_9 = arith.constant 2.000000e+00 : f32
    %69 = vector.broadcast %cst_9 : f32 to vector<8x24xf32>
    %70 = arith.mulf %69, %68 : vector<8x24xf32>
    %71 = arith.subf %63, %70 : vector<8x24xf32>
    %c0_10 = arith.constant 0 : index
    %c0_11 = arith.constant 0 : index
    %72 = vector.load %arg8[%c0_10, %c0_11] : memref<1x16xf32, #tpu.memory_space<vmem>>, vector<1x16xf32>
    %73 = vector.shape_cast %25 : vector<8x24xf32> to vector<8x24x1xf32>
    %74 = vector.shape_cast %72 : vector<1x16xf32> to vector<1x1x16xf32>
    %75 = vector.broadcast %73 : vector<8x24x1xf32> to vector<8x24x16xf32>
    %76 = vector.broadcast %74 : vector<1x1x16xf32> to vector<8x24x16xf32>
    %77 = arith.subf %75, %76 : vector<8x24x16xf32>
    %78 = arith.mulf %77, %77 : vector<8x24x16xf32>
    %cst_12 = arith.constant -4.500000e+00 : f32
    %79 = vector.broadcast %cst_12 : f32 to vector<8x24x16xf32>
    %80 = arith.mulf %79, %78 : vector<8x24x16xf32>
    %81 = math.exp %80 : vector<8x24x16xf32>
    %82 = vector.shape_cast %81 : vector<8x24x16xf32> to vector<192x16xf32>
    %c0_13 = arith.constant 0 : index
    %c0_14 = arith.constant 0 : index
    %83 = vector.load %arg9[%c0_13, %c0_14] : memref<16x384xf32, #tpu.memory_space<vmem>>, vector<16x384xf32>
    %cst_15 = arith.constant dense<0.000000e+00> : vector<192x384xf32>
    %84 = tpu.matmul %82, %83, %cst_15 {dimension_numbers = #tpu.dot_dimension_numbers<[1], [0], [0], [1], [0, 0, 1, 1], [], []>} : vector<192x16xf32>, vector<16x384xf32>, vector<192x384xf32> -> vector<192x384xf32>
    %85 = vector.shape_cast %84 : vector<192x384xf32> to vector<8x24x384xf32>
    %c0_16 = arith.constant 0 : index
    %c0_17 = arith.constant 0 : index
    %86 = vector.load %arg10[%c0_16, %c0_17] : memref<1x384xf32, #tpu.memory_space<vmem>>, vector<1x384xf32>
    %87 = vector.shape_cast %86 : vector<1x384xf32> to vector<1x1x384xf32>
    %88 = vector.broadcast %87 : vector<1x1x384xf32> to vector<8x24x384xf32>
    %89 = arith.addf %85, %88 : vector<8x24x384xf32>
    %90 = vector.shape_cast %71 : vector<8x24xf32> to vector<8x24x1xf32>
    %c0_18 = arith.constant 0 : index
    %c0_19 = arith.constant 0 : index
    %91 = vector.load %arg11[%c0_18, %c0_19] : memref<1x384xf32, #tpu.memory_space<vmem>>, vector<1x384xf32>
    %92 = vector.shape_cast %91 : vector<1x384xf32> to vector<1x1x384xf32>
    %93 = vector.broadcast %90 : vector<8x24x1xf32> to vector<8x24x384xf32>
    %94 = vector.broadcast %92 : vector<1x1x384xf32> to vector<8x24x384xf32>
    %95 = arith.mulf %93, %94 : vector<8x24x384xf32>
    %96 = arith.addf %89, %95 : vector<8x24x384xf32>
    %97 = vector.shape_cast %58 : vector<8x24xf32> to vector<8x24x1xf32>
    %98 = vector.broadcast %97 : vector<8x24x1xf32> to vector<8x24x384xf32>
    %99 = arith.mulf %96, %98 : vector<8x24x384xf32>
    %c24_i32_20 = arith.constant 24 : i32
    %100 = arith.muli %arg1, %c24_i32_20 : i32
    %101 = tpu.assume_multiple %100, 24 : i32
    %102 = arith.index_cast %101 : i32 to index
    %c0_21 = arith.constant 0 : index
    %103 = vector.load %arg6[%102, %c0_21] : memref<24x384xf32, #tpu.memory_space<vmem>>, vector<24x384xf32>
    %c0_22 = arith.constant 0 : index
    %104 = arith.index_cast %101 : i32 to index
    %c0_23 = arith.constant 0 : index
    %105 = vector.load %arg7[%c0_22, %104, %c0_23] : memref<3x24x128xf32, #tpu.memory_space<vmem>>, vector<3x24x128xf32>
    %106 = vector.shape_cast %103 : vector<24x384xf32> to vector<1x24x384xf32>
    %107 = vector.broadcast %106 : vector<1x24x384xf32> to vector<8x24x384xf32>
    %108 = arith.mulf %99, %107 : vector<8x24x384xf32>
    %c0_24 = arith.constant 0 : index
    %c0_25 = arith.constant 0 : index
    %109 = vector.load %arg12[%c0_24, %c0_25] : memref<8x128xf32, #tpu.memory_space<vmem>>, vector<8x128xf32>
    %110 = vector.extract_strided_slice %108 {offsets = [0, 0, 0], sizes = [8, 24, 128], strides = [1, 1, 1]} : vector<8x24x384xf32> to vector<8x24x128xf32>
    %cst_26 = arith.constant dense<0.000000e+00> : vector<8x128xf32>
    %111 = vector.multi_reduction <add>, %110, %cst_26 [1] : vector<8x24x128xf32> to vector<8x128xf32>
    %112 = arith.addf %109, %111 : vector<8x128xf32>
    %c0_27 = arith.constant 0 : index
    %c0_28 = arith.constant 0 : index
    %113 = vector.load %arg12[%c0_27, %c0_28] : memref<8x128xf32, #tpu.memory_space<vmem>>, vector<8x128xf32>
    tpu.vector_store %arg12[%c0_27, %c0_28], %112 {strides = array<i32>} : memref<8x128xf32, #tpu.memory_space<vmem>>, vector<8x128xf32>,
    %114 = vector.extract_strided_slice %108 {offsets = [0, 0, 128], sizes = [8, 24, 128], strides = [1, 1, 1]} : vector<8x24x384xf32> to vector<8x24x128xf32>
    %115 = vector.extract_strided_slice %108 {offsets = [0, 0, 256], sizes = [8, 24, 128], strides = [1, 1, 1]} : vector<8x24x384xf32> to vector<8x24x128xf32>
    %116 = vector.shape_cast %29 : vector<8x24xf32> to vector<8x24x1xf32>
    %117 = vector.broadcast %116 : vector<8x24x1xf32> to vector<8x24x128xf32>
    %118 = arith.mulf %114, %117 : vector<8x24x128xf32>
    %119 = vector.extract_strided_slice %105 {offsets = [0, 0, 0], sizes = [1, 24, 128], strides = [1, 1, 1]} : vector<3x24x128xf32> to vector<1x24x128xf32>
    %120 = vector.shape_cast %119 : vector<1x24x128xf32> to vector<24x128xf32>
    %121 = vector.shape_cast %120 : vector<24x128xf32> to vector<1x24x128xf32>
    %122 = vector.broadcast %121 : vector<1x24x128xf32> to vector<8x24x128xf32>
    %123 = arith.mulf %115, %122 : vector<8x24x128xf32>
    %124 = arith.addf %118, %123 : vector<8x24x128xf32>
    %cst_29 = arith.constant dense<0.000000e+00> : vector<8x128xf32>
    %125 = vector.multi_reduction <add>, %124, %cst_29 [1] : vector<8x24x128xf32> to vector<8x128xf32>
    %126 = vector.shape_cast %30 : vector<8x24xf32> to vector<8x24x1xf32>
    %127 = vector.broadcast %126 : vector<8x24x1xf32> to vector<8x24x128xf32>
    %128 = arith.mulf %114, %127 : vector<8x24x128xf32>
    %129 = vector.extract_strided_slice %105 {offsets = [1, 0, 0], sizes = [1, 24, 128], strides = [1, 1, 1]} : vector<3x24x128xf32> to vector<1x24x128xf32>
    %130 = vector.shape_cast %129 : vector<1x24x128xf32> to vector<24x128xf32>
    %131 = vector.shape_cast %130 : vector<24x128xf32> to vector<1x24x128xf32>
    %132 = vector.broadcast %131 : vector<1x24x128xf32> to vector<8x24x128xf32>
    %133 = arith.mulf %115, %132 : vector<8x24x128xf32>
    %134 = arith.addf %128, %133 : vector<8x24x128xf32>
    %cst_30 = arith.constant dense<0.000000e+00> : vector<8x128xf32>
    %135 = vector.multi_reduction <add>, %134, %cst_30 [1] : vector<8x24x128xf32> to vector<8x128xf32>
    %136 = vector.shape_cast %31 : vector<8x24xf32> to vector<8x24x1xf32>
    %137 = vector.broadcast %136 : vector<8x24x1xf32> to vector<8x24x128xf32>
    %138 = arith.mulf %114, %137 : vector<8x24x128xf32>
    %139 = vector.extract_strided_slice %105 {offsets = [2, 0, 0], sizes = [1, 24, 128], strides = [1, 1, 1]} : vector<3x24x128xf32> to vector<1x24x128xf32>
    %140 = vector.shape_cast %139 : vector<1x24x128xf32> to vector<24x128xf32>
    %141 = vector.shape_cast %140 : vector<24x128xf32> to vector<1x24x128xf32>
    %142 = vector.broadcast %141 : vector<1x24x128xf32> to vector<8x24x128xf32>
    %143 = arith.mulf %115, %142 : vector<8x24x128xf32>
    %144 = arith.addf %138, %143 : vector<8x24x128xf32>
    %cst_31 = arith.constant dense<0.000000e+00> : vector<8x128xf32>
    %145 = vector.multi_reduction <add>, %144, %cst_31 [1] : vector<8x24x128xf32> to vector<8x128xf32>
    %c0_32 = arith.constant 0 : index
    %c0_33 = arith.constant 0 : index
    %c0_34 = arith.constant 0 : index
    %146 = vector.load %arg13[%c0_32, %c0_33, %c0_34] : memref<3x8x128xf32, #tpu.memory_space<vmem>>, vector<3x8x128xf32>
    %147 = vector.shape_cast %125 : vector<8x128xf32> to vector<1x8x128xf32>
    %148 = vector.shape_cast %135 : vector<8x128xf32> to vector<1x8x128xf32>
    %149 = vector.shape_cast %145 : vector<8x128xf32> to vector<1x8x128xf32>
    %150 = tpu.concatenate %147, %148, %149 in 0 : vector<1x8x128xf32>, vector<1x8x128xf32>, vector<1x8x128xf32> -> vector<3x8x128xf32>
    %151 = arith.addf %146, %150 : vector<3x8x128xf32>
    %c0_35 = arith.constant 0 : index
    %c0_36 = arith.constant 0 : index
    %c0_37 = arith.constant 0 : index
    %152 = vector.load %arg13[%c0_35, %c0_36, %c0_37] : memref<3x8x128xf32, #tpu.memory_space<vmem>>, vector<3x8x128xf32>
    tpu.vector_store %arg13[%c0_35, %c0_36, %c0_37], %151 {strides = array<i32>} : memref<3x8x128xf32, #tpu.memory_space<vmem>>, vector<3x8x128xf32>,
    return
  }
  func.func @transform_0(%arg0: i32, %arg1: i32) -> (i32, i32) {
    %c0_i32 = arith.constant 0 : i32
    %c0_i32_0 = arith.constant 0 : i32
    return %arg0, %c0_i32 : i32, i32
  }
  func.func @transform_1(%arg0: i32, %arg1: i32) -> (i32, i32) {
    %c0_i32 = arith.constant 0 : i32
    %c0_i32_0 = arith.constant 0 : i32
    return %c0_i32, %arg1 : i32, i32
  }
  func.func @transform_2(%arg0: i32, %arg1: i32) -> (i32, i32) {
    %c0_i32 = arith.constant 0 : i32
    %c0_i32_0 = arith.constant 0 : i32
    return %arg0, %c0_i32 : i32, i32
  }
  func.func @transform_3(%arg0: i32, %arg1: i32) -> (i32, i32, i32) {
    %c0_i32 = arith.constant 0 : i32
    %c0_i32_0 = arith.constant 0 : i32
    %c0_i32_1 = arith.constant 0 : i32
    return %c0_i32, %arg0, %c0_i32_0 : i32, i32, i32
  }
  func.func @transform_4(%arg0: i32, %arg1: i32) -> (i32, i32) {
    %c0_i32 = arith.constant 0 : i32
    %c0_i32_0 = arith.constant 0 : i32
    %c0_i32_1 = arith.constant 0 : i32
    return %c0_i32, %c0_i32_0 : i32, i32
  }
  func.func @transform_5(%arg0: i32, %arg1: i32) -> (i32, i32, i32) {
    %c0_i32 = arith.constant 0 : i32
    %c0_i32_0 = arith.constant 0 : i32
    %c0_i32_1 = arith.constant 0 : i32
    %c0_i32_2 = arith.constant 0 : i32
    return %c0_i32, %c0_i32_0, %c0_i32_1 : i32, i32, i32
  }
  func.func @transform_6(%arg0: i32, %arg1: i32) -> (i32, i32) {
    %c0_i32 = arith.constant 0 : i32
    %c0_i32_0 = arith.constant 0 : i32
    %c0_i32_1 = arith.constant 0 : i32
    return %c0_i32, %c0_i32_0 : i32, i32
  }
  func.func @transform_7(%arg0: i32, %arg1: i32) -> (i32, i32) {
    %c0_i32 = arith.constant 0 : i32
    %c0_i32_0 = arith.constant 0 : i32
    %c0_i32_1 = arith.constant 0 : i32
    return %c0_i32, %c0_i32_0 : i32, i32
  }
  func.func @transform_8(%arg0: i32, %arg1: i32) -> (i32, i32) {
    %c0_i32 = arith.constant 0 : i32
    %c0_i32_0 = arith.constant 0 : i32
    %c0_i32_1 = arith.constant 0 : i32
    return %c0_i32, %c0_i32_0 : i32, i32
  }
  func.func @transform_9(%arg0: i32, %arg1: i32) -> (i32, i32) {
    %c0_i32 = arith.constant 0 : i32
    %c0_i32_0 = arith.constant 0 : i32
    %c0_i32_1 = arith.constant 0 : i32
    return %c0_i32, %c0_i32_0 : i32, i32
  }
  func.func @transform_10(%arg0: i32, %arg1: i32) -> (i32, i32) {
    %c0_i32 = arith.constant 0 : i32
    %c0_i32_0 = arith.constant 0 : i32
    return %arg0, %c0_i32 : i32, i32
  }
  func.func @transform_11(%arg0: i32, %arg1: i32) -> (i32, i32, i32) {
    %c0_i32 = arith.constant 0 : i32
    %c0_i32_0 = arith.constant 0 : i32
    %c0_i32_1 = arith.constant 0 : i32
    return %c0_i32, %arg0, %c0_i32_0 : i32, i32, i32
  }
}

module attributes {stable_mosaic.version = 11 : i64} {
  func.func @_mlp_kernel(%arg0: i32, %arg1: memref<24x128xf32, #tpu.memory_space<vmem>>, %arg2: memref<128x128xf32, #tpu.memory_space<vmem>>, %arg3: memref<1x128xf32, #tpu.memory_space<vmem>>, %arg4: memref<128x384xf32, #tpu.memory_space<vmem>>, %arg5: memref<1x384xf32, #tpu.memory_space<vmem>>, %arg6: memref<24x384xf32, #tpu.memory_space<vmem>>) attributes {dimension_semantics = [#tpu.dimension_semantics<parallel>], iteration_bounds = array<i64: 1>, scalar_prefetch = 0 : i64, scratch_operands = 0 : i64, tpu.core_type = #tpu.core_type<tc>, window_params = [{transform_indices = @transform_0, window_bounds = array<i64: 24, 128>}, {pipeline_mode = #tpu.pipeline_mode<synchronous>, transform_indices = @transform_1, window_bounds = array<i64: 128, 128>}, {pipeline_mode = #tpu.pipeline_mode<synchronous>, transform_indices = @transform_2, window_bounds = array<i64: 1, 128>}, {pipeline_mode = #tpu.pipeline_mode<synchronous>, transform_indices = @transform_3, window_bounds = array<i64: 128, 384>}, {pipeline_mode = #tpu.pipeline_mode<synchronous>, transform_indices = @transform_4, window_bounds = array<i64: 1, 384>}, {transform_indices = @transform_5, window_bounds = array<i64: 24, 384>}]} {
    %c0 = arith.constant 0 : index
    %c0_0 = arith.constant 0 : index
    %0 = vector.load %arg1[%c0, %c0_0] : memref<24x128xf32, #tpu.memory_space<vmem>>, vector<24x128xf32>
    %c0_1 = arith.constant 0 : index
    %c0_2 = arith.constant 0 : index
    %1 = vector.load %arg2[%c0_1, %c0_2] : memref<128x128xf32, #tpu.memory_space<vmem>>, vector<128x128xf32>
    %cst = arith.constant dense<0.000000e+00> : vector<24x128xf32>
    %2 = tpu.matmul %0, %1, %cst {dimension_numbers = #tpu.dot_dimension_numbers<[1], [0], [0], [1], [0, 0, 1, 1], [], []>} : vector<24x128xf32>, vector<128x128xf32>, vector<24x128xf32> -> vector<24x128xf32>
    %c0_3 = arith.constant 0 : index
    %c0_4 = arith.constant 0 : index
    %3 = vector.load %arg3[%c0_3, %c0_4] : memref<1x128xf32, #tpu.memory_space<vmem>>, vector<1x128xf32>
    %4 = vector.broadcast %3 : vector<1x128xf32> to vector<24x128xf32>
    %5 = arith.addf %2, %4 : vector<24x128xf32>
    %6 = arith.negf %5 : vector<24x128xf32>
    %7 = math.exp %6 : vector<24x128xf32>
    %cst_5 = arith.constant 1.000000e+00 : f32
    %8 = vector.broadcast %cst_5 : f32 to vector<24x128xf32>
    %9 = arith.addf %8, %7 : vector<24x128xf32>
    %10 = arith.divf %8, %9 : vector<24x128xf32>
    %11 = arith.mulf %5, %10 : vector<24x128xf32>
    %c0_6 = arith.constant 0 : index
    %c0_7 = arith.constant 0 : index
    %12 = vector.load %arg4[%c0_6, %c0_7] : memref<128x384xf32, #tpu.memory_space<vmem>>, vector<128x384xf32>
    %cst_8 = arith.constant dense<0.000000e+00> : vector<24x384xf32>
    %13 = tpu.matmul %11, %12, %cst_8 {dimension_numbers = #tpu.dot_dimension_numbers<[1], [0], [0], [1], [0, 0, 1, 1], [], []>} : vector<24x128xf32>, vector<128x384xf32>, vector<24x384xf32> -> vector<24x384xf32>
    %c0_9 = arith.constant 0 : index
    %c0_10 = arith.constant 0 : index
    %14 = vector.load %arg5[%c0_9, %c0_10] : memref<1x384xf32, #tpu.memory_space<vmem>>, vector<1x384xf32>
    %15 = vector.broadcast %14 : vector<1x384xf32> to vector<24x384xf32>
    %16 = arith.addf %13, %15 : vector<24x384xf32>
    %c0_11 = arith.constant 0 : index
    %c0_12 = arith.constant 0 : index
    %17 = vector.load %arg6[%c0_11, %c0_12] : memref<24x384xf32, #tpu.memory_space<vmem>>, vector<24x384xf32>
    tpu.vector_store %arg6[%c0_11, %c0_12], %16 {strides = array<i32>} : memref<24x384xf32, #tpu.memory_space<vmem>>, vector<24x384xf32>,
    return
  }
  func.func @transform_0(%arg0: i32) -> (i32, i32) {
    %c0_i32 = arith.constant 0 : i32
    %c0_i32_0 = arith.constant 0 : i32
    return %arg0, %c0_i32 : i32, i32
  }
  func.func @transform_1(%arg0: i32) -> (i32, i32) {
    %c0_i32 = arith.constant 0 : i32
    %c0_i32_0 = arith.constant 0 : i32
    %c0_i32_1 = arith.constant 0 : i32
    return %c0_i32, %c0_i32_0 : i32, i32
  }
  func.func @transform_2(%arg0: i32) -> (i32, i32) {
    %c0_i32 = arith.constant 0 : i32
    %c0_i32_0 = arith.constant 0 : i32
    %c0_i32_1 = arith.constant 0 : i32
    return %c0_i32, %c0_i32_0 : i32, i32
  }
  func.func @transform_3(%arg0: i32) -> (i32, i32) {
    %c0_i32 = arith.constant 0 : i32
    %c0_i32_0 = arith.constant 0 : i32
    %c0_i32_1 = arith.constant 0 : i32
    return %c0_i32, %c0_i32_0 : i32, i32
  }
  func.func @transform_4(%arg0: i32) -> (i32, i32) {
    %c0_i32 = arith.constant 0 : i32
    %c0_i32_0 = arith.constant 0 : i32
    %c0_i32_1 = arith.constant 0 : i32
    return %c0_i32, %c0_i32_0 : i32, i32
  }
  func.func @transform_5(%arg0: i32) -> (i32, i32) {
    %c0_i32 = arith.constant 0 : i32
    %c0_i32_0 = arith.constant 0 : i32
    return %arg0, %c0_i32 : i32, i32
  }
}

module attributes {stable_mosaic.version = 11 : i64} {
  func.func @_mlp_kernel(%arg0: i32, %arg1: memref<24x128xf32, #tpu.memory_space<vmem>>, %arg2: memref<128x128xf32, #tpu.memory_space<vmem>>, %arg3: memref<1x128xf32, #tpu.memory_space<vmem>>, %arg4: memref<128x384xf32, #tpu.memory_space<vmem>>, %arg5: memref<1x384xf32, #tpu.memory_space<vmem>>, %arg6: memref<24x384xf32, #tpu.memory_space<vmem>>) attributes {dimension_semantics = [#tpu.dimension_semantics<parallel>], iteration_bounds = array<i64: 1>, scalar_prefetch = 0 : i64, scratch_operands = 0 : i64, tpu.core_type = #tpu.core_type<tc>, window_params = [{transform_indices = @transform_0, window_bounds = array<i64: 24, 128>}, {pipeline_mode = #tpu.pipeline_mode<synchronous>, transform_indices = @transform_1, window_bounds = array<i64: 128, 128>}, {pipeline_mode = #tpu.pipeline_mode<synchronous>, transform_indices = @transform_2, window_bounds = array<i64: 1, 128>}, {pipeline_mode = #tpu.pipeline_mode<synchronous>, transform_indices = @transform_3, window_bounds = array<i64: 128, 384>}, {pipeline_mode = #tpu.pipeline_mode<synchronous>, transform_indices = @transform_4, window_bounds = array<i64: 1, 384>}, {transform_indices = @transform_5, window_bounds = array<i64: 24, 384>}]} {
    %c0 = arith.constant 0 : index
    %c0_0 = arith.constant 0 : index
    %0 = vector.load %arg1[%c0, %c0_0] : memref<24x128xf32, #tpu.memory_space<vmem>>, vector<24x128xf32>
    %c0_1 = arith.constant 0 : index
    %c0_2 = arith.constant 0 : index
    %1 = vector.load %arg2[%c0_1, %c0_2] : memref<128x128xf32, #tpu.memory_space<vmem>>, vector<128x128xf32>
    %cst = arith.constant dense<0.000000e+00> : vector<24x128xf32>
    %2 = tpu.matmul %0, %1, %cst {dimension_numbers = #tpu.dot_dimension_numbers<[1], [0], [0], [1], [0, 0, 1, 1], [], []>} : vector<24x128xf32>, vector<128x128xf32>, vector<24x128xf32> -> vector<24x128xf32>
    %c0_3 = arith.constant 0 : index
    %c0_4 = arith.constant 0 : index
    %3 = vector.load %arg3[%c0_3, %c0_4] : memref<1x128xf32, #tpu.memory_space<vmem>>, vector<1x128xf32>
    %4 = vector.broadcast %3 : vector<1x128xf32> to vector<24x128xf32>
    %5 = arith.addf %2, %4 : vector<24x128xf32>
    %6 = arith.negf %5 : vector<24x128xf32>
    %7 = math.exp %6 : vector<24x128xf32>
    %cst_5 = arith.constant 1.000000e+00 : f32
    %8 = vector.broadcast %cst_5 : f32 to vector<24x128xf32>
    %9 = arith.addf %8, %7 : vector<24x128xf32>
    %10 = arith.divf %8, %9 : vector<24x128xf32>
    %11 = arith.mulf %5, %10 : vector<24x128xf32>
    %c0_6 = arith.constant 0 : index
    %c0_7 = arith.constant 0 : index
    %12 = vector.load %arg4[%c0_6, %c0_7] : memref<128x384xf32, #tpu.memory_space<vmem>>, vector<128x384xf32>
    %cst_8 = arith.constant dense<0.000000e+00> : vector<24x384xf32>
    %13 = tpu.matmul %11, %12, %cst_8 {dimension_numbers = #tpu.dot_dimension_numbers<[1], [0], [0], [1], [0, 0, 1, 1], [], []>} : vector<24x128xf32>, vector<128x384xf32>, vector<24x384xf32> -> vector<24x384xf32>
    %c0_9 = arith.constant 0 : index
    %c0_10 = arith.constant 0 : index
    %14 = vector.load %arg5[%c0_9, %c0_10] : memref<1x384xf32, #tpu.memory_space<vmem>>, vector<1x384xf32>
    %15 = vector.broadcast %14 : vector<1x384xf32> to vector<24x384xf32>
    %16 = arith.addf %13, %15 : vector<24x384xf32>
    %c0_11 = arith.constant 0 : index
    %c0_12 = arith.constant 0 : index
    %17 = vector.load %arg6[%c0_11, %c0_12] : memref<24x384xf32, #tpu.memory_space<vmem>>, vector<24x384xf32>
    tpu.vector_store %arg6[%c0_11, %c0_12], %16 {strides = array<i32>} : memref<24x384xf32, #tpu.memory_space<vmem>>, vector<24x384xf32>,
    return
  }
  func.func @transform_0(%arg0: i32) -> (i32, i32) {
    %c0_i32 = arith.constant 0 : i32
    %c0_i32_0 = arith.constant 0 : i32
    return %arg0, %c0_i32 : i32, i32
  }
  func.func @transform_1(%arg0: i32) -> (i32, i32) {
    %c0_i32 = arith.constant 0 : i32
    %c0_i32_0 = arith.constant 0 : i32
    %c0_i32_1 = arith.constant 0 : i32
    return %c0_i32, %c0_i32_0 : i32, i32
  }
  func.func @transform_2(%arg0: i32) -> (i32, i32) {
    %c0_i32 = arith.constant 0 : i32
    %c0_i32_0 = arith.constant 0 : i32
    %c0_i32_1 = arith.constant 0 : i32
    return %c0_i32, %c0_i32_0 : i32, i32
  }
  func.func @transform_3(%arg0: i32) -> (i32, i32) {
    %c0_i32 = arith.constant 0 : i32
    %c0_i32_0 = arith.constant 0 : i32
    %c0_i32_1 = arith.constant 0 : i32
    return %c0_i32, %c0_i32_0 : i32, i32
  }
  func.func @transform_4(%arg0: i32) -> (i32, i32) {
    %c0_i32 = arith.constant 0 : i32
    %c0_i32_0 = arith.constant 0 : i32
    %c0_i32_1 = arith.constant 0 : i32
    return %c0_i32, %c0_i32_0 : i32, i32
  }
  func.func @transform_5(%arg0: i32) -> (i32, i32) {
    %c0_i32 = arith.constant 0 : i32
    %c0_i32_0 = arith.constant 0 : i32
    return %arg0, %c0_i32 : i32, i32
  }
}

module attributes {stable_mosaic.version = 11 : i64} {
  func.func @_mixing_kernel(%arg0: i32, %arg1: memref<24x128xf32, #tpu.memory_space<vmem>>, %arg2: memref<3x24x128xf32, #tpu.memory_space<vmem>>, %arg3: memref<128x256xf32, #tpu.memory_space<vmem>>, %arg4: memref<256x128xf32, #tpu.memory_space<vmem>>, %arg5: memref<1x128xf32, #tpu.memory_space<vmem>>, %arg6: memref<128x384xf32, #tpu.memory_space<vmem>>, %arg7: memref<1x384xf32, #tpu.memory_space<vmem>>, %arg8: memref<1x128xf32, #tpu.memory_space<vmem>>, %arg9: memref<1x128xf32, #tpu.memory_space<vmem>>, %arg10: memref<24x128xf32, #tpu.memory_space<vmem>>, %arg11: memref<3x24x128xf32, #tpu.memory_space<vmem>>) attributes {dimension_semantics = [#tpu.dimension_semantics<parallel>], iteration_bounds = array<i64: 1>, scalar_prefetch = 0 : i64, scratch_operands = 0 : i64, tpu.core_type = #tpu.core_type<tc>, window_params = [{transform_indices = @transform_0, window_bounds = array<i64: 24, 128>}, {transform_indices = @transform_1, window_bounds = array<i64: 3, 24, 128>}, {pipeline_mode = #tpu.pipeline_mode<synchronous>, transform_indices = @transform_2, window_bounds = array<i64: 128, 256>}, {pipeline_mode = #tpu.pipeline_mode<synchronous>, transform_indices = @transform_3, window_bounds = array<i64: 256, 128>}, {pipeline_mode = #tpu.pipeline_mode<synchronous>, transform_indices = @transform_4, window_bounds = array<i64: 1, 128>}, {pipeline_mode = #tpu.pipeline_mode<synchronous>, transform_indices = @transform_5, window_bounds = array<i64: 128, 384>}, {pipeline_mode = #tpu.pipeline_mode<synchronous>, transform_indices = @transform_6, window_bounds = array<i64: 1, 384>}, {pipeline_mode = #tpu.pipeline_mode<synchronous>, transform_indices = @transform_7, window_bounds = array<i64: 1, 128>}, {pipeline_mode = #tpu.pipeline_mode<synchronous>, transform_indices = @transform_8, window_bounds = array<i64: 1, 128>}, {transform_indices = @transform_9, window_bounds = array<i64: 24, 128>}, {transform_indices = @transform_10, window_bounds = array<i64: 3, 24, 128>}]} {
    %c0 = arith.constant 0 : index
    %c0_0 = arith.constant 0 : index
    %0 = vector.load %arg1[%c0, %c0_0] : memref<24x128xf32, #tpu.memory_space<vmem>>, vector<24x128xf32>
    %c0_1 = arith.constant 0 : index
    %c0_2 = arith.constant 0 : index
    %c0_3 = arith.constant 0 : index
    %1 = vector.load %arg2[%c0_1, %c0_2, %c0_3] : memref<3x24x128xf32, #tpu.memory_space<vmem>>, vector<3x24x128xf32>
    %2 = vector.shape_cast %1 : vector<3x24x128xf32> to vector<72x128xf32>
    %c0_4 = arith.constant 0 : index
    %c0_5 = arith.constant 0 : index
    %3 = vector.load %arg3[%c0_4, %c0_5] : memref<128x256xf32, #tpu.memory_space<vmem>>, vector<128x256xf32>
    %cst = arith.constant dense<0.000000e+00> : vector<72x256xf32>
    %4 = tpu.matmul %2, %3, %cst {dimension_numbers = #tpu.dot_dimension_numbers<[1], [0], [0], [1], [0, 0, 1, 1], [], []>} : vector<72x128xf32>, vector<128x256xf32>, vector<72x256xf32> -> vector<72x256xf32>
    %5 = vector.shape_cast %4 : vector<72x256xf32> to vector<3x24x256xf32>
    %6 = vector.extract_strided_slice %5 {offsets = [0, 0, 0], sizes = [3, 24, 128], strides = [1, 1, 1]} : vector<3x24x256xf32> to vector<3x24x128xf32>
    %7 = vector.extract_strided_slice %5 {offsets = [0, 0, 128], sizes = [3, 24, 128], strides = [1, 1, 1]} : vector<3x24x256xf32> to vector<3x24x128xf32>
    %8 = arith.mulf %6, %6 : vector<3x24x128xf32>
    %cst_6 = arith.constant dense<0.000000e+00> : vector<24x128xf32>
    %9 = vector.multi_reduction <add>, %8, %cst_6 [0] : vector<3x24x128xf32> to vector<24x128xf32>
    %cst_7 = arith.constant 9.99999993E-9 : f32
    %10 = vector.broadcast %cst_7 : f32 to vector<24x128xf32>
    %11 = arith.addf %9, %10 : vector<24x128xf32>
    %12 = math.sqrt %11 : vector<24x128xf32>
    %13 = tpu.concatenate %0, %12 in 1 : vector<24x128xf32>, vector<24x128xf32> -> vector<24x256xf32>
    %c0_8 = arith.constant 0 : index
    %c0_9 = arith.constant 0 : index
    %14 = vector.load %arg4[%c0_8, %c0_9] : memref<256x128xf32, #tpu.memory_space<vmem>>, vector<256x128xf32>
    %cst_10 = arith.constant dense<0.000000e+00> : vector<24x128xf32>
    %15 = tpu.matmul %13, %14, %cst_10 {dimension_numbers = #tpu.dot_dimension_numbers<[1], [0], [0], [1], [0, 0, 1, 1], [], []>} : vector<24x256xf32>, vector<256x128xf32>, vector<24x128xf32> -> vector<24x128xf32>
    %c0_11 = arith.constant 0 : index
    %c0_12 = arith.constant 0 : index
    %16 = vector.load %arg5[%c0_11, %c0_12] : memref<1x128xf32, #tpu.memory_space<vmem>>, vector<1x128xf32>
    %17 = vector.broadcast %16 : vector<1x128xf32> to vector<24x128xf32>
    %18 = arith.addf %15, %17 : vector<24x128xf32>
    %19 = arith.negf %18 : vector<24x128xf32>
    %20 = math.exp %19 : vector<24x128xf32>
    %cst_13 = arith.constant 1.000000e+00 : f32
    %21 = vector.broadcast %cst_13 : f32 to vector<24x128xf32>
    %22 = arith.addf %21, %20 : vector<24x128xf32>
    %23 = arith.divf %21, %22 : vector<24x128xf32>
    %24 = arith.mulf %18, %23 : vector<24x128xf32>
    %c0_14 = arith.constant 0 : index
    %c0_15 = arith.constant 0 : index
    %25 = vector.load %arg6[%c0_14, %c0_15] : memref<128x384xf32, #tpu.memory_space<vmem>>, vector<128x384xf32>
    %cst_16 = arith.constant dense<0.000000e+00> : vector<24x384xf32>
    %26 = tpu.matmul %24, %25, %cst_16 {dimension_numbers = #tpu.dot_dimension_numbers<[1], [0], [0], [1], [0, 0, 1, 1], [], []>} : vector<24x128xf32>, vector<128x384xf32>, vector<24x384xf32> -> vector<24x384xf32>
    %c0_17 = arith.constant 0 : index
    %c0_18 = arith.constant 0 : index
    %27 = vector.load %arg7[%c0_17, %c0_18] : memref<1x384xf32, #tpu.memory_space<vmem>>, vector<1x384xf32>
    %28 = vector.broadcast %27 : vector<1x384xf32> to vector<24x384xf32>
    %29 = arith.addf %26, %28 : vector<24x384xf32>
    %30 = vector.extract_strided_slice %29 {offsets = [0, 0], sizes = [24, 128], strides = [1, 1]} : vector<24x384xf32> to vector<24x128xf32>
    %31 = vector.extract_strided_slice %29 {offsets = [0, 128], sizes = [24, 128], strides = [1, 1]} : vector<24x384xf32> to vector<24x128xf32>
    %32 = vector.extract_strided_slice %29 {offsets = [0, 256], sizes = [24, 128], strides = [1, 1]} : vector<24x384xf32> to vector<24x128xf32>
    %33 = arith.mulf %6, %7 : vector<3x24x128xf32>
    %cst_19 = arith.constant dense<0.000000e+00> : vector<24x128xf32>
    %34 = vector.multi_reduction <add>, %33, %cst_19 [0] : vector<3x24x128xf32> to vector<24x128xf32>
    %35 = arith.addf %0, %30 : vector<24x128xf32>
    %36 = arith.mulf %32, %34 : vector<24x128xf32>
    %37 = arith.addf %35, %36 : vector<24x128xf32>
    %cst_20 = arith.constant dense<0.000000e+00> : vector<24xf32>
    %38 = vector.multi_reduction <add>, %37, %cst_20 [1] : vector<24x128xf32> to vector<24xf32>
    %39 = vector.shape_cast %38 : vector<24xf32> to vector<24x1xf32>
    %cst_21 = arith.constant 1.280000e+02 : f32
    %40 = vector.broadcast %cst_21 : f32 to vector<24x1xf32>
    %41 = arith.divf %39, %40 : vector<24x1xf32>
    %42 = vector.broadcast %41 : vector<24x1xf32> to vector<24x128xf32>
    %43 = arith.subf %37, %42 : vector<24x128xf32>
    %44 = arith.mulf %43, %43 : vector<24x128xf32>
    %cst_22 = arith.constant dense<0.000000e+00> : vector<24xf32>
    %45 = vector.multi_reduction <add>, %44, %cst_22 [1] : vector<24x128xf32> to vector<24xf32>
    %46 = vector.shape_cast %45 : vector<24xf32> to vector<24x1xf32>
    %cst_23 = arith.constant 1.280000e+02 : f32
    %47 = vector.broadcast %cst_23 : f32 to vector<24x1xf32>
    %48 = arith.divf %46, %47 : vector<24x1xf32>
    %49 = vector.broadcast %41 : vector<24x1xf32> to vector<24x128xf32>
    %50 = arith.subf %37, %49 : vector<24x128xf32>
    %cst_24 = arith.constant 9.99999974E-6 : f32
    %51 = vector.broadcast %cst_24 : f32 to vector<24x1xf32>
    %52 = arith.addf %48, %51 : vector<24x1xf32>
    %53 = math.rsqrt %52 : vector<24x1xf32>
    %54 = vector.broadcast %53 : vector<24x1xf32> to vector<24x128xf32>
    %55 = arith.mulf %50, %54 : vector<24x128xf32>
    %c0_25 = arith.constant 0 : index
    %c0_26 = arith.constant 0 : index
    %56 = vector.load %arg8[%c0_25, %c0_26] : memref<1x128xf32, #tpu.memory_space<vmem>>, vector<1x128xf32>
    %57 = vector.broadcast %56 : vector<1x128xf32> to vector<24x128xf32>
    %58 = arith.mulf %55, %57 : vector<24x128xf32>
    %c0_27 = arith.constant 0 : index
    %c0_28 = arith.constant 0 : index
    %59 = vector.load %arg9[%c0_27, %c0_28] : memref<1x128xf32, #tpu.memory_space<vmem>>, vector<1x128xf32>
    %60 = vector.broadcast %59 : vector<1x128xf32> to vector<24x128xf32>
    %61 = arith.addf %58, %60 : vector<24x128xf32>
    %c0_29 = arith.constant 0 : index
    %c0_30 = arith.constant 0 : index
    %62 = vector.load %arg10[%c0_29, %c0_30] : memref<24x128xf32, #tpu.memory_space<vmem>>, vector<24x128xf32>
    tpu.vector_store %arg10[%c0_29, %c0_30], %61 {strides = array<i32>} : memref<24x128xf32, #tpu.memory_space<vmem>>, vector<24x128xf32>,
    %63 = vector.shape_cast %31 : vector<24x128xf32> to vector<1x24x128xf32>
    %64 = vector.broadcast %63 : vector<1x24x128xf32> to vector<3x24x128xf32>
    %65 = arith.mulf %64, %7 : vector<3x24x128xf32>
    %66 = arith.addf %1, %65 : vector<3x24x128xf32>
    %67 = arith.mulf %66, %66 : vector<3x24x128xf32>
    %cst_31 = arith.constant dense<0.000000e+00> : vector<24x128xf32>
    %68 = vector.multi_reduction <add>, %67, %cst_31 [0] : vector<3x24x128xf32> to vector<24x128xf32>
    %cst_32 = arith.constant 9.99999993E-9 : f32
    %69 = vector.broadcast %cst_32 : f32 to vector<24x128xf32>
    %70 = arith.addf %68, %69 : vector<24x128xf32>
    %71 = math.rsqrt %70 : vector<24x128xf32>
    %72 = vector.shape_cast %71 : vector<24x128xf32> to vector<1x24x128xf32>
    %73 = vector.broadcast %72 : vector<1x24x128xf32> to vector<3x24x128xf32>
    %74 = arith.mulf %66, %73 : vector<3x24x128xf32>
    %c0_33 = arith.constant 0 : index
    %c0_34 = arith.constant 0 : index
    %c0_35 = arith.constant 0 : index
    %75 = vector.load %arg11[%c0_33, %c0_34, %c0_35] : memref<3x24x128xf32, #tpu.memory_space<vmem>>, vector<3x24x128xf32>
    tpu.vector_store %arg11[%c0_33, %c0_34, %c0_35], %74 {strides = array<i32>} : memref<3x24x128xf32, #tpu.memory_space<vmem>>, vector<3x24x128xf32>,
    return
  }
  func.func @transform_0(%arg0: i32) -> (i32, i32) {
    %c0_i32 = arith.constant 0 : i32
    %c0_i32_0 = arith.constant 0 : i32
    return %arg0, %c0_i32 : i32, i32
  }
  func.func @transform_1(%arg0: i32) -> (i32, i32, i32) {
    %c0_i32 = arith.constant 0 : i32
    %c0_i32_0 = arith.constant 0 : i32
    %c0_i32_1 = arith.constant 0 : i32
    return %c0_i32, %arg0, %c0_i32_0 : i32, i32, i32
  }
  func.func @transform_2(%arg0: i32) -> (i32, i32) {
    %c0_i32 = arith.constant 0 : i32
    %c0_i32_0 = arith.constant 0 : i32
    %c0_i32_1 = arith.constant 0 : i32
    return %c0_i32, %c0_i32_0 : i32, i32
  }
  func.func @transform_3(%arg0: i32) -> (i32, i32) {
    %c0_i32 = arith.constant 0 : i32
    %c0_i32_0 = arith.constant 0 : i32
    %c0_i32_1 = arith.constant 0 : i32
    return %c0_i32, %c0_i32_0 : i32, i32
  }
  func.func @transform_4(%arg0: i32) -> (i32, i32) {
    %c0_i32 = arith.constant 0 : i32
    %c0_i32_0 = arith.constant 0 : i32
    %c0_i32_1 = arith.constant 0 : i32
    return %c0_i32, %c0_i32_0 : i32, i32
  }
  func.func @transform_5(%arg0: i32) -> (i32, i32) {
    %c0_i32 = arith.constant 0 : i32
    %c0_i32_0 = arith.constant 0 : i32
    %c0_i32_1 = arith.constant 0 : i32
    return %c0_i32, %c0_i32_0 : i32, i32
  }
  func.func @transform_6(%arg0: i32) -> (i32, i32) {
    %c0_i32 = arith.constant 0 : i32
    %c0_i32_0 = arith.constant 0 : i32
    %c0_i32_1 = arith.constant 0 : i32
    return %c0_i32, %c0_i32_0 : i32, i32
  }
  func.func @transform_7(%arg0: i32) -> (i32, i32) {
    %c0_i32 = arith.constant 0 : i32
    %c0_i32_0 = arith.constant 0 : i32
    %c0_i32_1 = arith.constant 0 : i32
    return %c0_i32, %c0_i32_0 : i32, i32
  }
  func.func @transform_8(%arg0: i32) -> (i32, i32) {
    %c0_i32 = arith.constant 0 : i32
    %c0_i32_0 = arith.constant 0 : i32
    %c0_i32_1 = arith.constant 0 : i32
    return %c0_i32, %c0_i32_0 : i32, i32
  }
  func.func @transform_9(%arg0: i32) -> (i32, i32) {
    %c0_i32 = arith.constant 0 : i32
    %c0_i32_0 = arith.constant 0 : i32
    return %arg0, %c0_i32 : i32, i32
  }
  func.func @transform_10(%arg0: i32) -> (i32, i32, i32) {
    %c0_i32 = arith.constant 0 : i32
    %c0_i32_0 = arith.constant 0 : i32
    %c0_i32_1 = arith.constant 0 : i32
    return %c0_i32, %arg0, %c0_i32_0 : i32, i32, i32
  }
}

</mosaic_0001>

<llo_original>
// kernel: mul.7
$region0: #{mul.7}
  #allocation0 [shape = 's32[1]{0}', space=sflag, size = 0x4, scoped, tag = 'scoped memory for mul.7']
  %s0 = inlined_call_operand.vmem [shape: f32[4], index: 0, kind: input, shape index: {}]
  %s1 = inlined_call_operand.vmem [shape: f32[4,3], index: 1, kind: output, shape index: {}]
  // Predicated region
  $region2: #{mul.7} parent=0 // pred_check
    _
  $region3: #{mul.7} parent=0 // pred_check_branch
    %3 = sbr.rel (0) target = $region5
  $region4: #{mul.7} parent=0 // pred_region
    _
  $region5: #{mul.7} parent=0 // pred_fallthru
    _
  %v4 = vld [vmem:[%s0] ss:$0 sm:$0xff]
  %5 = vst [vmem:[%s1] sm:$0xf] %v4

// kernel: painn_forward.9
$region0: #{painn_forward.9}
  #allocation0 [shape = 'u32[]', space=smem, size = 0x4, offset = 0x4, fixed_abs, tag = 'smem constant byte address 0x4 - core index']
  #allocation1 [shape = 'u32[72,128]{1,0:T(1,128)}', space=vmem, size = 0x9000, scoped, tag = 'internal scratch']
  %s0 = inlined_call_operand.vmem [shape: f32[24,128], index: 0, kind: input, shape index: {}]
  %s1 = inlined_call_operand.vmem [shape: f32[128,128], index: 1, kind: input, shape index: {}]
  %s2 = inlined_call_operand.vmem [shape: f32[1,128], index: 2, kind: input, shape index: {}]
  %s3 = inlined_call_operand.hbm [shape: f32[128,384], index: 3, kind: input, shape index: {}]
  %s4 = inlined_call_operand.vmem [shape: f32[1,384], index: 4, kind: input, shape index: {}]
  %s5 = inlined_call_operand.vmem [shape: f32[24,384], index: 5, kind: output, shape index: {}]
  %s6 = sld [smem:[#allocation0]]
  $region34: #{painn_forward.9} parent=0
    _
  %s8 = ssub.s32 1, %s6
  %s9 = scalar_select 0, %s8, %s6
  $region1: #{painn_forward.9} parent=0
    #allocation2 [shape = 'u8[196608]{0}', space=vmem, size = 0x30000, scoped, tag = 'input window, operand 3, single buffered']
    #allocation3 [shape = 's32[1]{0}', space=sflag, size = 0x4, scoped, tag = 'scoped memory for painn_forward.9']
    %10 = vsyncpa [#allocation3], 0
    // Predicated region
    $region2: #{painn_forward.9} parent=1 // pred_check
      _
    $region3: #{painn_forward.9} parent=1 // pred_check_branch
      %12 = sbr.rel (0) target = $region5
    $region4: #{painn_forward.9} parent=1 // pred_region
      _
    $region5: #{painn_forward.9} parent=1 // pred_fallthru
      _
    // Predicated region
    $region6: #{painn_forward.9} parent=1 // pred_check
      _
    $region7: #{painn_forward.9} parent=1 // pred_check_branch
      %14 = sbr.rel (0) target = $region9
    $region8: #{painn_forward.9} parent=1 // pred_region
      _
    $region9: #{painn_forward.9} parent=1 // pred_fallthru
      _
    // Predicated region
    $region10: #{painn_forward.9} parent=1 // pred_check
      _
    $region11: #{painn_forward.9} parent=1 // pred_check_branch
      %16 = sbr.rel (0) target = $region13
    $region12: #{painn_forward.9} parent=1 // pred_region
      _
    $region13: #{painn_forward.9} parent=1 // pred_fallthru
      _
    // Predicated region
    $region14: #{painn_forward.9} parent=1 // pred_check
      _
    $region15: #{painn_forward.9} parent=1 // pred_check_branch
      %18 = sbr.rel (0) target = $region17
    $region16: #{painn_forward.9} parent=1 // pred_region
      %20 = vsyncadd [#allocation3], 0
      %s21 = sshll.u32 %s3, 4
      %s22 = int_to_ptr.hbm [resolvable:$true] %s21
      %s23 = sshll.u32 [#allocation2], 4
      %s24 = int_to_ptr.vmem [resolvable:$true] %s23
      %29 = dma.hbm_to_vmem [thread:$0]  %s22, 6144, %s24, [#allocation3], 384, 384, 24
    $region17: #{painn_forward.9} parent=1 // pred_fallthru
      _
    // Predicated region
    $region18: #{painn_forward.9} parent=1 // pred_check
      _
    $region19: #{painn_forward.9} parent=1 // pred_check_branch
      %31 = sbr.rel (0) target = $region21
    $region20: #{painn_forward.9} parent=1 // pred_region
      _
    $region21: #{painn_forward.9} parent=1 // pred_fallthru
      _
    // Predicated region
    $region22: #{painn_forward.9} parent=1 // pred_check
      _
    $region23: #{painn_forward.9} parent=1 // pred_check_branch
      %33 = sbr.rel (0) target = $region25
    $region24: #{painn_forward.9} parent=1 // pred_region
      %35 = dma.done [#allocation3], 6144
    $region25: #{painn_forward.9} parent=1 // pred_fallthru
      _
    %v36 = vld [vmem:[%s0] sm:$0xff]
    %v37 = vld [vmem:[%s0 + $0x8] sm:$0xff]
    %v38 = vld [vmem:[%s0 + $0x10] sm:$0xff]
    %v39 = vld [vmem:[%s1] sm:$0xff]
    %v40 = vld [vmem:[%s1 + $0x8] sm:$0xff]
    %v41 = vld [vmem:[%s1 + $0x10] sm:$0xff]
    %v42 = vld [vmem:[%s1 + $0x18] sm:$0xff]
    %v43 = vld [vmem:[%s1 + $0x20] sm:$0xff]
    %v44 = vld [vmem:[%s1 + $0x28] sm:$0xff]
    %v45 = vld [vmem:[%s1 + $0x30] sm:$0xff]
    %v46 = vld [vmem:[%s1 + $0x38] sm:$0xff]
    %v47 = vld [vmem:[%s1 + $0x40] sm:$0xff]
    %v48 = vld [vmem:[%s1 + $0x48] sm:$0xff]
    %v49 = vld [vmem:[%s1 + $0x50] sm:$0xff]
    %v50 = vld [vmem:[%s1 + $0x58] sm:$0xff]
    %v51 = vld [vmem:[%s1 + $0x60] sm:$0xff]
    %v52 = vld [vmem:[%s1 + $0x68] sm:$0xff]
    %v53 = vld [vmem:[%s1 + $0x70] sm:$0xff]
    %v54 = vld [vmem:[%s1 + $0x78] sm:$0xff]
    %v55 = vld [vmem:[%s2] sm:$0x1]
    %v57 = vperm.slane %v55, 0
    %59 = vmatpush.msra.mxu0 %v54
    %60 = vmatpush.msra.mxu0 %v53
    %61 = vmatpush.msra.mxu0 %v52
    %62 = vmatpush.msra.mxu0 %v51
    %63 = vmatpush.msra.mxu0 %v50
    %64 = vmatpush.msra.mxu0 %v49
    %65 = vmatpush.msra.mxu0 %v48
    %66 = vmatpush.msra.mxu0 %v47
    %67 = vmatpush.msra.mxu0 %v46
    %68 = vmatpush.msra.mxu0 %v45
    %69 = vmatpush.msra.mxu0 %v44
    %70 = vmatpush.msra.mxu0 %v43
    %71 = vmatpush.msra.mxu0 %v42
    %72 = vmatpush.msra.mxu0 %v41
    %73 = vmatpush.msra.mxu0 %v40
    %74 = vmatpush.msra.mxu0 %v39
    %75 = vmatmul.f32.gmra.mxu0 %v36
    %v76 = vpop.f32.mrf.mxu0
    %v77 = vadd.f32 %v57, %v76
    %78 = vmatmul.f32.gmra.mxu0 %v37
    %v79 = vpop.f32.mrf.mxu0
    %v80 = vadd.f32 %v57, %v79
    %81 = vmatmul.f32.gmra.mxu0 %v38
    %v82 = vpop.f32.mrf.mxu0
    %v83 = vadd.f32 %v57, %v82
    %84 = vdwg.mxu0
    %v85 = vxor.u32 %v77, 2147483648
    %v86 = vxor.u32 %v80, 2147483648
    %v87 = vxor.u32 %v83, 2147483648
    %v88 = vmul.f32 %v85, 1.442695
    %v89 = vpow.pop %v88
    %v90 = vmul.f32 %v86, 1.442695
    %v91 = vpow.pop %v90
    %v92 = vmul.f32 %v87, 1.442695
    %v93 = vpow.pop %v92
    %v94 = vadd.f32 %v89, 1.0
    %v95 = vadd.f32 %v91, 1.0
    %v96 = vadd.f32 %v93, 1.0
    %v97 = vrcp.pop %v94
    %v98 = vmul.f32 %v94, %v97
    %v99 = vsub.f32 1.0, %v98
    %v100 = vmul.f32 %v97, %v99
    %v101 = vadd.f32 %v97, %v100
    %vm102 = vweird.f32 %v94
    %vm103 = vweird.f32 %v97
    %vm104 = vmor %vm102, %vm103
    %v105 = vsel %vm104, %v97, %v101
    %v106 = vand.u32 2147483647, %v94
    %vm107 = vcmp.eq.f32.partialorder %v106, 8.507059e+37
    %v108 = vand.u32 %v94, 2147483648
    %v109 = vor.u32 1.1754944e-38, %v108
    %v110 = vsel %vm107, %v109, %v105
    %v111 = vmul.f32 1.0, %v110
    %v112 = vrcp.pop %v95
    %v113 = vmul.f32 %v95, %v112
    %v114 = vsub.f32 1.0, %v113
    %v115 = vmul.f32 %v112, %v114
    %v116 = vadd.f32 %v112, %v115
    %vm117 = vweird.f32 %v95
    %vm118 = vweird.f32 %v112
    %vm119 = vmor %vm117, %vm118
    %v120 = vsel %vm119, %v112, %v116
    %v121 = vand.u32 2147483647, %v95
    %vm122 = vcmp.eq.f32.partialorder %v121, 8.507059e+37
    %v123 = vand.u32 %v95, 2147483648
    %v124 = vor.u32 1.1754944e-38, %v123
    %v125 = vsel %vm122, %v124, %v120
    %v126 = vmul.f32 1.0, %v125
    %v127 = vrcp.pop %v96
    %v128 = vmul.f32 %v96, %v127
    %v129 = vsub.f32 1.0, %v128
    %v130 = vmul.f32 %v127, %v129
    %v131 = vadd.f32 %v127, %v130
    %vm132 = vweird.f32 %v96
    %vm133 = vweird.f32 %v127
    %vm134 = vmor %vm132, %vm133
    %v135 = vsel %vm134, %v127, %v131
    %v136 = vand.u32 2147483647, %v96
    %vm137 = vcmp.eq.f32.partialorder %v136, 8.507059e+37
    %v138 = vand.u32 %v96, 2147483648
    %v139 = vor.u32 1.1754944e-38, %v138
    %v140 = vsel %vm137, %v139, %v135
    %v141 = vmul.f32 1.0, %v140
    %v142 = vmul.f32 %v77, %v111
    %v143 = vmul.f32 %v80, %v126
    %v144 = vmul.f32 %v83, %v141
    %v145 = vld [vmem:[#allocation2] sm:$0xff]
    %v146 = vld [vmem:[#allocation2 + $0x8] sm:$0xff]
    %v147 = vld [vmem:[#allocation2 + $0x10] sm:$0xff]
    %v148 = vld [vmem:[#allocation2 + $0x18] sm:$0xff]
    %v149 = vld [vmem:[#allocation2 + $0x20] sm:$0xff]
    %v150 = vld [vmem:[#allocation2 + $0x28] sm:$0xff]
    %v151 = vld [vmem:[#allocation2 + $0x30] sm:$0xff]
    %v152 = vld [vmem:[#allocation2 + $0x38] sm:$0xff]
    %v153 = vld [vmem:[#allocation2 + $0x40] sm:$0xff]
    %v154 = vld [vmem:[#allocation2 + $0x48] sm:$0xff]
    %v155 = vld [vmem:[#allocation2 + $0x50] sm:$0xff]
    %v156 = vld [vmem:[#allocation2 + $0x58] sm:$0xff]
    %v157 = vld [vmem:[#allocation2 + $0x60] sm:$0xff]
    %v158 = vld [vmem:[#allocation2 + $0x68] sm:$0xff]
    %v159 = vld [vmem:[#allocation2 + $0x70] sm:$0xff]
    %v160 = vld [vmem:[#allocation2 + $0x78] sm:$0xff]
    %v161 = vld [vmem:[#allocation2 + $0x80] sm:$0xff]
    %v162 = vld [vmem:[#allocation2 + $0x88] sm:$0xff]
    %v163 = vld [vmem:[#allocation2 + $0x90] sm:$0xff]
    %v164 = vld [vmem:[#allocation2 + $0x98] sm:$0xff]
    %v165 = vld [vmem:[#allocation2 + $0xa0] sm:$0xff]
    %v166 = vld [vmem:[#allocation2 + $0xa8] sm:$0xff]
    %v167 = vld [vmem:[#allocation2 + $0xb0] sm:$0xff]
    %v168 = vld [vmem:[#allocation2 + $0xb8] sm:$0xff]
    %v169 = vld [vmem:[#allocation2 + $0xc0] sm:$0xff]
    %v170 = vld [vmem:[#allocation2 + $0xc8] sm:$0xff]
    %v171 = vld [vmem:[#allocation2 + $0xd0] sm:$0xff]
    %v172 = vld [vmem:[#allocation2 + $0xd8] sm:$0xff]
    %v173 = vld [vmem:[#allocation2 + $0xe0] sm:$0xff]
    %v174 = vld [vmem:[#allocation2 + $0xe8] sm:$0xff]
    %v175 = vld [vmem:[#allocation2 + $0xf0] sm:$0xff]
    %v176 = vld [vmem:[#allocation2 + $0xf8] sm:$0xff]
    %v177 = vld [vmem:[#allocation2 + $0x100] sm:$0xff]
    %v178 = vld [vmem:[#allocation2 + $0x108] sm:$0xff]
    %v179 = vld [vmem:[#allocation2 + $0x110] sm:$0xff]
    %v180 = vld [vmem:[#allocation2 + $0x118] sm:$0xff]
    %v181 = vld [vmem:[#allocation2 + $0x120] sm:$0xff]
    %v182 = vld [vmem:[#allocation2 + $0x128] sm:$0xff]
    %v183 = vld [vmem:[#allocation2 + $0x130] sm:$0xff]
    %v184 = vld [vmem:[#allocation2 + $0x138] sm:$0xff]
    %v185 = vld [vmem:[#allocation2 + $0x140] sm:$0xff]
    %v186 = vld [vmem:[#allocation2 + $0x148] sm:$0xff]
    %v187 = vld [vmem:[#allocation2 + $0x150] sm:$0xff]
    %v188 = vld [vmem:[#allocation2 + $0x158] sm:$0xff]
    %v189 = vld [vmem:[#allocation2 + $0x160] sm:$0xff]
    %v190 = vld [vmem:[#allocation2 + $0x168] sm:$0xff]
    %v191 = vld [vmem:[#allocation2 + $0x170] sm:$0xff]
    %v192 = vld [vmem:[#allocation2 + $0x178] sm:$0xff]
    %v193 = vld [vmem:[%s4] sm:$0x7]
    %v195 = vperm.slane %v193, 0
    %v196 = vperm.slane %v193, 1
    %v197 = vperm.slane %v193, 2
    %201 = vmatpush.msra.mxu0 %v190
    %202 = vmatpush.msra.mxu0 %v187
    %203 = vmatpush.msra.mxu0 %v184
    %204 = vmatpush.msra.mxu0 %v181
    %205 = vmatpush.msra.mxu0 %v178
    %206 = vmatpush.msra.mxu0 %v175
    %207 = vmatpush.msra.mxu0 %v172
    %208 = vmatpush.msra.mxu0 %v169
    %209 = vmatpush.msra.mxu0 %v166
    %210 = vmatpush.msra.mxu0 %v163
    %211 = vmatpush.msra.mxu0 %v160
    %212 = vmatpush.msra.mxu0 %v157
    %213 = vmatpush.msra.mxu0 %v154
    %214 = vmatpush.msra.mxu0 %v151
    %215 = vmatpush.msra.mxu0 %v148
    %216 = vmatpush.msra.mxu0 %v145
    %217 = vmatmul.f32.gmra.mxu0 %v142
    %v218 = vpop.f32.mrf.mxu0
    %v219 = vadd.f32 %v195, %v218
    %220 = vmatmul.f32.gmra.mxu0 %v143
    %v221 = vpop.f32.mrf.mxu0
    %v222 = vadd.f32 %v195, %v221
    %223 = vmatmul.f32.gmra.mxu0 %v144
    %v224 = vpop.f32.mrf.mxu0
    %v225 = vadd.f32 %v195, %v224
    %226 = vdwg.mxu0
    %227 = vmatpush.msra.mxu0 %v191
    %228 = vmatpush.msra.mxu0 %v188
    %229 = vmatpush.msra.mxu0 %v185
    %230 = vmatpush.msra.mxu0 %v182
    %231 = vmatpush.msra.mxu0 %v179
    %232 = vmatpush.msra.mxu0 %v176
    %233 = vmatpush.msra.mxu0 %v173
    %234 = vmatpush.msra.mxu0 %v170
    %235 = vmatpush.msra.mxu0 %v167
    %236 = vmatpush.msra.mxu0 %v164
    %237 = vmatpush.msra.mxu0 %v161
    %238 = vmatpush.msra.mxu0 %v158
    %239 = vmatpush.msra.mxu0 %v155
    %240 = vmatpush.msra.mxu0 %v152
    %241 = vmatpush.msra.mxu0 %v149
    %242 = vmatpush.msra.mxu0 %v146
    %243 = vmatmul.f32.gmra.mxu0 %v142
    %v244 = vpop.f32.mrf.mxu0
    %v245 = vadd.f32 %v196, %v244
    %246 = vmatmul.f32.gmra.mxu0 %v143
    %v247 = vpop.f32.mrf.mxu0
    %v248 = vadd.f32 %v196, %v247
    %249 = vmatmul.f32.gmra.mxu0 %v144
    %v250 = vpop.f32.mrf.mxu0
    %v251 = vadd.f32 %v196, %v250
    %252 = vdwg.mxu0
    %253 = vmatpush.msra.mxu0 %v192
    %254 = vmatpush.msra.mxu0 %v189
    %255 = vmatpush.msra.mxu0 %v186
    %256 = vmatpush.msra.mxu0 %v183
    %257 = vmatpush.msra.mxu0 %v180
    %258 = vmatpush.msra.mxu0 %v177
    %259 = vmatpush.msra.mxu0 %v174
    %260 = vmatpush.msra.mxu0 %v171
    %261 = vmatpush.msra.mxu0 %v168
    %262 = vmatpush.msra.mxu0 %v165
    %263 = vmatpush.msra.mxu0 %v162
    %264 = vmatpush.msra.mxu0 %v159
    %265 = vmatpush.msra.mxu0 %v156
    %266 = vmatpush.msra.mxu0 %v153
    %267 = vmatpush.msra.mxu0 %v150
    %268 = vmatpush.msra.mxu0 %v147
    %269 = vmatmul.f32.gmra.mxu0 %v142
    %v270 = vpop.f32.mrf.mxu0
    %v271 = vadd.f32 %v197, %v270
    %272 = vmatmul.f32.gmra.mxu0 %v143
    %v273 = vpop.f32.mrf.mxu0
    %v274 = vadd.f32 %v197, %v273
    %275 = vmatmul.f32.gmra.mxu0 %v144
    %v276 = vpop.f32.mrf.mxu0
    %v277 = vadd.f32 %v197, %v276
    %278 = vdwg.mxu0
    %279 = vst [vmem:[%s5] sm:$0xff] %v219
    %280 = vst [vmem:[%s5 + $0x8] sm:$0xff] %v245
    %281 = vst [vmem:[%s5 + $0x10] sm:$0xff] %v271
    %282 = vst [vmem:[%s5 + $0x18] sm:$0xff] %v222
    %283 = vst [vmem:[%s5 + $0x20] sm:$0xff] %v248
    %284 = vst [vmem:[%s5 + $0x28] sm:$0xff] %v274
    %285 = vst [vmem:[%s5 + $0x30] sm:$0xff] %v225
    %286 = vst [vmem:[%s5 + $0x38] sm:$0xff] %v251
    %287 = vst [vmem:[%s5 + $0x40] sm:$0xff] %v277
    // Predicated region
    $region26: #{painn_forward.9} parent=1 // pred_check
      _
    $region27: #{painn_forward.9} parent=1 // pred_check_branch
      %289 = sbr.rel (0) target = $region29
    $region28: #{painn_forward.9} parent=1 // pred_region
      _
    $region29: #{painn_forward.9} parent=1 // pred_fallthru
      _
    // Predicated region
    $region30: #{painn_forward.9} parent=1 // pred_check
      _
    $region31: #{painn_forward.9} parent=1 // pred_check_branch
      %291 = sbr.rel (0) target = $region33
    $region32: #{painn_forward.9} parent=1 // pred_region
      _
    $region33: #{painn_forward.9} parent=1 // pred_fallthru
      _
    %292 = vsyncpa [#allocation3], 1

// kernel: painn_forward.6
$region0: #{painn_forward.6}
  #allocation0 [shape = 'u32[]', space=smem, size = 0x4, offset = 0x4, fixed_abs, tag = 'smem constant byte address 0x4 - core index']
  #allocation1 [shape = 'u32[72,128]{1,0:T(1,128)}', space=vmem, size = 0x9000, scoped, tag = 'internal scratch']
  %s0 = inlined_call_operand.vmem [shape: f32[24,128], index: 0, kind: input, shape index: {}]
  %s1 = inlined_call_operand.vmem [shape: f32[128,128], index: 1, kind: input, shape index: {}]
  %s2 = inlined_call_operand.vmem [shape: f32[1,128], index: 2, kind: input, shape index: {}]
  %s3 = inlined_call_operand.vmem [shape: f32[128,384], index: 3, kind: input, shape index: {}]
  %s4 = inlined_call_operand.vmem [shape: f32[1,384], index: 4, kind: input, shape index: {}]
  %s5 = inlined_call_operand.vmem [shape: f32[24,384], index: 5, kind: output, shape index: {}]
  %s6 = sld [smem:[#allocation0]]
  $region30: #{painn_forward.6} parent=0
    _
  %s8 = ssub.s32 1, %s6
  %s9 = scalar_select 0, %s8, %s6
  // Predicated region
  $region2: #{painn_forward.6} parent=0 // pred_check
    _
  $region3: #{painn_forward.6} parent=0 // pred_check_branch
    %11 = sbr.rel (0) target = $region5
  $region4: #{painn_forward.6} parent=0 // pred_region
    _
  $region5: #{painn_forward.6} parent=0 // pred_fallthru
    _
  // Predicated region
  $region6: #{painn_forward.6} parent=0 // pred_check
    _
  $region7: #{painn_forward.6} parent=0 // pred_check_branch
    %13 = sbr.rel (0) target = $region9
  $region8: #{painn_forward.6} parent=0 // pred_region
    _
  $region9: #{painn_forward.6} parent=0 // pred_fallthru
    _
  // Predicated region
  $region10: #{painn_forward.6} parent=0 // pred_check
    _
  $region11: #{painn_forward.6} parent=0 // pred_check_branch
    %15 = sbr.rel (0) target = $region13
  $region12: #{painn_forward.6} parent=0 // pred_region
    _
  $region13: #{painn_forward.6} parent=0 // pred_fallthru
    _
  // Predicated region
  $region14: #{painn_forward.6} parent=0 // pred_check
    _
  $region15: #{painn_forward.6} parent=0 // pred_check_branch
    %17 = sbr.rel (0) target = $region17
  $region16: #{painn_forward.6} parent=0 // pred_region
    _
  $region17: #{painn_forward.6} parent=0 // pred_fallthru
    _
  // Predicated region
  $region18: #{painn_forward.6} parent=0 // pred_check
    _
  $region19: #{painn_forward.6} parent=0 // pred_check_branch
    %19 = sbr.rel (0) target = $region21
  $region20: #{painn_forward.6} parent=0 // pred_region
    _
  $region21: #{painn_forward.6} parent=0 // pred_fallthru
    _
  %v20 = vld [vmem:[%s0] sm:$0xff]
  %v21 = vld [vmem:[%s0 + $0x8] sm:$0xff]
  %v22 = vld [vmem:[%s0 + $0x10] sm:$0xff]
  %v23 = vld [vmem:[%s1] sm:$0xff]
  %v24 = vld [vmem:[%s1 + $0x8] sm:$0xff]
  %v25 = vld [vmem:[%s1 + $0x10] sm:$0xff]
  %v26 = vld [vmem:[%s1 + $0x18] sm:$0xff]
  %v27 = vld [vmem:[%s1 + $0x20] sm:$0xff]
  %v28 = vld [vmem:[%s1 + $0x28] sm:$0xff]
  %v29 = vld [vmem:[%s1 + $0x30] sm:$0xff]
  %v30 = vld [vmem:[%s1 + $0x38] sm:$0xff]
  %v31 = vld [vmem:[%s1 + $0x40] sm:$0xff]
  %v32 = vld [vmem:[%s1 + $0x48] sm:$0xff]
  %v33 = vld [vmem:[%s1 + $0x50] sm:$0xff]
  %v34 = vld [vmem:[%s1 + $0x58] sm:$0xff]
  %v35 = vld [vmem:[%s1 + $0x60] sm:$0xff]
  %v36 = vld [vmem:[%s1 + $0x68] sm:$0xff]
  %v37 = vld [vmem:[%s1 + $0x70] sm:$0xff]
  %v38 = vld [vmem:[%s1 + $0x78] sm:$0xff]
  %v39 = vld [vmem:[%s2] sm:$0x1]
  %v41 = vperm.slane %v39, 0
  %43 = vmatpush.msra.mxu0 %v38
  %44 = vmatpush.msra.mxu0 %v37
  %45 = vmatpush.msra.mxu0 %v36
  %46 = vmatpush.msra.mxu0 %v35
  %47 = vmatpush.msra.mxu0 %v34
  %48 = vmatpush.msra.mxu0 %v33
  %49 = vmatpush.msra.mxu0 %v32
  %50 = vmatpush.msra.mxu0 %v31
  %51 = vmatpush.msra.mxu0 %v30
  %52 = vmatpush.msra.mxu0 %v29
  %53 = vmatpush.msra.mxu0 %v28
  %54 = vmatpush.msra.mxu0 %v27
  %55 = vmatpush.msra.mxu0 %v26
  %56 = vmatpush.msra.mxu0 %v25
  %57 = vmatpush.msra.mxu0 %v24
  %58 = vmatpush.msra.mxu0 %v23
  %59 = vmatmul.f32.gmra.mxu0 %v20
  %v60 = vpop.f32.mrf.mxu0
  %v61 = vadd.f32 %v41, %v60
  %62 = vmatmul.f32.gmra.mxu0 %v21
  %v63 = vpop.f32.mrf.mxu0
  %v64 = vadd.f32 %v41, %v63
  %65 = vmatmul.f32.gmra.mxu0 %v22
  %v66 = vpop.f32.mrf.mxu0
  %v67 = vadd.f32 %v41, %v66
  %68 = vdwg.mxu0
  %v69 = vxor.u32 %v61, 2147483648
  %v70 = vxor.u32 %v64, 2147483648
  %v71 = vxor.u32 %v67, 2147483648
  %v72 = vmul.f32 %v69, 1.442695
  %v73 = vpow.pop %v72
  %v74 = vmul.f32 %v70, 1.442695
  %v75 = vpow.pop %v74
  %v76 = vmul.f32 %v71, 1.442695
  %v77 = vpow.pop %v76
  %v78 = vadd.f32 %v73, 1.0
  %v79 = vadd.f32 %v75, 1.0
  %v80 = vadd.f32 %v77, 1.0
  %v81 = vrcp.pop %v78
  %v82 = vmul.f32 %v78, %v81
  %v83 = vsub.f32 1.0, %v82
  %v84 = vmul.f32 %v81, %v83
  %v85 = vadd.f32 %v81, %v84
  %vm86 = vweird.f32 %v78
  %vm87 = vweird.f32 %v81
  %vm88 = vmor %vm86, %vm87
  %v89 = vsel %vm88, %v81, %v85
  %v90 = vand.u32 2147483647, %v78
  %vm91 = vcmp.eq.f32.partialorder %v90, 8.507059e+37
  %v92 = vand.u32 %v78, 2147483648
  %v93 = vor.u32 1.1754944e-38, %v92
  %v94 = vsel %vm91, %v93, %v89
  %v95 = vmul.f32 1.0, %v94
  %v96 = vrcp.pop %v79
  %v97 = vmul.f32 %v79, %v96
  %v98 = vsub.f32 1.0, %v97
  %v99 = vmul.f32 %v96, %v98
  %v100 = vadd.f32 %v96, %v99
  %vm101 = vweird.f32 %v79
  %vm102 = vweird.f32 %v96
  %vm103 = vmor %vm101, %vm102
  %v104 = vsel %vm103, %v96, %v100
  %v105 = vand.u32 2147483647, %v79
  %vm106 = vcmp.eq.f32.partialorder %v105, 8.507059e+37
  %v107 = vand.u32 %v79, 2147483648
  %v108 = vor.u32 1.1754944e-38, %v107
  %v109 = vsel %vm106, %v108, %v104
  %v110 = vmul.f32 1.0, %v109
  %v111 = vrcp.pop %v80
  %v112 = vmul.f32 %v80, %v111
  %v113 = vsub.f32 1.0, %v112
  %v114 = vmul.f32 %v111, %v113
  %v115 = vadd.f32 %v111, %v114
  %vm116 = vweird.f32 %v80
  %vm117 = vweird.f32 %v111
  %vm118 = vmor %vm116, %vm117
  %v119 = vsel %vm118, %v111, %v115
  %v120 = vand.u32 2147483647, %v80
  %vm121 = vcmp.eq.f32.partialorder %v120, 8.507059e+37
  %v122 = vand.u32 %v80, 2147483648
  %v123 = vor.u32 1.1754944e-38, %v122
  %v124 = vsel %vm121, %v123, %v119
  %v125 = vmul.f32 1.0, %v124
  %v126 = vmul.f32 %v61, %v95
  %v127 = vmul.f32 %v64, %v110
  %v128 = vmul.f32 %v67, %v125
  %v129 = vld [vmem:[%s3] sm:$0xff]
  %v130 = vld [vmem:[%s3 + $0x8] sm:$0xff]
  %v131 = vld [vmem:[%s3 + $0x10] sm:$0xff]
  %v132 = vld [vmem:[%s3 + $0x18] sm:$0xff]
  %v133 = vld [vmem:[%s3 + $0x20] sm:$0xff]
  %v134 = vld [vmem:[%s3 + $0x28] sm:$0xff]
  %v135 = vld [vmem:[%s3 + $0x30] sm:$0xff]
  %v136 = vld [vmem:[%s3 + $0x38] sm:$0xff]
  %v137 = vld [vmem:[%s3 + $0x40] sm:$0xff]
  %v138 = vld [vmem:[%s3 + $0x48] sm:$0xff]
  %v139 = vld [vmem:[%s3 + $0x50] sm:$0xff]
  %v140 = vld [vmem:[%s3 + $0x58] sm:$0xff]
  %v141 = vld [vmem:[%s3 + $0x60] sm:$0xff]
  %v142 = vld [vmem:[%s3 + $0x68] sm:$0xff]
  %v143 = vld [vmem:[%s3 + $0x70] sm:$0xff]
  %v144 = vld [vmem:[%s3 + $0x78] sm:$0xff]
  %v145 = vld [vmem:[%s3 + $0x80] sm:$0xff]
  %v146 = vld [vmem:[%s3 + $0x88] sm:$0xff]
  %v147 = vld [vmem:[%s3 + $0x90] sm:$0xff]
  %v148 = vld [vmem:[%s3 + $0x98] sm:$0xff]
  %v149 = vld [vmem:[%s3 + $0xa0] sm:$0xff]
  %v150 = vld [vmem:[%s3 + $0xa8] sm:$0xff]
  %v151 = vld [vmem:[%s3 + $0xb0] sm:$0xff]
  %v152 = vld [vmem:[%s3 + $0xb8] sm:$0xff]
  %v153 = vld [vmem:[%s3 + $0xc0] sm:$0xff]
  %v154 = vld [vmem:[%s3 + $0xc8] sm:$0xff]
  %v155 = vld [vmem:[%s3 + $0xd0] sm:$0xff]
  %v156 = vld [vmem:[%s3 + $0xd8] sm:$0xff]
  %v157 = vld [vmem:[%s3 + $0xe0] sm:$0xff]
  %v158 = vld [vmem:[%s3 + $0xe8] sm:$0xff]
  %v159 = vld [vmem:[%s3 + $0xf0] sm:$0xff]
  %v160 = vld [vmem:[%s3 + $0xf8] sm:$0xff]
  %v161 = vld [vmem:[%s3 + $0x100] sm:$0xff]
  %v162 = vld [vmem:[%s3 + $0x108] sm:$0xff]
  %v163 = vld [vmem:[%s3 + $0x110] sm:$0xff]
  %v164 = vld [vmem:[%s3 + $0x118] sm:$0xff]
  %v165 = vld [vmem:[%s3 + $0x120] sm:$0xff]
  %v166 = vld [vmem:[%s3 + $0x128] sm:$0xff]
  %v167 = vld [vmem:[%s3 + $0x130] sm:$0xff]
  %v168 = vld [vmem:[%s3 + $0x138] sm:$0xff]
  %v169 = vld [vmem:[%s3 + $0x140] sm:$0xff]
  %v170 = vld [vmem:[%s3 + $0x148] sm:$0xff]
  %v171 = vld [vmem:[%s3 + $0x150] sm:$0xff]
  %v172 = vld [vmem:[%s3 + $0x158] sm:$0xff]
  %v173 = vld [vmem:[%s3 + $0x160] sm:$0xff]
  %v174 = vld [vmem:[%s3 + $0x168] sm:$0xff]
  %v175 = vld [vmem:[%s3 + $0x170] sm:$0xff]
  %v176 = vld [vmem:[%s3 + $0x178] sm:$0xff]
  %v177 = vld [vmem:[%s4] sm:$0x7]
  %v179 = vperm.slane %v177, 0
  %v180 = vperm.slane %v177, 1
  %v181 = vperm.slane %v177, 2
  %185 = vmatpush.msra.mxu0 %v174
  %186 = vmatpush.msra.mxu0 %v171
  %187 = vmatpush.msra.mxu0 %v168
  %188 = vmatpush.msra.mxu0 %v165
  %189 = vmatpush.msra.mxu0 %v162
  %190 = vmatpush.msra.mxu0 %v159
  %191 = vmatpush.msra.mxu0 %v156
  %192 = vmatpush.msra.mxu0 %v153
  %193 = vmatpush.msra.mxu0 %v150
  %194 = vmatpush.msra.mxu0 %v147
  %195 = vmatpush.msra.mxu0 %v144
  %196 = vmatpush.msra.mxu0 %v141
  %197 = vmatpush.msra.mxu0 %v138
  %198 = vmatpush.msra.mxu0 %v135
  %199 = vmatpush.msra.mxu0 %v132
  %200 = vmatpush.msra.mxu0 %v129
  %201 = vmatmul.f32.gmra.mxu0 %v126
  %v202 = vpop.f32.mrf.mxu0
  %v203 = vadd.f32 %v179, %v202
  %204 = vmatmul.f32.gmra.mxu0 %v127
  %v205 = vpop.f32.mrf.mxu0
  %v206 = vadd.f32 %v179, %v205
  %207 = vmatmul.f32.gmra.mxu0 %v128
  %v208 = vpop.f32.mrf.mxu0
  %v209 = vadd.f32 %v179, %v208
  %210 = vdwg.mxu0
  %211 = vmatpush.msra.mxu0 %v175
  %212 = vmatpush.msra.mxu0 %v172
  %213 = vmatpush.msra.mxu0 %v169
  %214 = vmatpush.msra.mxu0 %v166
  %215 = vmatpush.msra.mxu0 %v163
  %216 = vmatpush.msra.mxu0 %v160
  %217 = vmatpush.msra.mxu0 %v157
  %218 = vmatpush.msra.mxu0 %v154
  %219 = vmatpush.msra.mxu0 %v151
  %220 = vmatpush.msra.mxu0 %v148
  %221 = vmatpush.msra.mxu0 %v145
  %222 = vmatpush.msra.mxu0 %v142
  %223 = vmatpush.msra.mxu0 %v139
  %224 = vmatpush.msra.mxu0 %v136
  %225 = vmatpush.msra.mxu0 %v133
  %226 = vmatpush.msra.mxu0 %v130
  %227 = vmatmul.f32.gmra.mxu0 %v126
  %v228 = vpop.f32.mrf.mxu0
  %v229 = vadd.f32 %v180, %v228
  %230 = vmatmul.f32.gmra.mxu0 %v127
  %v231 = vpop.f32.mrf.mxu0
  %v232 = vadd.f32 %v180, %v231
  %233 = vmatmul.f32.gmra.mxu0 %v128
  %v234 = vpop.f32.mrf.mxu0
  %v235 = vadd.f32 %v180, %v234
  %236 = vdwg.mxu0
  %237 = vmatpush.msra.mxu0 %v176
  %238 = vmatpush.msra.mxu0 %v173
  %239 = vmatpush.msra.mxu0 %v170
  %240 = vmatpush.msra.mxu0 %v167
  %241 = vmatpush.msra.mxu0 %v164
  %242 = vmatpush.msra.mxu0 %v161
  %243 = vmatpush.msra.mxu0 %v158
  %244 = vmatpush.msra.mxu0 %v155
  %245 = vmatpush.msra.mxu0 %v152
  %246 = vmatpush.msra.mxu0 %v149
  %247 = vmatpush.msra.mxu0 %v146
  %248 = vmatpush.msra.mxu0 %v143
  %249 = vmatpush.msra.mxu0 %v140
  %250 = vmatpush.msra.mxu0 %v137
  %251 = vmatpush.msra.mxu0 %v134
  %252 = vmatpush.msra.mxu0 %v131
  %253 = vmatmul.f32.gmra.mxu0 %v126
  %v254 = vpop.f32.mrf.mxu0
  %v255 = vadd.f32 %v181, %v254
  %256 = vmatmul.f32.gmra.mxu0 %v127
  %v257 = vpop.f32.mrf.mxu0
  %v258 = vadd.f32 %v181, %v257
  %259 = vmatmul.f32.gmra.mxu0 %v128
  %v260 = vpop.f32.mrf.mxu0
  %v261 = vadd.f32 %v181, %v260
  %262 = vdwg.mxu0
  %263 = vst [vmem:[%s5] sm:$0xff] %v203
  %264 = vst [vmem:[%s5 + $0x8] sm:$0xff] %v229
  %265 = vst [vmem:[%s5 + $0x10] sm:$0xff] %v255
  %266 = vst [vmem:[%s5 + $0x18] sm:$0xff] %v206
  %267 = vst [vmem:[%s5 + $0x20] sm:$0xff] %v232
  %268 = vst [vmem:[%s5 + $0x28] sm:$0xff] %v258
  %269 = vst [vmem:[%s5 + $0x30] sm:$0xff] %v209
  %270 = vst [vmem:[%s5 + $0x38] sm:$0xff] %v235
  %271 = vst [vmem:[%s5 + $0x40] sm:$0xff] %v261
  // Predicated region
  $region22: #{painn_forward.6} parent=0 // pred_check
    _
  $region23: #{painn_forward.6} parent=0 // pred_check_branch
    %273 = sbr.rel (0) target = $region25
  $region24: #{painn_forward.6} parent=0 // pred_region
    _
  $region25: #{painn_forward.6} parent=0 // pred_fallthru
    _
  // Predicated region
  $region26: #{painn_forward.6} parent=0 // pred_check
    _
  $region27: #{painn_forward.6} parent=0 // pred_check_branch
    %275 = sbr.rel (0) target = $region29
  $region28: #{painn_forward.6} parent=0 // pred_region
    _
  $region29: #{painn_forward.6} parent=0 // pred_fallthru
    _

// kernel: painn_forward.8
$region0: #{painn_forward.8}
  #allocation0 [shape = 'u32[]', space=smem, size = 0x4, offset = 0x4, fixed_abs, tag = 'smem constant byte address 0x4 - core index']
  #allocation1 [shape = 'u32[72,128]{1,0:T(1,128)}', space=vmem, size = 0x9000, scoped, tag = 'internal scratch']
  %s0 = inlined_call_operand.vmem [shape: f32[24,128], index: 0, kind: input, shape index: {}]
  %s1 = inlined_call_operand.vmem [shape: f32[3,24,128], index: 1, kind: input, shape index: {}]
  %s2 = inlined_call_operand.vmem [shape: f32[128,256], index: 2, kind: input, shape index: {}]
  %s3 = inlined_call_operand.hbm [shape: f32[256,128], index: 3, kind: input, shape index: {}]
  %s4 = inlined_call_operand.vmem [shape: f32[1,128], index: 4, kind: input, shape index: {}]
  %s5 = inlined_call_operand.hbm [shape: f32[128,384], index: 5, kind: input, shape index: {}]
  %s6 = inlined_call_operand.vmem [shape: f32[1,384], index: 6, kind: input, shape index: {}]
  %s7 = inlined_call_operand.vmem [shape: f32[1,128], index: 7, kind: input, shape index: {}]
  %s8 = inlined_call_operand.vmem [shape: f32[1,128], index: 8, kind: input, shape index: {}]
  %s9 = inlined_call_operand.vmem [shape: f32[24,128], index: 9, kind: output, shape index: {0}]
  %s10 = inlined_call_operand.vmem [shape: f32[3,24,128], index: 10, kind: output, shape index: {1}]
  %11 = xla_tuple %s9, %s10
  %s12 = sld [smem:[#allocation0]]
  $region62: #{painn_forward.8} parent=0
    _
  %s14 = ssub.s32 1, %s12
  %s15 = scalar_select 0, %s14, %s12
  $region1: #{painn_forward.8} parent=0
    #allocation2 [shape = 'u8[131072]{0}', space=vmem, size = 0x20000, scoped, tag = 'input window, operand 3, single buffered']
    #allocation3 [shape = 's32[1]{0}', space=sflag, size = 0x4, scoped, tag = 'scoped memory for painn_forward.8']
    #allocation4 [shape = 'u8[196608]{0}', space=vmem, size = 0x30000, scoped, tag = 'input window, operand 5, single buffered']
    #allocation5 [shape = 's32[1]{0}', space=sflag, size = 0x4, scoped, tag = 'scoped memory for painn_forward.8']
    %16 = vsyncpa [#allocation3], 0
    %17 = vsyncpa [#allocation5], 0
    // Predicated region
    $region2: #{painn_forward.8} parent=1 // pred_check
      _
    $region3: #{painn_forward.8} parent=1 // pred_check_branch
      %19 = sbr.rel (0) target = $region5
    $region4: #{painn_forward.8} parent=1 // pred_region
      _
    $region5: #{painn_forward.8} parent=1 // pred_fallthru
      _
    // Predicated region
    $region6: #{painn_forward.8} parent=1 // pred_check
      _
    $region7: #{painn_forward.8} parent=1 // pred_check_branch
      %21 = sbr.rel (0) target = $region9
    $region8: #{painn_forward.8} parent=1 // pred_region
      _
    $region9: #{painn_forward.8} parent=1 // pred_fallthru
      _
    // Predicated region
    $region10: #{painn_forward.8} parent=1 // pred_check
      _
    $region11: #{painn_forward.8} parent=1 // pred_check_branch
      %23 = sbr.rel (0) target = $region13
    $region12: #{painn_forward.8} parent=1 // pred_region
      _
    $region13: #{painn_forward.8} parent=1 // pred_fallthru
      _
    // Predicated region
    $region14: #{painn_forward.8} parent=1 // pred_check
      _
    $region15: #{painn_forward.8} parent=1 // pred_check_branch
      %25 = sbr.rel (0) target = $region17
    $region16: #{painn_forward.8} parent=1 // pred_region
      %27 = vsyncadd [#allocation3], 0
      %s28 = sshll.u32 %s3, 4
      %s29 = int_to_ptr.hbm [resolvable:$true] %s28
      %s30 = sshll.u32 [#allocation2], 4
      %s31 = int_to_ptr.vmem [resolvable:$true] %s30
      %36 = dma.hbm_to_vmem [thread:$0]  %s29, 4096, %s31, [#allocation3], 128, 128, 8
    $region17: #{painn_forward.8} parent=1 // pred_fallthru
      _
    // Predicated region
    $region18: #{painn_forward.8} parent=1 // pred_check
      _
    $region19: #{painn_forward.8} parent=1 // pred_check_branch
      %38 = sbr.rel (0) target = $region21
    $region20: #{painn_forward.8} parent=1 // pred_region
      _
    $region21: #{painn_forward.8} parent=1 // pred_fallthru
      _
    // Predicated region
    $region22: #{painn_forward.8} parent=1 // pred_check
      _
    $region23: #{painn_forward.8} parent=1 // pred_check_branch
      %40 = sbr.rel (0) target = $region25
    $region24: #{painn_forward.8} parent=1 // pred_region
      %42 = vsyncadd [#allocation5], 0
      %s43 = sshll.u32 %s5, 4
      %s44 = int_to_ptr.hbm [resolvable:$true] %s43
      %s45 = sshll.u32 [#allocation4], 4
      %s46 = int_to_ptr.vmem [resolvable:$true] %s45
      %51 = dma.hbm_to_vmem [thread:$0]  %s44, 6144, %s46, [#allocation5], 384, 384, 24
    $region25: #{painn_forward.8} parent=1 // pred_fallthru
      _
    // Predicated region
    $region26: #{painn_forward.8} parent=1 // pred_check
      _
    $region27: #{painn_forward.8} parent=1 // pred_check_branch
      %53 = sbr.rel (0) target = $region29
    $region28: #{painn_forward.8} parent=1 // pred_region
      _
    $region29: #{painn_forward.8} parent=1 // pred_fallthru
      _
    // Predicated region
    $region30: #{painn_forward.8} parent=1 // pred_check
      _
    $region31: #{painn_forward.8} parent=1 // pred_check_branch
      %55 = sbr.rel (0) target = $region33
    $region32: #{painn_forward.8} parent=1 // pred_region
      _
    $region33: #{painn_forward.8} parent=1 // pred_fallthru
      _
    // Predicated region
    $region34: #{painn_forward.8} parent=1 // pred_check
      _
    $region35: #{painn_forward.8} parent=1 // pred_check_branch
      %57 = sbr.rel (0) target = $region37
    $region36: #{painn_forward.8} parent=1 // pred_region
      _
    $region37: #{painn_forward.8} parent=1 // pred_fallthru
      _
    // Predicated region
    $region38: #{painn_forward.8} parent=1 // pred_check
      _
    $region39: #{painn_forward.8} parent=1 // pred_check_branch
      %59 = sbr.rel (0) target = $region41
    $region40: #{painn_forward.8} parent=1 // pred_region
      %61 = dma.done [#allocation3], 4096
    $region41: #{painn_forward.8} parent=1 // pred_fallthru
      _
    // Predicated region
    $region42: #{painn_forward.8} parent=1 // pred_check
      _
    $region43: #{painn_forward.8} parent=1 // pred_check_branch
      %63 = sbr.rel (0) target = $region45
    $region44: #{painn_forward.8} parent=1 // pred_region
      %65 = dma.done [#allocation5], 6144
    $region45: #{painn_forward.8} parent=1 // pred_fallthru
      _
    %v66 = vld [vmem:[%s0] sm:$0xff]
    %v67 = vld [vmem:[%s0 + $0x8] sm:$0xff]
    %v68 = vld [vmem:[%s0 + $0x10] sm:$0xff]
    %v69 = vld [vmem:[%s1] sm:$0xff]
    %v70 = vld [vmem:[%s1 + $0x8] sm:$0xff]
    %v71 = vld [vmem:[%s1 + $0x10] sm:$0xff]
    %v72 = vld [vmem:[%s1 + $0x18] sm:$0xff]
    %v73 = vld [vmem:[%s1 + $0x20] sm:$0xff]
    %v74 = vld [vmem:[%s1 + $0x28] sm:$0xff]
    %v75 = vld [vmem:[%s1 + $0x30] sm:$0xff]
    %v76 = vld [vmem:[%s1 + $0x38] sm:$0xff]
    %v77 = vld [vmem:[%s1 + $0x40] sm:$0xff]
    %v78 = vld [vmem:[%s2] sm:$0xff]
    %v79 = vld [vmem:[%s2 + $0x8] sm:$0xff]
    %v80 = vld [vmem:[%s2 + $0x10] sm:$0xff]
    %v81 = vld [vmem:[%s2 + $0x18] sm:$0xff]
    %v82 = vld [vmem:[%s2 + $0x20] sm:$0xff]
    %v83 = vld [vmem:[%s2 + $0x28] sm:$0xff]
    %v84 = vld [vmem:[%s2 + $0x30] sm:$0xff]
    %v85 = vld [vmem:[%s2 + $0x38] sm:$0xff]
    %v86 = vld [vmem:[%s2 + $0x40] sm:$0xff]
    %v87 = vld [vmem:[%s2 + $0x48] sm:$0xff]
    %v88 = vld [vmem:[%s2 + $0x50] sm:$0xff]
    %v89 = vld [vmem:[%s2 + $0x58] sm:$0xff]
    %v90 = vld [vmem:[%s2 + $0x60] sm:$0xff]
    %v91 = vld [vmem:[%s2 + $0x68] sm:$0xff]
    %v92 = vld [vmem:[%s2 + $0x70] sm:$0xff]
    %v93 = vld [vmem:[%s2 + $0x78] sm:$0xff]
    %v94 = vld [vmem:[%s2 + $0x80] sm:$0xff]
    %v95 = vld [vmem:[%s2 + $0x88] sm:$0xff]
    %v96 = vld [vmem:[%s2 + $0x90] sm:$0xff]
    %v97 = vld [vmem:[%s2 + $0x98] sm:$0xff]
    %v98 = vld [vmem:[%s2 + $0xa0] sm:$0xff]
    %v99 = vld [vmem:[%s2 + $0xa8] sm:$0xff]
    %v100 = vld [vmem:[%s2 + $0xb0] sm:$0xff]
    %v101 = vld [vmem:[%s2 + $0xb8] sm:$0xff]
    %v102 = vld [vmem:[%s2 + $0xc0] sm:$0xff]
    %v103 = vld [vmem:[%s2 + $0xc8] sm:$0xff]
    %v104 = vld [vmem:[%s2 + $0xd0] sm:$0xff]
    %v105 = vld [vmem:[%s2 + $0xd8] sm:$0xff]
    %v106 = vld [vmem:[%s2 + $0xe0] sm:$0xff]
    %v107 = vld [vmem:[%s2 + $0xe8] sm:$0xff]
    %v108 = vld [vmem:[%s2 + $0xf0] sm:$0xff]
    %v109 = vld [vmem:[%s2 + $0xf8] sm:$0xff]
    %110 = vmatpush.msra.mxu0 %v108
    %111 = vmatpush.msra.mxu0 %v106
    %112 = vmatpush.msra.mxu0 %v104
    %113 = vmatpush.msra.mxu0 %v102
    %114 = vmatpush.msra.mxu0 %v100
    %115 = vmatpush.msra.mxu0 %v98
    %116 = vmatpush.msra.mxu0 %v96
    %117 = vmatpush.msra.mxu0 %v94
    %118 = vmatpush.msra.mxu0 %v92
    %119 = vmatpush.msra.mxu0 %v90
    %120 = vmatpush.msra.mxu0 %v88
    %121 = vmatpush.msra.mxu0 %v86
    %122 = vmatpush.msra.mxu0 %v84
    %123 = vmatpush.msra.mxu0 %v82
    %124 = vmatpush.msra.mxu0 %v80
    %125 = vmatpush.msra.mxu0 %v78
    %126 = vmatmul.f32.gmra.mxu0 %v69
    %v127 = vpop.f32.mrf.mxu0
    %v128 = vadd.f32 0.0, %v127
    %129 = vmatmul.f32.gmra.mxu0 %v70
    %v130 = vpop.f32.mrf.mxu0
    %v131 = vadd.f32 0.0, %v130
    %132 = vmatmul.f32.gmra.mxu0 %v71
    %v133 = vpop.f32.mrf.mxu0
    %v134 = vadd.f32 0.0, %v133
    %135 = vmatmul.f32.gmra.mxu0 %v72
    %v136 = vpop.f32.mrf.mxu0
    %v137 = vadd.f32 0.0, %v136
    %138 = vmatmul.f32.gmra.mxu0 %v73
    %v139 = vpop.f32.mrf.mxu0
    %v140 = vadd.f32 0.0, %v139
    %141 = vmatmul.f32.gmra.mxu0 %v74
    %v142 = vpop.f32.mrf.mxu0
    %v143 = vadd.f32 0.0, %v142
    %144 = vmatmul.f32.gmra.mxu0 %v75
    %v145 = vpop.f32.mrf.mxu0
    %v146 = vadd.f32 0.0, %v145
    %147 = vmatmul.f32.gmra.mxu0 %v76
    %v148 = vpop.f32.mrf.mxu0
    %v149 = vadd.f32 0.0, %v148
    %150 = vmatmul.f32.gmra.mxu0 %v77
    %v151 = vpop.f32.mrf.mxu0
    %v152 = vadd.f32 0.0, %v151
    %153 = vdwg.mxu0
    %154 = vmatpush.msra.mxu0 %v109
    %155 = vmatpush.msra.mxu0 %v107
    %156 = vmatpush.msra.mxu0 %v105
    %157 = vmatpush.msra.mxu0 %v103
    %158 = vmatpush.msra.mxu0 %v101
    %159 = vmatpush.msra.mxu0 %v99
    %160 = vmatpush.msra.mxu0 %v97
    %161 = vmatpush.msra.mxu0 %v95
    %162 = vmatpush.msra.mxu0 %v93
    %163 = vmatpush.msra.mxu0 %v91
    %164 = vmatpush.msra.mxu0 %v89
    %165 = vmatpush.msra.mxu0 %v87
    %166 = vmatpush.msra.mxu0 %v85
    %167 = vmatpush.msra.mxu0 %v83
    %168 = vmatpush.msra.mxu0 %v81
    %169 = vmatpush.msra.mxu0 %v79
    %170 = vmatmul.f32.gmra.mxu0 %v69
    %v171 = vpop.f32.mrf.mxu0
    %v172 = vadd.f32 0.0, %v171
    %173 = vmatmul.f32.gmra.mxu0 %v70
    %v174 = vpop.f32.mrf.mxu0
    %v175 = vadd.f32 0.0, %v174
    %176 = vmatmul.f32.gmra.mxu0 %v71
    %v177 = vpop.f32.mrf.mxu0
    %v178 = vadd.f32 0.0, %v177
    %179 = vmatmul.f32.gmra.mxu0 %v72
    %v180 = vpop.f32.mrf.mxu0
    %v181 = vadd.f32 0.0, %v180
    %182 = vmatmul.f32.gmra.mxu0 %v73
    %v183 = vpop.f32.mrf.mxu0
    %v184 = vadd.f32 0.0, %v183
    %185 = vmatmul.f32.gmra.mxu0 %v74
    %v186 = vpop.f32.mrf.mxu0
    %v187 = vadd.f32 0.0, %v186
    %188 = vmatmul.f32.gmra.mxu0 %v75
    %v189 = vpop.f32.mrf.mxu0
    %v190 = vadd.f32 0.0, %v189
    %191 = vmatmul.f32.gmra.mxu0 %v76
    %v192 = vpop.f32.mrf.mxu0
    %v193 = vadd.f32 0.0, %v192
    %194 = vmatmul.f32.gmra.mxu0 %v77
    %v195 = vpop.f32.mrf.mxu0
    %v196 = vadd.f32 0.0, %v195
    %197 = vdwg.mxu0
    %v198 = vmul.f32 %v128, %v128
    %v199 = vmul.f32 %v131, %v131
    %v200 = vmul.f32 %v134, %v134
    %v201 = vmul.f32 %v137, %v137
    %v202 = vmul.f32 %v140, %v140
    %v203 = vmul.f32 %v143, %v143
    %v204 = vmul.f32 %v146, %v146
    %v205 = vmul.f32 %v149, %v149
    %v206 = vmul.f32 %v152, %v152
    %v207 = vadd.f32 %v198, %v201
    %v208 = vadd.f32 %v207, %v204
    %v209 = vadd.f32 %v199, %v202
    %v210 = vadd.f32 %v209, %v205
    %v211 = vadd.f32 %v200, %v203
    %v212 = vadd.f32 %v211, %v206
    %v213 = vadd.f32 %v208, 1e-08
    %v214 = vadd.f32 %v210, 1e-08
    %v215 = vadd.f32 %v212, 1e-08
    %v216 = vrsqrt.pop %v213
    %v217 = vmul.f32 %v216, %v213
    %v218 = vmul.f32 %v217, %v216
    %v219 = vmul.f32 0.5, %v218
    %v220 = vsub.f32 1.5, %v219
    %v221 = vmul.f32 %v216, %v220
    %v222 = vmul.f32 %v213, %v221
    %vm223 = vcmp.eq.f32.partialorder %v213, inf
    %v224 = vsel %vm223, %v213, %v222
    %vm225 = vcmp.eq.f32.partialorder %v213, 0.0
    %v226 = vand.u32 %v213, 2147483648
    %v227 = vsel %vm225, %v226, %v224
    %v228 = vrsqrt.pop %v214
    %v229 = vmul.f32 %v228, %v214
    %v230 = vmul.f32 %v229, %v228
    %v231 = vmul.f32 0.5, %v230
    %v232 = vsub.f32 1.5, %v231
    %v233 = vmul.f32 %v228, %v232
    %v234 = vmul.f32 %v214, %v233
    %vm235 = vcmp.eq.f32.partialorder %v214, inf
    %v236 = vsel %vm235, %v214, %v234
    %vm237 = vcmp.eq.f32.partialorder %v214, 0.0
    %v238 = vand.u32 %v214, 2147483648
    %v239 = vsel %vm237, %v238, %v236
    %v240 = vrsqrt.pop %v215
    %v241 = vmul.f32 %v240, %v215
    %v242 = vmul.f32 %v241, %v240
    %v243 = vmul.f32 0.5, %v242
    %v244 = vsub.f32 1.5, %v243
    %v245 = vmul.f32 %v240, %v244
    %v246 = vmul.f32 %v215, %v245
    %vm247 = vcmp.eq.f32.partialorder %v215, inf
    %v248 = vsel %vm247, %v215, %v246
    %vm249 = vcmp.eq.f32.partialorder %v215, 0.0
    %v250 = vand.u32 %v215, 2147483648
    %v251 = vsel %vm249, %v250, %v248
    %v252 = vld [vmem:[#allocation2] sm:$0xff]
    %v253 = vld [vmem:[#allocation2 + $0x8] sm:$0xff]
    %v254 = vld [vmem:[#allocation2 + $0x10] sm:$0xff]
    %v255 = vld [vmem:[#allocation2 + $0x18] sm:$0xff]
    %v256 = vld [vmem:[#allocation2 + $0x20] sm:$0xff]
    %v257 = vld [vmem:[#allocation2 + $0x28] sm:$0xff]
    %v258 = vld [vmem:[#allocation2 + $0x30] sm:$0xff]
    %v259 = vld [vmem:[#allocation2 + $0x38] sm:$0xff]
    %v260 = vld [vmem:[#allocation2 + $0x40] sm:$0xff]
    %v261 = vld [vmem:[#allocation2 + $0x48] sm:$0xff]
    %v262 = vld [vmem:[#allocation2 + $0x50] sm:$0xff]
    %v263 = vld [vmem:[#allocation2 + $0x58] sm:$0xff]
    %v264 = vld [vmem:[#allocation2 + $0x60] sm:$0xff]
    %v265 = vld [vmem:[#allocation2 + $0x68] sm:$0xff]
    %v266 = vld [vmem:[#allocation2 + $0x70] sm:$0xff]
    %v267 = vld [vmem:[#allocation2 + $0x78] sm:$0xff]
    %v268 = vld [vmem:[#allocation2 + $0x80] sm:$0xff]
    %v269 = vld [vmem:[#allocation2 + $0x88] sm:$0xff]
    %v270 = vld [vmem:[#allocation2 + $0x90] sm:$0xff]
    %v271 = vld [vmem:[#allocation2 + $0x98] sm:$0xff]
    %v272 = vld [vmem:[#allocation2 + $0xa0] sm:$0xff]
    %v273 = vld [vmem:[#allocation2 + $0xa8] sm:$0xff]
    %v274 = vld [vmem:[#allocation2 + $0xb0] sm:$0xff]
    %v275 = vld [vmem:[#allocation2 + $0xb8] sm:$0xff]
    %v276 = vld [vmem:[#allocation2 + $0xc0] sm:$0xff]
    %v277 = vld [vmem:[#allocation2 + $0xc8] sm:$0xff]
    %v278 = vld [vmem:[#allocation2 + $0xd0] sm:$0xff]
    %v279 = vld [vmem:[#allocation2 + $0xd8] sm:$0xff]
    %v280 = vld [vmem:[#allocation2 + $0xe0] sm:$0xff]
    %v281 = vld [vmem:[#allocation2 + $0xe8] sm:$0xff]
    %v282 = vld [vmem:[#allocation2 + $0xf0] sm:$0xff]
    %v283 = vld [vmem:[#allocation2 + $0xf8] sm:$0xff]
    %v284 = vld [vmem:[%s4] sm:$0x1]
    %v286 = vperm.slane %v284, 0
    %288 = vmatpush.msra.mxu0 %v267
    %289 = vmatpush.msra.mxu0 %v266
    %290 = vmatpush.msra.mxu0 %v265
    %291 = vmatpush.msra.mxu0 %v264
    %292 = vmatpush.msra.mxu0 %v263
    %293 = vmatpush.msra.mxu0 %v262
    %294 = vmatpush.msra.mxu0 %v261
    %295 = vmatpush.msra.mxu0 %v260
    %296 = vmatpush.msra.mxu0 %v259
    %297 = vmatpush.msra.mxu0 %v258
    %298 = vmatpush.msra.mxu0 %v257
    %299 = vmatpush.msra.mxu0 %v256
    %300 = vmatpush.msra.mxu0 %v255
    %301 = vmatpush.msra.mxu0 %v254
    %302 = vmatpush.msra.mxu0 %v253
    %303 = vmatpush.msra.mxu0 %v252
    %304 = vmatmul.f32.gmra.mxu0 %v66
    %v305 = vpop.f32.mrf.mxu0
    %v306 = vadd.f32 %v286, %v305
    %307 = vmatmul.f32.gmra.mxu0 %v67
    %v308 = vpop.f32.mrf.mxu0
    %v309 = vadd.f32 %v286, %v308
    %310 = vmatmul.f32.gmra.mxu0 %v68
    %v311 = vpop.f32.mrf.mxu0
    %v312 = vadd.f32 %v286, %v311
    %313 = vdwg.mxu0
    %314 = vmatpush.msra.mxu0 %v283
    %315 = vmatpush.msra.mxu0 %v282
    %316 = vmatpush.msra.mxu0 %v281
    %317 = vmatpush.msra.mxu0 %v280
    %318 = vmatpush.msra.mxu0 %v279
    %319 = vmatpush.msra.mxu0 %v278
    %320 = vmatpush.msra.mxu0 %v277
    %321 = vmatpush.msra.mxu0 %v276
    %322 = vmatpush.msra.mxu0 %v275
    %323 = vmatpush.msra.mxu0 %v274
    %324 = vmatpush.msra.mxu0 %v273
    %325 = vmatpush.msra.mxu0 %v272
    %326 = vmatpush.msra.mxu0 %v271
    %327 = vmatpush.msra.mxu0 %v270
    %328 = vmatpush.msra.mxu0 %v269
    %329 = vmatpush.msra.mxu0 %v268
    %330 = vmatmul.f32.gmra.mxu0 %v227
    %v331 = vpop.f32.mrf.mxu0
    %v332 = vadd.f32 %v306, %v331
    %333 = vmatmul.f32.gmra.mxu0 %v239
    %v334 = vpop.f32.mrf.mxu0
    %v335 = vadd.f32 %v309, %v334
    %336 = vmatmul.f32.gmra.mxu0 %v251
    %v337 = vpop.f32.mrf.mxu0
    %v338 = vadd.f32 %v312, %v337
    %339 = vdwg.mxu0
    %v340 = vxor.u32 %v332, 2147483648
    %v341 = vxor.u32 %v335, 2147483648
    %v342 = vxor.u32 %v338, 2147483648
    %v343 = vmul.f32 %v340, 1.442695
    %v344 = vpow.pop %v343
    %v345 = vmul.f32 %v341, 1.442695
    %v346 = vpow.pop %v345
    %v347 = vmul.f32 %v342, 1.442695
    %v348 = vpow.pop %v347
    %v349 = vadd.f32 %v344, 1.0
    %v350 = vadd.f32 %v346, 1.0
    %v351 = vadd.f32 %v348, 1.0
    %v352 = vrcp.pop %v349
    %v353 = vmul.f32 %v349, %v352
    %v354 = vsub.f32 1.0, %v353
    %v355 = vmul.f32 %v352, %v354
    %v356 = vadd.f32 %v352, %v355
    %vm357 = vweird.f32 %v349
    %vm358 = vweird.f32 %v352
    %vm359 = vmor %vm357, %vm358
    %v360 = vsel %vm359, %v352, %v356
    %v361 = vand.u32 2147483647, %v349
    %vm362 = vcmp.eq.f32.partialorder %v361, 8.507059e+37
    %v363 = vand.u32 %v349, 2147483648
    %v364 = vor.u32 1.1754944e-38, %v363
    %v365 = vsel %vm362, %v364, %v360
    %v366 = vmul.f32 1.0, %v365
    %v367 = vrcp.pop %v350
    %v368 = vmul.f32 %v350, %v367
    %v369 = vsub.f32 1.0, %v368
    %v370 = vmul.f32 %v367, %v369
    %v371 = vadd.f32 %v367, %v370
    %vm372 = vweird.f32 %v350
    %vm373 = vweird.f32 %v367
    %vm374 = vmor %vm372, %vm373
    %v375 = vsel %vm374, %v367, %v371
    %v376 = vand.u32 2147483647, %v350
    %vm377 = vcmp.eq.f32.partialorder %v376, 8.507059e+37
    %v378 = vand.u32 %v350, 2147483648
    %v379 = vor.u32 1.1754944e-38, %v378
    %v380 = vsel %vm377, %v379, %v375
    %v381 = vmul.f32 1.0, %v380
    %v382 = vrcp.pop %v351
    %v383 = vmul.f32 %v351, %v382
    %v384 = vsub.f32 1.0, %v383
    %v385 = vmul.f32 %v382, %v384
    %v386 = vadd.f32 %v382, %v385
    %vm387 = vweird.f32 %v351
    %vm388 = vweird.f32 %v382
    %vm389 = vmor %vm387, %vm388
    %v390 = vsel %vm389, %v382, %v386
    %v391 = vand.u32 2147483647, %v351
    %vm392 = vcmp.eq.f32.partialorder %v391, 8.507059e+37
    %v393 = vand.u32 %v351, 2147483648
    %v394 = vor.u32 1.1754944e-38, %v393
    %v395 = vsel %vm392, %v394, %v390
    %v396 = vmul.f32 1.0, %v395
    %v397 = vmul.f32 %v332, %v366
    %v398 = vmul.f32 %v335, %v381
    %v399 = vmul.f32 %v338, %v396
    %v400 = vld [vmem:[#allocation4] sm:$0xff]
    %v401 = vld [vmem:[#allocation4 + $0x8] sm:$0xff]
    %v402 = vld [vmem:[#allocation4 + $0x10] sm:$0xff]
    %v403 = vld [vmem:[#allocation4 + $0x18] sm:$0xff]
    %v404 = vld [vmem:[#allocation4 + $0x20] sm:$0xff]
    %v405 = vld [vmem:[#allocation4 + $0x28] sm:$0xff]
    %v406 = vld [vmem:[#allocation4 + $0x30] sm:$0xff]
    %v407 = vld [vmem:[#allocation4 + $0x38] sm:$0xff]
    %v408 = vld [vmem:[#allocation4 + $0x40] sm:$0xff]
    %v409 = vld [vmem:[#allocation4 + $0x48] sm:$0xff]
    %v410 = vld [vmem:[#allocation4 + $0x50] sm:$0xff]
    %v411 = vld [vmem:[#allocation4 + $0x58] sm:$0xff]
    %v412 = vld [vmem:[#allocation4 + $0x60] sm:$0xff]
    %v413 = vld [vmem:[#allocation4 + $0x68] sm:$0xff]
    %v414 = vld [vmem:[#allocation4 + $0x70] sm:$0xff]
    %v415 = vld [vmem:[#allocation4 + $0x78] sm:$0xff]
    %v416 = vld [vmem:[#allocation4 + $0x80] sm:$0xff]
    %v417 = vld [vmem:[#allocation4 + $0x88] sm:$0xff]
    %v418 = vld [vmem:[#allocation4 + $0x90] sm:$0xff]
    %v419 = vld [vmem:[#allocation4 + $0x98] sm:$0xff]
    %v420 = vld [vmem:[#allocation4 + $0xa0] sm:$0xff]
    %v421 = vld [vmem:[#allocation4 + $0xa8] sm:$0xff]
    %v422 = vld [vmem:[#allocation4 + $0xb0] sm:$0xff]
    %v423 = vld [vmem:[#allocation4 + $0xb8] sm:$0xff]
    %v424 = vld [vmem:[#allocation4 + $0xc0] sm:$0xff]
    %v425 = vld [vmem:[#allocation4 + $0xc8] sm:$0xff]
    %v426 = vld [vmem:[#allocation4 + $0xd0] sm:$0xff]
    %v427 = vld [vmem:[#allocation4 + $0xd8] sm:$0xff]
    %v428 = vld [vmem:[#allocation4 + $0xe0] sm:$0xff]
    %v429 = vld [vmem:[#allocation4 + $0xe8] sm:$0xff]
    %v430 = vld [vmem:[#allocation4 + $0xf0] sm:$0xff]
    %v431 = vld [vmem:[#allocation4 + $0xf8] sm:$0xff]
    %v432 = vld [vmem:[#allocation4 + $0x100] sm:$0xff]
    %v433 = vld [vmem:[#allocation4 + $0x108] sm:$0xff]
    %v434 = vld [vmem:[#allocation4 + $0x110] sm:$0xff]
    %v435 = vld [vmem:[#allocation4 + $0x118] sm:$0xff]
    %v436 = vld [vmem:[#allocation4 + $0x120] sm:$0xff]
    %v437 = vld [vmem:[#allocation4 + $0x128] sm:$0xff]
    %v438 = vld [vmem:[#allocation4 + $0x130] sm:$0xff]
    %v439 = vld [vmem:[#allocation4 + $0x138] sm:$0xff]
    %v440 = vld [vmem:[#allocation4 + $0x140] sm:$0xff]
    %v441 = vld [vmem:[#allocation4 + $0x148] sm:$0xff]
    %v442 = vld [vmem:[#allocation4 + $0x150] sm:$0xff]
    %v443 = vld [vmem:[#allocation4 + $0x158] sm:$0xff]
    %v444 = vld [vmem:[#allocation4 + $0x160] sm:$0xff]
    %v445 = vld [vmem:[#allocation4 + $0x168] sm:$0xff]
    %v446 = vld [vmem:[#allocation4 + $0x170] sm:$0xff]
    %v447 = vld [vmem:[#allocation4 + $0x178] sm:$0xff]
    %v448 = vld [vmem:[%s6] sm:$0x7]
    %v450 = vperm.slane %v448, 0
    %v451 = vperm.slane %v448, 1
    %v452 = vperm.slane %v448, 2
    %456 = vmatpush.msra.mxu0 %v445
    %457 = vmatpush.msra.mxu0 %v442
    %458 = vmatpush.msra.mxu0 %v439
    %459 = vmatpush.msra.mxu0 %v436
    %460 = vmatpush.msra.mxu0 %v433
    %461 = vmatpush.msra.mxu0 %v430
    %462 = vmatpush.msra.mxu0 %v427
    %463 = vmatpush.msra.mxu0 %v424
    %464 = vmatpush.msra.mxu0 %v421
    %465 = vmatpush.msra.mxu0 %v418
    %466 = vmatpush.msra.mxu0 %v415
    %467 = vmatpush.msra.mxu0 %v412
    %468 = vmatpush.msra.mxu0 %v409
    %469 = vmatpush.msra.mxu0 %v406
    %470 = vmatpush.msra.mxu0 %v403
    %471 = vmatpush.msra.mxu0 %v400
    %472 = vmatmul.f32.gmra.mxu0 %v397
    %v473 = vpop.f32.mrf.mxu0
    %v474 = vadd.f32 %v450, %v473
    %475 = vmatmul.f32.gmra.mxu0 %v398
    %v476 = vpop.f32.mrf.mxu0
    %v477 = vadd.f32 %v450, %v476
    %478 = vmatmul.f32.gmra.mxu0 %v399
    %v479 = vpop.f32.mrf.mxu0
    %v480 = vadd.f32 %v450, %v479
    %481 = vdwg.mxu0
    %482 = vmatpush.msra.mxu0 %v446
    %483 = vmatpush.msra.mxu0 %v443
    %484 = vmatpush.msra.mxu0 %v440
    %485 = vmatpush.msra.mxu0 %v437
    %486 = vmatpush.msra.mxu0 %v434
    %487 = vmatpush.msra.mxu0 %v431
    %488 = vmatpush.msra.mxu0 %v428
    %489 = vmatpush.msra.mxu0 %v425
    %490 = vmatpush.msra.mxu0 %v422
    %491 = vmatpush.msra.mxu0 %v419
    %492 = vmatpush.msra.mxu0 %v416
    %493 = vmatpush.msra.mxu0 %v413
    %494 = vmatpush.msra.mxu0 %v410
    %495 = vmatpush.msra.mxu0 %v407
    %496 = vmatpush.msra.mxu0 %v404
    %497 = vmatpush.msra.mxu0 %v401
    %498 = vmatmul.f32.gmra.mxu0 %v397
    %v499 = vpop.f32.mrf.mxu0
    %v500 = vadd.f32 %v451, %v499
    %501 = vmatmul.f32.gmra.mxu0 %v398
    %v502 = vpop.f32.mrf.mxu0
    %v503 = vadd.f32 %v451, %v502
    %504 = vmatmul.f32.gmra.mxu0 %v399
    %v505 = vpop.f32.mrf.mxu0
    %v506 = vadd.f32 %v451, %v505
    %507 = vdwg.mxu0
    %508 = vmatpush.msra.mxu0 %v447
    %509 = vmatpush.msra.mxu0 %v444
    %510 = vmatpush.msra.mxu0 %v441
    %511 = vmatpush.msra.mxu0 %v438
    %512 = vmatpush.msra.mxu0 %v435
    %513 = vmatpush.msra.mxu0 %v432
    %514 = vmatpush.msra.mxu0 %v429
    %515 = vmatpush.msra.mxu0 %v426
    %516 = vmatpush.msra.mxu0 %v423
    %517 = vmatpush.msra.mxu0 %v420
    %518 = vmatpush.msra.mxu0 %v417
    %519 = vmatpush.msra.mxu0 %v414
    %520 = vmatpush.msra.mxu0 %v411
    %521 = vmatpush.msra.mxu0 %v408
    %522 = vmatpush.msra.mxu0 %v405
    %523 = vmatpush.msra.mxu0 %v402
    %524 = vmatmul.f32.gmra.mxu0 %v397
    %v525 = vpop.f32.mrf.mxu0
    %v526 = vadd.f32 %v452, %v525
    %527 = vmatmul.f32.gmra.mxu0 %v398
    %v528 = vpop.f32.mrf.mxu0
    %v529 = vadd.f32 %v452, %v528
    %530 = vmatmul.f32.gmra.mxu0 %v399
    %v531 = vpop.f32.mrf.mxu0
    %v532 = vadd.f32 %v452, %v531
    %533 = vdwg.mxu0
    %v534 = vmul.f32 %v128, %v172
    %v535 = vmul.f32 %v131, %v175
    %v536 = vmul.f32 %v134, %v178
    %v537 = vmul.f32 %v137, %v181
    %v538 = vmul.f32 %v140, %v184
    %v539 = vmul.f32 %v143, %v187
    %v540 = vmul.f32 %v146, %v190
    %v541 = vmul.f32 %v149, %v193
    %v542 = vmul.f32 %v152, %v196
    %v543 = vadd.f32 %v534, %v537
    %v544 = vadd.f32 %v543, %v540
    %v545 = vadd.f32 %v535, %v538
    %v546 = vadd.f32 %v545, %v541
    %v547 = vadd.f32 %v536, %v539
    %v548 = vadd.f32 %v547, %v542
    %v549 = vadd.f32 %v66, %v474
    %v550 = vadd.f32 %v67, %v477
    %v551 = vadd.f32 %v68, %v480
    %v552 = vmul.f32 %v526, %v544
    %v553 = vmul.f32 %v529, %v546
    %v554 = vmul.f32 %v532, %v548
    %v555 = vadd.f32 %v549, %v552
    %v556 = vadd.f32 %v550, %v553
    %v557 = vadd.f32 %v551, %v554
    %558 = vadd.xlane.f32.xlu0 %v555
    %v559 = vpop.xlane.xlu0 %558
    %560 = vadd.xlane.f32.xlu0 %v556
    %v561 = vpop.xlane.xlu0 %560
    %562 = vadd.xlane.f32.xlu0 %v557
    %v563 = vpop.xlane.xlu0 %562
    %v564 = vrcp.pop 128.0
    %v565 = vmul.f32 128.0, %v564
    %v566 = vsub.f32 1.0, %v565
    %v567 = vmul.f32 %v564, %v566
    %v568 = vadd.f32 %v564, %v567
    %vm569 = vweird.f32 %v564
    %v570 = vsel %vm569, %v564, %v568
    %v571 = vmul.f32 %v559, %v570
    %v572 = vmul.f32 %v561, %v570
    %v573 = vmul.f32 %v563, %v570
    %v574 = vsub.f32 %v555, %v571
    %v575 = vsub.f32 %v556, %v572
    %v576 = vsub.f32 %v557, %v573
    %v577 = vmul.f32 %v574, %v574
    %v578 = vmul.f32 %v575, %v575
    %v579 = vmul.f32 %v576, %v576
    %580 = vadd.xlane.f32.xlu0 %v577
    %v581 = vpop.xlane.xlu0 %580
    %582 = vadd.xlane.f32.xlu0 %v578
    %v583 = vpop.xlane.xlu0 %582
    %584 = vadd.xlane.f32.xlu0 %v579
    %v585 = vpop.xlane.xlu0 %584
    %v586 = vmul.f32 %v581, %v570
    %v587 = vmul.f32 %v583, %v570
    %v588 = vmul.f32 %v585, %v570
    %v589 = vadd.f32 %v586, 1e-05
    %v590 = vadd.f32 %v587, 1e-05
    %v591 = vadd.f32 %v588, 1e-05
    %v592 = vrsqrt.pop %v589
    %v593 = vmul.f32 %v592, %v589
    %v594 = vmul.f32 %v593, %v592
    %v595 = vmul.f32 0.5, %v594
    %v596 = vsub.f32 1.5, %v595
    %v597 = vmul.f32 %v592, %v596
    %vm598 = vweird.f32 %v589
    %vm599 = vweird.f32 %v592
    %vm600 = vmor %vm598, %vm599
    %v601 = vsel %vm600, %v592, %v597
    %v602 = vrsqrt.pop %v590
    %v603 = vmul.f32 %v602, %v590
    %v604 = vmul.f32 %v603, %v602
    %v605 = vmul.f32 0.5, %v604
    %v606 = vsub.f32 1.5, %v605
    %v607 = vmul.f32 %v602, %v606
    %vm608 = vweird.f32 %v590
    %vm609 = vweird.f32 %v602
    %vm610 = vmor %vm608, %vm609
    %v611 = vsel %vm610, %v602, %v607
    %v612 = vrsqrt.pop %v591
    %v613 = vmul.f32 %v612, %v591
    %v614 = vmul.f32 %v613, %v612
    %v615 = vmul.f32 0.5, %v614
    %v616 = vsub.f32 1.5, %v615
    %v617 = vmul.f32 %v612, %v616
    %vm618 = vweird.f32 %v591
    %vm619 = vweird.f32 %v612
    %vm620 = vmor %vm618, %vm619
    %v621 = vsel %vm620, %v612, %v617
    %v622 = vmul.f32 %v574, %v601
    %v623 = vmul.f32 %v575, %v611
    %v624 = vmul.f32 %v576, %v621
    %v625 = vld [vmem:[%s7] sm:$0x1]
    %v627 = vperm.slane %v625, 0
    %v629 = vmul.f32 %v622, %v627
    %v630 = vmul.f32 %v623, %v627
    %v631 = vmul.f32 %v624, %v627
    %v632 = vld [vmem:[%s8] sm:$0x1]
    %v634 = vperm.slane %v632, 0
    %v636 = vadd.f32 %v629, %v634
    %v637 = vadd.f32 %v630, %v634
    %v638 = vadd.f32 %v631, %v634
    %639 = vst [vmem:[%s9] sm:$0xff] %v636
    %640 = vst [vmem:[%s9 + $0x8] sm:$0xff] %v637
    %641 = vst [vmem:[%s9 + $0x10] sm:$0xff] %v638
    %v642 = vmul.f32 %v500, %v172
    %v643 = vmul.f32 %v503, %v175
    %v644 = vmul.f32 %v506, %v178
    %v645 = vmul.f32 %v500, %v181
    %v646 = vmul.f32 %v503, %v184
    %v647 = vmul.f32 %v506, %v187
    %v648 = vmul.f32 %v500, %v190
    %v649 = vmul.f32 %v503, %v193
    %v650 = vmul.f32 %v506, %v196
    %v651 = vadd.f32 %v69, %v642
    %v652 = vadd.f32 %v70, %v643
    %v653 = vadd.f32 %v71, %v644
    %v654 = vadd.f32 %v72, %v645
    %v655 = vadd.f32 %v73, %v646
    %v656 = vadd.f32 %v74, %v647
    %v657 = vadd.f32 %v75, %v648
    %v658 = vadd.f32 %v76, %v649
    %v659 = vadd.f32 %v77, %v650
    %v660 = vmul.f32 %v651, %v651
    %v661 = vmul.f32 %v652, %v652
    %v662 = vmul.f32 %v653, %v653
    %v663 = vmul.f32 %v654, %v654
    %v664 = vmul.f32 %v655, %v655
    %v665 = vmul.f32 %v656, %v656
    %v666 = vmul.f32 %v657, %v657
    %v667 = vmul.f32 %v658, %v658
    %v668 = vmul.f32 %v659, %v659
    %v669 = vadd.f32 %v660, %v663
    %v670 = vadd.f32 %v669, %v666
    %v671 = vadd.f32 %v661, %v664
    %v672 = vadd.f32 %v671, %v667
    %v673 = vadd.f32 %v662, %v665
    %v674 = vadd.f32 %v673, %v668
    %v675 = vadd.f32 %v670, 1e-08
    %v676 = vadd.f32 %v672, 1e-08
    %v677 = vadd.f32 %v674, 1e-08
    %v678 = vrsqrt.pop %v675
    %v679 = vmul.f32 %v678, %v675
    %v680 = vmul.f32 %v679, %v678
    %v681 = vmul.f32 0.5, %v680
    %v682 = vsub.f32 1.5, %v681
    %v683 = vmul.f32 %v678, %v682
    %vm684 = vweird.f32 %v675
    %vm685 = vweird.f32 %v678
    %vm686 = vmor %vm684, %vm685
    %v687 = vsel %vm686, %v678, %v683
    %v688 = vrsqrt.pop %v676
    %v689 = vmul.f32 %v688, %v676
    %v690 = vmul.f32 %v689, %v688
    %v691 = vmul.f32 0.5, %v690
    %v692 = vsub.f32 1.5, %v691
    %v693 = vmul.f32 %v688, %v692
    %vm694 = vweird.f32 %v676
    %vm695 = vweird.f32 %v688
    %vm696 = vmor %vm694, %vm695
    %v697 = vsel %vm696, %v688, %v693
    %v698 = vrsqrt.pop %v677
    %v699 = vmul.f32 %v698, %v677
    %v700 = vmul.f32 %v699, %v698
    %v701 = vmul.f32 0.5, %v700
    %v702 = vsub.f32 1.5, %v701
    %v703 = vmul.f32 %v698, %v702
    %vm704 = vweird.f32 %v677
    %vm705 = vweird.f32 %v698
    %vm706 = vmor %vm704, %vm705
    %v707 = vsel %vm706, %v698, %v703
    %v708 = vmul.f32 %v651, %v687
    %v709 = vmul.f32 %v652, %v697
    %v710 = vmul.f32 %v653, %v707
    %v711 = vmul.f32 %v654, %v687
    %v712 = vmul.f32 %v655, %v697
    %v713 = vmul.f32 %v656, %v707
    %v714 = vmul.f32 %v657, %v687
    %v715 = vmul.f32 %v658, %v697
    %v716 = vmul.f32 %v659, %v707
    %717 = vst [vmem:[%s10] sm:$0xff] %v708
    %718 = vst [vmem:[%s10 + $0x8] sm:$0xff] %v709
    %719 = vst [vmem:[%s10 + $0x10] sm:$0xff] %v710
    %720 = vst [vmem:[%s10 + $0x18] sm:$0xff] %v711
    %721 = vst [vmem:[%s10 + $0x20] sm:$0xff] %v712
    %722 = vst [vmem:[%s10 + $0x28] sm:$0xff] %v713
    %723 = vst [vmem:[%s10 + $0x30] sm:$0xff] %v714
    %724 = vst [vmem:[%s10 + $0x38] sm:$0xff] %v715
    %725 = vst [vmem:[%s10 + $0x40] sm:$0xff] %v716
    // Predicated region
    $region46: #{painn_forward.8} parent=1 // pred_check
      _
    $region47: #{painn_forward.8} parent=1 // pred_check_branch
      %727 = sbr.rel (0) target = $region49
    $region48: #{painn_forward.8} parent=1 // pred_region
      _
    $region49: #{painn_forward.8} parent=1 // pred_fallthru
      _
    // Predicated region
    $region50: #{painn_forward.8} parent=1 // pred_check
      _
    $region51: #{painn_forward.8} parent=1 // pred_check_branch
      %729 = sbr.rel (0) target = $region53
    $region52: #{painn_forward.8} parent=1 // pred_region
      _
    $region53: #{painn_forward.8} parent=1 // pred_fallthru
      _
    // Predicated region
    $region54: #{painn_forward.8} parent=1 // pred_check
      _
    $region55: #{painn_forward.8} parent=1 // pred_check_branch
      %731 = sbr.rel (0) target = $region57
    $region56: #{painn_forward.8} parent=1 // pred_region
      _
    $region57: #{painn_forward.8} parent=1 // pred_fallthru
      _
    // Predicated region
    $region58: #{painn_forward.8} parent=1 // pred_check
      _
    $region59: #{painn_forward.8} parent=1 // pred_check_branch
      %733 = sbr.rel (0) target = $region61
    $region60: #{painn_forward.8} parent=1 // pred_region
      _
    $region61: #{painn_forward.8} parent=1 // pred_fallthru
      _
    %734 = vsyncpa [#allocation3], 1
    %735 = vsyncpa [#allocation5], 1

// kernel: painn_forward.7
$region0: #{painn_forward.7}
  #allocation0 [shape = 'u32[]', space=smem, size = 0x4, offset = 0x4, fixed_abs, tag = 'smem constant byte address 0x4 - core index']
  #allocation1 [shape = 'u32[72,128]{1,0:T(1,128)}', space=vmem, size = 0x9000, scoped, tag = 'internal scratch']
  %s0 = inlined_call_operand.vmem [shape: f32[24,5], index: 0, kind: input, shape index: {}]
  %s1 = inlined_call_operand.vmem [shape: f32[5,24], index: 1, kind: input, shape index: {}]
  %s2 = inlined_call_operand.vmem [shape: f32[24,128], index: 2, kind: input, shape index: {}]
  %s3 = inlined_call_operand.vmem [shape: f32[3,24,128], index: 3, kind: input, shape index: {}, may-alias: {3,5}]
  %s4 = inlined_call_operand.vmem [shape: f32[24,384], index: 4, kind: input, shape index: {}]
  %s5 = inlined_call_operand.vmem [shape: f32[3,24,128], index: 5, kind: input, shape index: {}, may-alias: {3,5}]
  %s6 = inlined_call_operand.vmem [shape: f32[1,16], index: 6, kind: input, shape index: {}]
  %s7 = inlined_call_operand.vmem [shape: f32[16,384], index: 7, kind: input, shape index: {}]
  %s8 = inlined_call_operand.vmem [shape: f32[1,384], index: 8, kind: input, shape index: {}]
  %s9 = inlined_call_operand.vmem [shape: f32[1,384], index: 9, kind: input, shape index: {}]
  %s10 = inlined_call_operand.vmem [shape: f32[24,128], index: 10, kind: output, shape index: {0}]
  %s11 = inlined_call_operand.vmem [shape: f32[3,24,128], index: 11, kind: output, shape index: {1}]
  %12 = xla_tuple %s10, %s11
  %s13 = sld [smem:[#allocation0]]
  $region157: #{painn_forward.7} parent=0
    _
  %s15 = ssub.s32 1, %s13
  %s16 = scalar_select 0, %s15, %s13
  $region1: #{painn_forward.7} parent=0
    #allocation2 [shape = 'u8[24576]{0}', space=vmem, size = 0x6000, scoped, tag = 'input window, operand 3']
    #allocation3 [shape = 'u8[24576]{0}', space=vmem, size = 0x6000, scoped, tag = 'output window, operand 1']
    loop: start=0, step=1, limit=5
    $region2: #{painn_forward.7} parent=1 // loop_pre_header
      _
    $region3: #{painn_forward.7} parent=1 // loop_header
      %s18 = sphi 0, %s22
      %p19 = scmp.ge.s32.totalorder %s18, 5
      %s25 = sphi 0, %s37
      %s26 = sphi 0, %s33
      %s27 = sphi 0, %s25
      %s28 = sphi 0, %s26
      %s29 = sphi 0, %s27
      %s30 = sphi 0, %s28
      %s40 = sphi 0, %s42
      %s43 = sphi 0, %s40
      %s44 = sphi 0, %s43
      %s60 = sphi 0, %s44
      %s66 = sphi 0, %s68
      %s69 = sphi 0, %s66
      %s70 = sphi 0, %s69
      %s86 = sphi 0, %s70
      %s92 = sphi 0, %s94
      %s95 = sphi 0, %s92
      %s96 = sphi 0, %s95
      %s112 = sphi 0, %s96
      %s118 = sphi 0, %s120
      %s121 = sphi 0, %s118
      %s122 = sphi 0, %s121
      %s138 = sphi 0, %s122
      %s142 = sphi 0, %s142
      %s144 = sphi 0, %s142
      %s145 = sphi 0, %s144
      %s159 = sphi 0, %s145
      %s163 = sphi 0, %s163
      %s165 = sphi 0, %s163
      %s166 = sphi 0, %s165
      %s180 = sphi 0, %s166
      %s184 = sphi 0, %s184
      %s186 = sphi 0, %s184
      %s187 = sphi 0, %s186
      %s201 = sphi 0, %s187
      %s205 = sphi 0, %s205
      %s207 = sphi 0, %s205
      %s208 = sphi 0, %s207
      %s222 = sphi 0, %s208
      %s226 = sphi 0, %s226
      %s228 = sphi 0, %s226
      %s229 = sphi 0, %s228
      %s243 = sphi 0, %s229
      %s247 = sphi 0, %s247
      %s249 = sphi 0, %s247
      %s250 = sphi 0, %s249
      %s264 = sphi 0, %s250
      %s270 = sphi 0, %s272
      %s273 = sphi 0, %s270
      %s274 = sphi 0, %s273
      %s290 = sphi 0, %s274
      %s296 = sphi 0, %s298
      %s299 = sphi 0, %s296
      %s300 = sphi 0, %s299
      %s316 = sphi 0, %s300
    $region4: #{painn_forward.7} parent=1 // loop_header_branch
      %21 = sbr.rel (%p19) target = $region8
    $region5: #{painn_forward.7} parent=1 // loop_body
      %s23 = ssub.s32 %s18, 1
      %s24 = ssub.s32 %s18, 2
      %s31 = sadd.s32 1, %s26
      %p32 = scmp.ge.s32.totalorder %s31, 1
      %s33 = scalar_select %p32, 0, %s31
      %s34 = sadd.s32 1, %s25
      %s35 = scalar_select %p32, %s34, %s25
      %p36 = scmp.ge.s32.totalorder %s35, 3
      %s37 = scalar_select %p36, 0, %s35
      %s38 = ssub.s32 %s25, %s37
      %p39 = scmp.eq.s32.totalorder %s38, 0
      %s41 = sadd.s32 %s40, 1
      %s42 = scalar_select %p39, %s40, %s41
      %p45 = pneg %p39
      %p46 = scmp.eq.s32.totalorder %s18, 2
      %p47 = por %p45, %p46
      %p48 = scmp.ne.s32.totalorder %s40, %s43
      %p49 = scmp.eq.s32.totalorder %s18, 0
      %p50 = por %p48, %p49
      %p51 = scmp.ne.s32.totalorder %s40, %s43
      %p52 = scmp.eq.s32.totalorder %s23, 2
      %p53 = por %p51, %p52
      %p54 = scmp.ne.s32.totalorder %s43, %s44
      %p55 = scmp.eq.s32.totalorder %s23, 0
      %p56 = por %p54, %p55
      %p57 = scmp.ne.s32.totalorder %s43, %s44
      %p58 = scmp.eq.s32.totalorder %s24, 2
      %p59 = por %p57, %p58
      %p61 = scmp.ne.s32.totalorder %s44, %s60
      %p62 = scmp.eq.s32.totalorder %s24, 0
      %p63 = por %p61, %p62
      %s64 = ssub.s32 %s26, %s33
      %p65 = scmp.eq.s32.totalorder %s64, 0
      %s67 = sadd.s32 %s66, 1
      %s68 = scalar_select %p65, %s66, %s67
      %p71 = pneg %p65
      %p72 = scmp.eq.s32.totalorder %s18, 2
      %p73 = por %p71, %p72
      %p74 = scmp.ne.s32.totalorder %s66, %s69
      %p75 = scmp.eq.s32.totalorder %s18, 0
      %p76 = por %p74, %p75
      %p77 = scmp.ne.s32.totalorder %s66, %s69
      %p78 = scmp.eq.s32.totalorder %s23, 2
      %p79 = por %p77, %p78
      %p80 = scmp.ne.s32.totalorder %s69, %s70
      %p81 = scmp.eq.s32.totalorder %s23, 0
      %p82 = por %p80, %p81
      %p83 = scmp.ne.s32.totalorder %s69, %s70
      %p84 = scmp.eq.s32.totalorder %s24, 2
      %p85 = por %p83, %p84
      %p87 = scmp.ne.s32.totalorder %s70, %s86
      %p88 = scmp.eq.s32.totalorder %s24, 0
      %p89 = por %p87, %p88
      %s90 = ssub.s32 %s25, %s37
      %p91 = scmp.eq.s32.totalorder %s90, 0
      %s93 = sadd.s32 %s92, 1
      %s94 = scalar_select %p91, %s92, %s93
      %p97 = pneg %p91
      %p98 = scmp.eq.s32.totalorder %s18, 2
      %p99 = por %p97, %p98
      %p100 = scmp.ne.s32.totalorder %s92, %s95
      %p101 = scmp.eq.s32.totalorder %s18, 0
      %p102 = por %p100, %p101
      %p103 = scmp.ne.s32.totalorder %s92, %s95
      %p104 = scmp.eq.s32.totalorder %s23, 2
      %p105 = por %p103, %p104
      %p106 = scmp.ne.s32.totalorder %s95, %s96
      %p107 = scmp.eq.s32.totalorder %s23, 0
      %p108 = por %p106, %p107
      %p109 = scmp.ne.s32.totalorder %s95, %s96
      %p110 = scmp.eq.s32.totalorder %s24, 2
      %p111 = por %p109, %p110
      %p113 = scmp.ne.s32.totalorder %s96, %s112
      %p114 = scmp.eq.s32.totalorder %s24, 0
      %p115 = por %p113, %p114
      %s116 = ssub.s32 %s25, %s37
      %p117 = scmp.eq.s32.totalorder %s116, 0
      %s119 = sadd.s32 %s118, 1
      %s120 = scalar_select %p117, %s118, %s119
      %p123 = pneg %p117
      %p124 = scmp.eq.s32.totalorder %s18, 2
      %p125 = por %p123, %p124
      %p126 = scmp.ne.s32.totalorder %s118, %s121
      %p127 = scmp.eq.s32.totalorder %s18, 0
      %p128 = por %p126, %p127
      %p129 = scmp.ne.s32.totalorder %s118, %s121
      %p130 = scmp.eq.s32.totalorder %s23, 2
      %p131 = por %p129, %p130
      %p132 = scmp.ne.s32.totalorder %s121, %s122
      %p133 = scmp.eq.s32.totalorder %s23, 0
      %p134 = por %p132, %p133
      %p135 = scmp.ne.s32.totalorder %s121, %s122
      %p136 = scmp.eq.s32.totalorder %s24, 2
      %p137 = por %p135, %p136
      %p139 = scmp.ne.s32.totalorder %s122, %s138
      %p140 = scmp.eq.s32.totalorder %s24, 0
      %p141 = por %p139, %p140
      %s143 = sadd.s32 %s142, 1
      %p146 = scmp.eq.s32.totalorder %s18, 2
      %p147 = scmp.ne.s32.totalorder %s142, %s144
      %p148 = scmp.eq.s32.totalorder %s18, 0
      %p149 = por %p147, %p148
      %p150 = scmp.ne.s32.totalorder %s142, %s144
      %p151 = scmp.eq.s32.totalorder %s23, 2
      %p152 = por %p150, %p151
      %p153 = scmp.ne.s32.totalorder %s144, %s145
      %p154 = scmp.eq.s32.totalorder %s23, 0
      %p155 = por %p153, %p154
      %p156 = scmp.ne.s32.totalorder %s144, %s145
      %p157 = scmp.eq.s32.totalorder %s24, 2
      %p158 = por %p156, %p157
      %p160 = scmp.ne.s32.totalorder %s145, %s159
      %p161 = scmp.eq.s32.totalorder %s24, 0
      %p162 = por %p160, %p161
      %s164 = sadd.s32 %s163, 1
      %p167 = scmp.eq.s32.totalorder %s18, 2
      %p168 = scmp.ne.s32.totalorder %s163, %s165
      %p169 = scmp.eq.s32.totalorder %s18, 0
      %p170 = por %p168, %p169
      %p171 = scmp.ne.s32.totalorder %s163, %s165
      %p172 = scmp.eq.s32.totalorder %s23, 2
      %p173 = por %p171, %p172
      %p174 = scmp.ne.s32.totalorder %s165, %s166
      %p175 = scmp.eq.s32.totalorder %s23, 0
      %p176 = por %p174, %p175
      %p177 = scmp.ne.s32.totalorder %s165, %s166
      %p178 = scmp.eq.s32.totalorder %s24, 2
      %p179 = por %p177, %p178
      %p181 = scmp.ne.s32.totalorder %s166, %s180
      %p182 = scmp.eq.s32.totalorder %s24, 0
      %p183 = por %p181, %p182
      %s185 = sadd.s32 %s184, 1
      %p188 = scmp.eq.s32.totalorder %s18, 2
      %p189 = scmp.ne.s32.totalorder %s184, %s186
      %p190 = scmp.eq.s32.totalorder %s18, 0
      %p191 = por %p189, %p190
      %p192 = scmp.ne.s32.totalorder %s184, %s186
      %p193 = scmp.eq.s32.totalorder %s23, 2
      %p194 = por %p192, %p193
      %p195 = scmp.ne.s32.totalorder %s186, %s187
      %p196 = scmp.eq.s32.totalorder %s23, 0
      %p197 = por %p195, %p196
      %p198 = scmp.ne.s32.totalorder %s186, %s187
      %p199 = scmp.eq.s32.totalorder %s24, 2
      %p200 = por %p198, %p199
      %p202 = scmp.ne.s32.totalorder %s187, %s201
      %p203 = scmp.eq.s32.totalorder %s24, 0
      %p204 = por %p202, %p203
      %s206 = sadd.s32 %s205, 1
      %p209 = scmp.eq.s32.totalorder %s18, 2
      %p210 = scmp.ne.s32.totalorder %s205, %s207
      %p211 = scmp.eq.s32.totalorder %s18, 0
      %p212 = por %p210, %p211
      %p213 = scmp.ne.s32.totalorder %s205, %s207
      %p214 = scmp.eq.s32.totalorder %s23, 2
      %p215 = por %p213, %p214
      %p216 = scmp.ne.s32.totalorder %s207, %s208
      %p217 = scmp.eq.s32.totalorder %s23, 0
      %p218 = por %p216, %p217
      %p219 = scmp.ne.s32.totalorder %s207, %s208
      %p220 = scmp.eq.s32.totalorder %s24, 2
      %p221 = por %p219, %p220
      %p223 = scmp.ne.s32.totalorder %s208, %s222
      %p224 = scmp.eq.s32.totalorder %s24, 0
      %p225 = por %p223, %p224
      %s227 = sadd.s32 %s226, 1
      %p230 = scmp.eq.s32.totalorder %s18, 2
      %p231 = scmp.ne.s32.totalorder %s226, %s228
      %p232 = scmp.eq.s32.totalorder %s18, 0
      %p233 = por %p231, %p232
      %p234 = scmp.ne.s32.totalorder %s226, %s228
      %p235 = scmp.eq.s32.totalorder %s23, 2
      %p236 = por %p234, %p235
      %p237 = scmp.ne.s32.totalorder %s228, %s229
      %p238 = scmp.eq.s32.totalorder %s23, 0
      %p239 = por %p237, %p238
      %p240 = scmp.ne.s32.totalorder %s228, %s229
      %p241 = scmp.eq.s32.totalorder %s24, 2
      %p242 = por %p240, %p241
      %p244 = scmp.ne.s32.totalorder %s229, %s243
      %p245 = scmp.eq.s32.totalorder %s24, 0
      %p246 = por %p244, %p245
      %s248 = sadd.s32 %s247, 1
      %p251 = scmp.eq.s32.totalorder %s18, 2
      %p252 = scmp.ne.s32.totalorder %s247, %s249
      %p253 = scmp.eq.s32.totalorder %s18, 0
      %p254 = por %p252, %p253
      %p255 = scmp.ne.s32.totalorder %s247, %s249
      %p256 = scmp.eq.s32.totalorder %s23, 2
      %p257 = por %p255, %p256
      %p258 = scmp.ne.s32.totalorder %s249, %s250
      %p259 = scmp.eq.s32.totalorder %s23, 0
      %p260 = por %p258, %p259
      %p261 = scmp.ne.s32.totalorder %s249, %s250
      %p262 = scmp.eq.s32.totalorder %s24, 2
      %p263 = por %p261, %p262
      %p265 = scmp.ne.s32.totalorder %s250, %s264
      %p266 = scmp.eq.s32.totalorder %s24, 0
      %p267 = por %p265, %p266
      %s268 = ssub.s32 %s25, %s37
      %p269 = scmp.eq.s32.totalorder %s268, 0
      %s271 = sadd.s32 %s270, 1
      %s272 = scalar_select %p269, %s270, %s271
      %p275 = pneg %p269
      %p276 = scmp.eq.s32.totalorder %s18, 2
      %p277 = por %p275, %p276
      %p278 = scmp.ne.s32.totalorder %s270, %s273
      %p279 = scmp.eq.s32.totalorder %s18, 0
      %p280 = por %p278, %p279
      %p281 = scmp.ne.s32.totalorder %s270, %s273
      %p282 = scmp.eq.s32.totalorder %s23, 2
      %p283 = por %p281, %p282
      %p284 = scmp.ne.s32.totalorder %s273, %s274
      %p285 = scmp.eq.s32.totalorder %s23, 0
      %p286 = por %p284, %p285
      %p287 = scmp.ne.s32.totalorder %s273, %s274
      %p288 = scmp.eq.s32.totalorder %s24, 2
      %p289 = por %p287, %p288
      %p291 = scmp.ne.s32.totalorder %s274, %s290
      %p292 = scmp.eq.s32.totalorder %s24, 0
      %p293 = por %p291, %p292
      %s294 = ssub.s32 %s25, %s37
      %p295 = scmp.eq.s32.totalorder %s294, 0
      %s297 = sadd.s32 %s296, 1
      %s298 = scalar_select %p295, %s296, %s297
      %p301 = pneg %p295
      %p302 = scmp.eq.s32.totalorder %s18, 2
      %p303 = por %p301, %p302
      %p304 = scmp.ne.s32.totalorder %s296, %s299
      %p305 = scmp.eq.s32.totalorder %s18, 0
      %p306 = por %p304, %p305
      %p307 = scmp.ne.s32.totalorder %s296, %s299
      %p308 = scmp.eq.s32.totalorder %s23, 2
      %p309 = por %p307, %p308
      %p310 = scmp.ne.s32.totalorder %s299, %s300
      %p311 = scmp.eq.s32.totalorder %s23, 0
      %p312 = por %p310, %p311
      %p313 = scmp.ne.s32.totalorder %s299, %s300
      %p314 = scmp.eq.s32.totalorder %s24, 2
      %p315 = por %p313, %p314
      %p317 = scmp.ne.s32.totalorder %s300, %s316
      %p318 = scmp.eq.s32.totalorder %s24, 0
      %p319 = por %p317, %p318
      %p320 = scmp.le.s32.totalorder 1, %s18
      %p321 = scmp.lt.s32.totalorder %s18, 4
      %p322 = pnand %p320, %p321
      %p323 = pneg %p322
      // Predicated region
      $region9: #{painn_forward.7} parent=5 // pred_check
        _
      $region10: #{painn_forward.7} parent=5 // pred_check_branch
        %325 = sbr.rel (%p322) target = $region12
      $region11: #{painn_forward.7} parent=5 // pred_region
        %s326 = ssub.s32 %s18, 1
        // Predicated region
        $region13: #{painn_forward.7} parent=11 // pred_check
          %p327 = pneg %p82
        $region14: #{painn_forward.7} parent=11 // pred_check_branch
          %329 = sbr.rel (%p327) target = $region16
        $region15: #{painn_forward.7} parent=11 // pred_region
          %p330 = scmp.lt.s32.totalorder %s28, 0
          %s331 = scalar_select %p330, %s28, 0
          %s332 = smul.addr %s331, 8
          %s333 = scalar_lea.vmem %s1, %s332
        $region16: #{painn_forward.7} parent=11 // pred_fallthru
          _
        // Predicated region
        $region17: #{painn_forward.7} parent=11 // pred_check
          %p334 = pneg %p155
        $region18: #{painn_forward.7} parent=11 // pred_check_branch
          %336 = sbr.rel (%p334) target = $region20
        $region19: #{painn_forward.7} parent=11 // pred_region
          _
        $region20: #{painn_forward.7} parent=11 // pred_fallthru
          _
        // Predicated region
        $region21: #{painn_forward.7} parent=11 // pred_check
          %p337 = pneg %p176
        $region22: #{painn_forward.7} parent=11 // pred_check_branch
          %339 = sbr.rel (%p337) target = $region24
        $region23: #{painn_forward.7} parent=11 // pred_region
          _
        $region24: #{painn_forward.7} parent=11 // pred_fallthru
          _
        // Predicated region
        $region25: #{painn_forward.7} parent=11 // pred_check
          %p340 = pneg %p197
        $region26: #{painn_forward.7} parent=11 // pred_check_branch
          %342 = sbr.rel (%p340) target = $region28
        $region27: #{painn_forward.7} parent=11 // pred_region
          _
        $region28: #{painn_forward.7} parent=11 // pred_fallthru
          _
        // Predicated region
        $region29: #{painn_forward.7} parent=11 // pred_check
          %p343 = pneg %p218
        $region30: #{painn_forward.7} parent=11 // pred_check_branch
          %345 = sbr.rel (%p343) target = $region32
        $region31: #{painn_forward.7} parent=11 // pred_region
          _
        $region32: #{painn_forward.7} parent=11 // pred_fallthru
          _
        // Predicated region
        $region33: #{painn_forward.7} parent=11 // pred_check
          %p346 = pneg %p239
        $region34: #{painn_forward.7} parent=11 // pred_check_branch
          %348 = sbr.rel (%p346) target = $region36
        $region35: #{painn_forward.7} parent=11 // pred_region
          _
        $region36: #{painn_forward.7} parent=11 // pred_fallthru
          _
        // Predicated region
        $region37: #{painn_forward.7} parent=11 // pred_check
          %p349 = pneg %p260
        $region38: #{painn_forward.7} parent=11 // pred_check_branch
          %351 = sbr.rel (%p349) target = $region40
        $region39: #{painn_forward.7} parent=11 // pred_region
          _
        $region40: #{painn_forward.7} parent=11 // pred_fallthru
          _
      $region12: #{painn_forward.7} parent=5 // pred_fallthru
        _
      %p352 = scmp.lt.s32.totalorder %s18, 3
      // Predicated region
      $region41: #{painn_forward.7} parent=5 // pred_check
        %p353 = pneg %p352
      $region42: #{painn_forward.7} parent=5 // pred_check_branch
        %355 = sbr.rel (%p353) target = $region44
      $region43: #{painn_forward.7} parent=5 // pred_region
        // Predicated region
        $region45: #{painn_forward.7} parent=43 // pred_check
          %p356 = pneg %p50
        $region46: #{painn_forward.7} parent=43 // pred_check_branch
          %358 = sbr.rel (%p356) target = $region48
        $region47: #{painn_forward.7} parent=43 // pred_region
          %p359 = scmp.lt.s32.totalorder %s25, 2
          %s360 = scalar_select %p359, %s25, 2
          %s361 = smul.addr %s360, 8
          %s362 = scalar_lea.vmem %s0, %s361
        $region48: #{painn_forward.7} parent=43 // pred_fallthru
          _
        // Predicated region
        $region49: #{painn_forward.7} parent=43 // pred_check
          %p363 = pneg %p102
        $region50: #{painn_forward.7} parent=43 // pred_check_branch
          %365 = sbr.rel (%p363) target = $region52
        $region51: #{painn_forward.7} parent=43 // pred_region
          %p366 = scmp.lt.s32.totalorder %s25, 2
          %s367 = scalar_select %p366, %s25, 2
          %s368 = smul.addr %s367, 8
          %s369 = scalar_lea.vmem %s2, %s368
        $region52: #{painn_forward.7} parent=43 // pred_fallthru
          _
        // Predicated region
        $region53: #{painn_forward.7} parent=43 // pred_check
          %p370 = pneg %p128
        $region54: #{painn_forward.7} parent=43 // pred_check_branch
          %372 = sbr.rel (%p370) target = $region56
        $region55: #{painn_forward.7} parent=43 // pred_region
          %s373 = sand.u32 %s118, 1
          %s374 = sand.u32 %s118, 1
          %s375 = smul.addr %s374, 24
          %s376 = scalar_lea.vmem [#allocation2], %s375
          %s377 = smul.addr %s25, 8
          %s378 = scalar_lea.vmem %s3, %s377
          // Predicated region
          $region57: #{painn_forward.7} parent=55 // pred_check
            _
          $region58: #{painn_forward.7} parent=55 // pred_check_branch
            %380 = sbr.rel (0) target = $region60
          $region59: #{painn_forward.7} parent=55 // pred_region
            // Predicated region
            $region61: #{painn_forward.7} parent=59 // pred_check
              _
            $region62: #{painn_forward.7} parent=59 // pred_check_branch
              %382 = sbr.rel (0) target = $region64
            $region63: #{painn_forward.7} parent=59 // pred_region
              // Predicated region
              $region76: #{painn_forward.7} parent=63 // pred_check
                _
              $region77: #{painn_forward.7} parent=63 // pred_check_branch
                %402 = sbr.rel (0) target = $region79
              $region78: #{painn_forward.7} parent=63 // pred_region
                loop: start=0, step=1, limit=1
                $region80: #{painn_forward.7} parent=78 // loop_pre_header
                  _
                $region81: #{painn_forward.7} parent=78 // loop_header
                  %s404 = sphi 0, %s408
                  %p405 = scmp.ge.s32.totalorder %s404, 1
                  %s409 = sphi %s378, %s378
                  %s410 = sphi %s376, %s376
                $region82: #{painn_forward.7} parent=78 // loop_header_branch
                  %407 = sbr.rel (%p405) target = $region86
                $region83: #{painn_forward.7} parent=78 // loop_body
                  %v411 = vld [vmem:[%s409] sm:$0xff]
                  %412 = vst [vmem:[%s410] sm:$0xff] %v411
                  %v413 = vld [vmem:[%s409 + $0x18] sm:$0xff]
                  %414 = vst [vmem:[%s410 + $0x8] sm:$0xff] %v413
                  %v415 = vld [vmem:[%s409 + $0x30] sm:$0xff]
                  %416 = vst [vmem:[%s410 + $0x10] sm:$0xff] %v415
                $region84: #{painn_forward.7} parent=78 // loop_footer
                  %s408 = sadd.s32 1, %s404
                $region85: #{painn_forward.7} parent=78 // loop_footer_branch
                  %403 = sbr.rel target = $region81
                $region86: #{painn_forward.7} parent=78 // loop_exit
                  _
              $region79: #{painn_forward.7} parent=63 // pred_fallthru
                _
              // Predicated region
              $region87: #{painn_forward.7} parent=63 // pred_check
                _
              $region88: #{painn_forward.7} parent=63 // pred_check_branch
                %418 = sbr.rel target = $region90
              $region89: #{painn_forward.7} parent=63 // pred_region
                _
              $region90: #{painn_forward.7} parent=63 // pred_fallthru
                _
            $region64: #{painn_forward.7} parent=59 // pred_fallthru
              _
            // Predicated region
            $region65: #{painn_forward.7} parent=59 // pred_check
              _
            $region66: #{painn_forward.7} parent=59 // pred_check_branch
              %384 = sbr.rel target = $region68
            $region67: #{painn_forward.7} parent=59 // pred_region
              %s386 = ssub.s32 256, 1
              loop: start=0, step=1, limit=1
              $region69: #{painn_forward.7} parent=67 // loop_pre_header
                _
              $region70: #{painn_forward.7} parent=67 // loop_header
                %s388 = sphi 0, %s392
                %p389 = scmp.ge.s32.totalorder %s388, 1
                %s393 = sphi %s378, %s378
                %s394 = sphi %s376, %s376
              $region71: #{painn_forward.7} parent=67 // loop_header_branch
                %391 = sbr.rel (%p389) target = $region75
              $region72: #{painn_forward.7} parent=67 // loop_body
                %v395 = vld [vmem:[%s393] sm:%s386]
                %396 = vst [vmem:[%s394] sm:%s386] %v395
                %v397 = vld [vmem:[%s393 + $0x18] sm:%s386]
                %398 = vst [vmem:[%s394 + $0x8] sm:%s386] %v397
                %v399 = vld [vmem:[%s393 + $0x30] sm:%s386]
                %400 = vst [vmem:[%s394 + $0x10] sm:%s386] %v399
              $region73: #{painn_forward.7} parent=67 // loop_footer
                %s392 = sadd.s32 1, %s388
              $region74: #{painn_forward.7} parent=67 // loop_footer_branch
                %387 = sbr.rel target = $region70
              $region75: #{painn_forward.7} parent=67 // loop_exit
                _
            $region68: #{painn_forward.7} parent=59 // pred_fallthru
              _
          $region60: #{painn_forward.7} parent=55 // pred_fallthru
            _
          %419 = vnop
        $region56: #{painn_forward.7} parent=43 // pred_fallthru
          _
      $region44: #{painn_forward.7} parent=5 // pred_fallthru
        _
      %p420 = scmp.le.s32.totalorder 1, %s18
      %p421 = scmp.lt.s32.totalorder %s18, 4
      %p422 = pnand %p420, %p421
      %p423 = pneg %p422
      // Predicated region
      $region91: #{painn_forward.7} parent=5 // pred_check
        _
      $region92: #{painn_forward.7} parent=5 // pred_check_branch
        %425 = sbr.rel (%p422) target = $region94
      $region93: #{painn_forward.7} parent=5 // pred_region
        %s426 = ssub.s32 %s18, 1
        %s427 = sand.u32 %s121, 1
        %s428 = sand.u32 %s121, 1
        %s429 = smul.addr %s428, 24
        %s430 = scalar_lea.vmem [#allocation2], %s429
        // Predicated region
        $region95: #{painn_forward.7} parent=93 // pred_check
          %p431 = pneg %p134
        $region96: #{painn_forward.7} parent=93 // pred_check_branch
          %433 = sbr.rel (%p431) target = $region98
        $region97: #{painn_forward.7} parent=93 // pred_region
          _
        $region98: #{painn_forward.7} parent=93 // pred_fallthru
          _
        %p434 = scmp.lt.s32.totalorder %s27, 2
        %s435 = scalar_select %p434, %s27, 2
        %s436 = smul.addr %s435, 8
        %s437 = scalar_lea.vmem %s0, %s436
        %p438 = pneg %p56
        %p439 = pneg %p53
        %p440 = scmp.lt.s32.totalorder %s28, 0
        %s441 = scalar_select %p440, %s28, 0
        %s442 = smul.addr %s441, 8
        %s443 = scalar_lea.vmem %s1, %s442
        %p444 = pneg %p82
        %p445 = pneg %p79
        %p446 = scmp.lt.s32.totalorder %s27, 2
        %s447 = scalar_select %p446, %s27, 2
        %s448 = smul.addr %s447, 8
        %s449 = scalar_lea.vmem %s2, %s448
        %p450 = pneg %p108
        %p451 = pneg %p105
        %s452 = sand.u32 %s121, 1
        %s453 = sand.u32 %s121, 1
        %s454 = smul.addr %s453, 24
        %s455 = scalar_lea.vmem [#allocation2], %s454
        %p456 = pneg %p134
        %p457 = pneg %p131
        %p458 = pneg %p155
        %p459 = pneg %p152
        %p460 = pneg %p176
        %p461 = pneg %p173
        %p462 = pneg %p197
        %p463 = pneg %p194
        %p464 = pneg %p218
        %p465 = pneg %p215
        %p466 = pneg %p239
        %p467 = pneg %p236
        %p468 = pneg %p260
        %p469 = pneg %p257
        %p470 = pneg %p286
        %p471 = pneg %p283
        %p472 = scmp.lt.s32.totalorder %s27, 2
        %s473 = scalar_select %p472, %s27, 2
        %s474 = smul.addr %s473, 8
        %s475 = scalar_lea.vmem %s10, %s474
        %p476 = pneg %p312
        %p477 = pneg %p309
        %s478 = sand.u32 %s299, 1
        %s479 = sand.u32 %s299, 1
        %s480 = smul.addr %s479, 24
        %s481 = scalar_lea.vmem [#allocation3], %s480
        %p482 = scmp.lt.s32.totalorder %s27, 2
        %s483 = scalar_select %p482, %s27, 2
        %s484 = smul.addr %s483, 8
        %s485 = scalar_lea.vmem %s0, %s484
        %p486 = scmp.lt.s32.totalorder %s28, 0
        %s487 = scalar_select %p486, %s28, 0
        %s488 = smul.addr %s487, 8
        %s489 = scalar_lea.vmem %s1, %s488
        %p490 = scmp.lt.s32.totalorder %s27, 2
        %s491 = scalar_select %p490, %s27, 2
        %s492 = smul.addr %s491, 8
        %s493 = scalar_lea.vmem %s2, %s492
        %p494 = scmp.lt.s32.totalorder %s27, 2
        %s495 = scalar_select %p494, %s27, 2
        %s496 = smul.addr %s495, 8
        %s497 = scalar_lea.vmem %s10, %s496
        %p498 = scmp.eq.s32.totalorder %s28, 0
        // Predicated region
        $region99: #{painn_forward.7} parent=93 // pred_check
          %p499 = pneg %p498
        $region100: #{painn_forward.7} parent=93 // pred_check_branch
          %501 = sbr.rel (%p499) target = $region102
        $region101: #{painn_forward.7} parent=93 // pred_region
          %v502 = vld [vmem:[%s493] sm:$0xff]
          %503 = vst [vmem:[%s497] sm:$0xff] %v502
          %v504 = vld [vmem:[%s430] sm:$0xff]
          %v505 = vld [vmem:[%s430 + $0x8] sm:$0xff]
          %v506 = vld [vmem:[%s430 + $0x10] sm:$0xff]
          %507 = vst [vmem:[%s481] sm:$0xff] %v504
          %508 = vst [vmem:[%s481 + $0x8] sm:$0xff] %v505
          %509 = vst [vmem:[%s481 + $0x10] sm:$0xff] %v506
        $region102: #{painn_forward.7} parent=93 // pred_fallthru
          _
        %v510 = vld [vmem:[%s485] sm:$0xff]
        %v511 = vld [vmem:[%s489] sm:$0x1f]
        %513 = vset.pattern.permute.xlu0 0
        %514 = vperm.xlu0 %513, %v510
        %v515 = vpop.permute.xlu0 %514
        %v517 = vperm.slane %v511, 0
        %v518 = vsub.f32 %v515, %v517
        %519 = vset.pattern.permute.xlu0 1
        %520 = vperm.xlu0 %519, %v510
        %v521 = vpop.permute.xlu0 %520
        %v523 = vperm.slane %v511, 1
        %v524 = vsub.f32 %v521, %v523
        %525 = vset.pattern.permute.xlu0 2
        %526 = vperm.xlu0 %525, %v510
        %v527 = vpop.permute.xlu0 %526
        %v529 = vperm.slane %v511, 2
        %v530 = vsub.f32 %v527, %v529
        %v531 = vmul.f32 %v518, %v518
        %v532 = vmul.f32 %v524, %v524
        %v533 = vadd.f32 %v531, %v532
        %v534 = vmul.f32 %v530, %v530
        %v535 = vadd.f32 %v533, %v534
        %v536 = vrsqrt.pop %v535
        %v537 = vmul.f32 %v536, %v535
        %v538 = vmul.f32 %v537, %v536
        %v539 = vmul.f32 0.5, %v538
        %v540 = vsub.f32 1.5, %v539
        %v541 = vmul.f32 %v536, %v540
        %v542 = vmul.f32 %v535, %v541
        %vm543 = vcmp.eq.f32.partialorder %v535, inf
        %v544 = vsel %vm543, %v535, %v542
        %vm545 = vcmp.eq.f32.partialorder %v535, 0.0
        %v546 = vand.u32 %v535, 2147483648
        %v547 = vsel %vm545, %v546, %v544
        %v548 = vadd.f32 %v547, 1e-06
        %v549 = vrcp.pop %v548
        %v550 = vmul.f32 %v518, %v549
        %v551 = vmul.f32 %v524, %v549
        %v552 = vmul.f32 %v530, %v549
        %s553 = smul.u32 %s27, 8
        %v554 = vlaneseq
        %v555 = vshrl.u32 %v554, 7
        %v556 = vstv %s553
        %v557 = vadd.s32 %v556, %v555
        %s558 = smul.u32 %s28, 24
        %v559 = vlaneseq
        %v560 = vand.u32 %v559, 127
        %v561 = vstv %s558
        %v562 = vadd.s32 %v561, %v560
        %563 = vset.pattern.permute.xlu0 3
        %564 = vperm.xlu0 %563, %v510
        %v565 = vpop.permute.xlu0 %564
        %v567 = vperm.slane %v511, 3
        %vm568 = vcmp.eq.f32.partialorder %v565, %v567
        %vm569 = vcmp.lt.f32.partialorder %v547, 5.0
        %vm570 = vmand %vm569, %vm568
        %vm571 = vcmp.ne.s32.totalorder %v557, %v562
        %vm572 = vmand %vm570, %vm571
        %v573 = vmul.f32 %v547, 0.62831855
        %v574 = vand.u32 2147483647, %v573
        %vm575 = vcmp.le.f32.partialorder %v574, 0.7853982
        %vm576 = vcmp.lt.s32.totalorder %v573, 0
        %v577 = vand.u32 %v573, 2139095040
        %v578 = vshrl.u32 %v577, 23
        %v579 = vsub.s32 %v578, 127
        %v580 = vand.u32 2147483647, %v573
        %v581 = vand.u32 %v580, 8388607
        %v582 = vor.u32 %v581, 8388608
        %v583 = vsub.s32 0, %v582
        %v584 = vadd.s32 %v579, 1
        %vm585 = vcmp.gt.s32.totalorder %v584, 0
        %v586 = vsel %vm585, %v584, 0
        %v587 = vshrl.u32 %v586, 5
        %v588 = vand.u32 %v586, 31
        %v589 = vsub.s32 32, %v588
        %v590 = vshrl.u32 683565275, %v589
        %v591 = vshll.u32 683565275, %v588
        %v592 = vshrl.u32 2475754826, %v589
        %v593 = vor.u32 %v591, %v592
        %v594 = vshll.u32 2475754826, %v588
        %v595 = vshrl.u32 2131351028, %v589
        %v596 = vor.u32 %v594, %v595
        %v597 = vshll.u32 2131351028, %v588
        %v598 = vshrl.u32 2102212464, %v589
        %v599 = vor.u32 %v597, %v598
        %v600 = vshll.u32 2102212464, %v588
        %v601 = vshrl.u32 920167782, %v589
        %v602 = vor.u32 %v600, %v601
        %v603 = vshll.u32 920167782, %v588
        %v604 = vshrl.u32 1326507024, %v589
        %v605 = vor.u32 %v603, %v604
        %vm606 = vcmp.lt.s32.totalorder %v587, 1
        %vm607 = vcmp.lt.s32.totalorder %v587, 2
        %vm608 = vcmp.lt.s32.totalorder %v587, 3
        %vm609 = vcmp.lt.s32.totalorder %v587, 4
        %v610 = vsel %vm606, %v590, %v593
        %v611 = vsel %vm609, %v599, 2102212464
        %v612 = vsel %vm608, %v596, %v611
        %v613 = vsel %vm607, %v610, %v612
        %v614 = vsel %vm606, %v593, %v596
        %v615 = vsel %vm609, %v602, 920167782
        %v616 = vsel %vm608, %v599, %v615
        %v617 = vsel %vm607, %v614, %v616
        %v618 = vsel %vm606, %v596, %v599
        %v619 = vsel %vm609, %v605, 1326507024
        %v620 = vsel %vm608, %v602, %v619
        %v621 = vsel %vm607, %v618, %v620
        %v622 = vshll.u32 %v582, 8
        %v623 = vand.u32 %v622, 65535
        %v624 = vshrl.u32 %v622, 16
        %v625 = vand.u32 %v621, 65535
        %v626 = vshrl.u32 %v621, 16
        %v627 = vmul.u32 %v623, %v625
        %v628 = vmul.u32 %v623, %v626
        %v629 = vmul.u32 %v624, %v625
        %v630 = vmul.u32 %v624, %v626
        %v631 = vshll.u32 %v628, 16
        %v632 = vshrl.u32 %v628, 16
        %v633 = vshll.u32 %v629, 16
        %v634 = vshrl.u32 %v629, 16
        %vm635 = vc.u32 %v627, %v631
        %v636 = vsel %vm635, 1, 0
        %v637 = vadd.s32 %v627, %v631
        %v638 = vadd.s32 %v630, %v636
        %vm639 = vc.u32 %v637, %v633
        %v640 = vsel %vm639, 1, 0
        %v641 = vadd.s32 %v637, %v633
        %v642 = vadd.s32 %v638, %v640
        %v643 = vadd.s32 %v642, %v632
        %v644 = vadd.s32 %v643, %v634
        %v645 = vand.u32 %v622, 65535
        %v646 = vshrl.u32 %v622, 16
        %v647 = vand.u32 %v617, 65535
        %v648 = vshrl.u32 %v617, 16
        %v649 = vmul.u32 %v645, %v647
        %v650 = vmul.u32 %v645, %v648
        %v651 = vmul.u32 %v646, %v647
        %v652 = vmul.u32 %v646, %v648
        %v653 = vshll.u32 %v650, 16
        %v654 = vshrl.u32 %v650, 16
        %v655 = vshll.u32 %v651, 16
        %v656 = vshrl.u32 %v651, 16
        %vm657 = vc.u32 %v649, %v653
        %v658 = vsel %vm657, 1, 0
        %v659 = vadd.s32 %v649, %v653
        %v660 = vadd.s32 %v652, %v658
        %vm661 = vc.u32 %v659, %v655
        %v662 = vsel %vm661, 1, 0
        %v663 = vadd.s32 %v659, %v655
        %v664 = vadd.s32 %v660, %v662
        %v665 = vadd.s32 %v664, %v654
        %v666 = vadd.s32 %v665, %v656
        %v667 = vmul.u32 %v622, %v613
        %v668 = vadd.s32 %v644, %v663
        %vm669 = vc.u32 %v644, %v663
        %v670 = vadd.s32 %v666, 1
        %v671 = vsel %vm669, %v670, %v666
        %v672 = vadd.s32 %v667, %v671
        %v673 = vadd.s32 %v672, 536870912
        %v674 = vshrl.u32 %v673, 30
        %v675 = vshll.u32 %v674, 30
        %v676 = vsub.s32 %v672, %v675
        %vm677 = vcmp.lt.s32.totalorder %v676, 0
        %v678 = vsub.s32 0, %v676
        %v679 = vsel %vm677, %v678, %v676
        %v680 = vclz %v679
        %v681 = vsub.s32 %v680, 2
        %vm682 = vcmp.gt.s32.totalorder 0, %v681
        %v683 = vsel %vm682, 0, %v681
        %v684 = vsub.s32 32, %v683
        %v685 = vshll.u32 %v676, %v683
        %v686 = vshrl.u32 %v668, %v684
        %v687 = vor.u32 %v685, %v686
        %v688 = vsub.s32 4294967266, %v683
        %v689 = vadd.s32 %v688, 127
        %v690 = vshll.u32 %v689, 23
        %v691 = vor.u32 4788187, %v690
        %v692 = vand.u32 2147483647, %v691
        %v694 = vcvt.s32.f32 %v687
        %v695 = vmul.f32 %v694, %v692
        %v696 = vxor.u32 %v695, 2147483648
        %v697 = vsel %vm576, %v696, %v695
        %v698 = vsub.s32 4, %v674
        %v699 = vsel %vm576, %v698, %v674
        %v700 = vsel %vm575, %v573, %v697
        %v701 = vsel %vm575, 0, %v699
        %v702 = vmul.f32 %v700, %v700
        %v703 = vmul.f32 %v702, -0.001358992
        %v704 = vadd.f32 %v703, 0.041655596
        %v705 = vmul.f32 %v702, %v704
        %v706 = vadd.f32 %v705, -0.4999988
        %v707 = vmul.f32 %v702, %v706
        %v708 = vadd.f32 1.0, %v707
        %v709 = vmul.f32 %v700, %v700
        %v710 = vmul.f32 %v709, -0.00019511016
        %v711 = vadd.f32 %v710, 0.008332121
        %v712 = vmul.f32 %v709, %v711
        %v713 = vadd.f32 %v712, -0.16666654
        %v714 = vmul.f32 %v709, %v713
        %v715 = vadd.f32 %v714, 1.0
        %v716 = vmul.f32 %v715, %v700
        %vm717 = vweird.f32 %v573
        %v718 = vand.u32 %v701, 3
        %vm719 = vcmp.lt.s32.totalorder %v718, 2
        %vm720 = vcmp.eq.s32.totalorder %v718, 0
        %v721 = vxor.u32 %v716, 2147483648
        %v722 = vsel %vm720, %v708, %v721
        %vm723 = vcmp.eq.s32.totalorder %v718, 2
        %v724 = vxor.u32 %v708, 2147483648
        %v725 = vsel %vm723, %v724, %v716
        %v726 = vsel %vm719, %v722, %v725
        %v727 = vsel %vm717, nan, %v726
        %v728 = vadd.f32 %v727, 1.0
        %v729 = vmul.f32 %v728, 0.5
        %v730 = vsel %vm572, %v729, 0.0
        %731 = vset.pattern.permute.xlu0 4
        %732 = vperm.xlu0 %731, %v510
        %v733 = vpop.permute.xlu0 %732
        %v735 = vperm.slane %v511, 4
        %v736 = vadd.f32 %v733, %v735
        %v737 = vmul.f32 %v733, %v735
        %v738 = vmul.f32 %v737, 2.0
        %v739 = vsub.f32 %v736, %v738
        %v740 = vld [vmem:[%s6] sm:$0x1]
        %v741 = vperm.slane %v547, 0
        %v742 = vlaneseq
        %v743 = vshrl.u32 %v742, 7
        %745 = vset.pattern.permute.xlu0 %v743
        %746 = vperm.xlu0 %745, %v741
        %v747 = vpop.permute.xlu0 %746
        %v748 = vlaneseq
        %v749 = vshrl.u32 %v748, 7
        %v750 = vadd.s32 %v749, 8
        %751 = vset.pattern.permute.xlu0 %v750
        %752 = vperm.xlu0 %751, %v741
        %v753 = vpop.permute.xlu0 %752
        %v754 = vlaneseq
        %v755 = vshrl.u32 %v754, 7
        %v756 = vadd.s32 %v755, 16
        %757 = vset.pattern.permute.xlu0 %v756
        %758 = vperm.xlu0 %757, %v741
        %v759 = vpop.permute.xlu0 %758
        %v760 = vperm.slane %v547, 1
        %v761 = vlaneseq
        %v762 = vshrl.u32 %v761, 7
        %764 = vset.pattern.permute.xlu0 %v762
        %765 = vperm.xlu0 %764, %v760
        %v766 = vpop.permute.xlu0 %765
        %v767 = vlaneseq
        %v768 = vshrl.u32 %v767, 7
        %v769 = vadd.s32 %v768, 8
        %770 = vset.pattern.permute.xlu0 %v769
        %771 = vperm.xlu0 %770, %v760
        %v772 = vpop.permute.xlu0 %771
        %v773 = vlaneseq
        %v774 = vshrl.u32 %v773, 7
        %v775 = vadd.s32 %v774, 16
        %776 = vset.pattern.permute.xlu0 %v775
        %777 = vperm.xlu0 %776, %v760
        %v778 = vpop.permute.xlu0 %777
        %v779 = vperm.slane %v547, 2
        %v780 = vlaneseq
        %v781 = vshrl.u32 %v780, 7
        %783 = vset.pattern.permute.xlu0 %v781
        %784 = vperm.xlu0 %783, %v779
        %v785 = vpop.permute.xlu0 %784
        %v786 = vlaneseq
        %v787 = vshrl.u32 %v786, 7
        %v788 = vadd.s32 %v787, 8
        %789 = vset.pattern.permute.xlu0 %v788
        %790 = vperm.xlu0 %789, %v779
        %v791 = vpop.permute.xlu0 %790
        %v792 = vlaneseq
        %v793 = vshrl.u32 %v792, 7
        %v794 = vadd.s32 %v793, 16
        %795 = vset.pattern.permute.xlu0 %v794
        %796 = vperm.xlu0 %795, %v779
        %v797 = vpop.permute.xlu0 %796
        %v798 = vperm.slane %v547, 3
        %v799 = vlaneseq
        %v800 = vshrl.u32 %v799, 7
        %802 = vset.pattern.permute.xlu0 %v800
        %803 = vperm.xlu0 %802, %v798
        %v804 = vpop.permute.xlu0 %803
        %v805 = vlaneseq
        %v806 = vshrl.u32 %v805, 7
        %v807 = vadd.s32 %v806, 8
        %808 = vset.pattern.permute.xlu0 %v807
        %809 = vperm.xlu0 %808, %v798
        %v810 = vpop.permute.xlu0 %809
        %v811 = vlaneseq
        %v812 = vshrl.u32 %v811, 7
        %v813 = vadd.s32 %v812, 16
        %814 = vset.pattern.permute.xlu0 %v813
        %815 = vperm.xlu0 %814, %v798
        %v816 = vpop.permute.xlu0 %815
        %v817 = vperm.slane %v547, 4
        %v818 = vlaneseq
        %v819 = vshrl.u32 %v818, 7
        %821 = vset.pattern.permute.xlu0 %v819
        %822 = vperm.xlu0 %821, %v817
        %v823 = vpop.permute.xlu0 %822
        %v824 = vlaneseq
        %v825 = vshrl.u32 %v824, 7
        %v826 = vadd.s32 %v825, 8
        %827 = vset.pattern.permute.xlu0 %v826
        %828 = vperm.xlu0 %827, %v817
        %v829 = vpop.permute.xlu0 %828
        %v830 = vlaneseq
        %v831 = vshrl.u32 %v830, 7
        %v832 = vadd.s32 %v831, 16
        %833 = vset.pattern.permute.xlu0 %v832
        %834 = vperm.xlu0 %833, %v817
        %v835 = vpop.permute.xlu0 %834
        %v836 = vperm.slane %v547, 5
        %v837 = vlaneseq
        %v838 = vshrl.u32 %v837, 7
        %840 = vset.pattern.permute.xlu0 %v838
        %841 = vperm.xlu0 %840, %v836
        %v842 = vpop.permute.xlu0 %841
        %v843 = vlaneseq
        %v844 = vshrl.u32 %v843, 7
        %v845 = vadd.s32 %v844, 8
        %846 = vset.pattern.permute.xlu0 %v845
        %847 = vperm.xlu0 %846, %v836
        %v848 = vpop.permute.xlu0 %847
        %v849 = vlaneseq
        %v850 = vshrl.u32 %v849, 7
        %v851 = vadd.s32 %v850, 16
        %852 = vset.pattern.permute.xlu0 %v851
        %853 = vperm.xlu0 %852, %v836
        %v854 = vpop.permute.xlu0 %853
        %v855 = vperm.slane %v547, 6
        %v856 = vlaneseq
        %v857 = vshrl.u32 %v856, 7
        %859 = vset.pattern.permute.xlu0 %v857
        %860 = vperm.xlu0 %859, %v855
        %v861 = vpop.permute.xlu0 %860
        %v862 = vlaneseq
        %v863 = vshrl.u32 %v862, 7
        %v864 = vadd.s32 %v863, 8
        %865 = vset.pattern.permute.xlu0 %v864
        %866 = vperm.xlu0 %865, %v855
        %v867 = vpop.permute.xlu0 %866
        %v868 = vlaneseq
        %v869 = vshrl.u32 %v868, 7
        %v870 = vadd.s32 %v869, 16
        %871 = vset.pattern.permute.xlu0 %v870
        %872 = vperm.xlu0 %871, %v855
        %v873 = vpop.permute.xlu0 %872
        %v874 = vperm.slane %v547, 7
        %v875 = vlaneseq
        %v876 = vshrl.u32 %v875, 7
        %878 = vset.pattern.permute.xlu0 %v876
        %879 = vperm.xlu0 %878, %v874
        %v880 = vpop.permute.xlu0 %879
        %v881 = vlaneseq
        %v882 = vshrl.u32 %v881, 7
        %v883 = vadd.s32 %v882, 8
        %884 = vset.pattern.permute.xlu0 %v883
        %885 = vperm.xlu0 %884, %v874
        %v886 = vpop.permute.xlu0 %885
        %v887 = vlaneseq
        %v888 = vshrl.u32 %v887, 7
        %v889 = vadd.s32 %v888, 16
        %890 = vset.pattern.permute.xlu0 %v889
        %891 = vperm.xlu0 %890, %v874
        %v892 = vpop.permute.xlu0 %891
        %v894 = vperm.slane %v740, 0
        %v896 = vsub.f32 %v747, %v894
        %v897 = vsub.f32 %v753, %v894
        %v898 = vsub.f32 %v759, %v894
        %v899 = vsub.f32 %v766, %v894
        %v900 = vsub.f32 %v772, %v894
        %v901 = vsub.f32 %v778, %v894
        %v902 = vsub.f32 %v785, %v894
        %v903 = vsub.f32 %v791, %v894
        %v904 = vsub.f32 %v797, %v894
        %v905 = vsub.f32 %v804, %v894
        %v906 = vsub.f32 %v810, %v894
        %v907 = vsub.f32 %v816, %v894
        %v908 = vsub.f32 %v823, %v894
        %v909 = vsub.f32 %v829, %v894
        %v910 = vsub.f32 %v835, %v894
        %v911 = vsub.f32 %v842, %v894
        %v912 = vsub.f32 %v848, %v894
        %v913 = vsub.f32 %v854, %v894
        %v914 = vsub.f32 %v861, %v894
        %v915 = vsub.f32 %v867, %v894
        %v916 = vsub.f32 %v873, %v894
        %v917 = vsub.f32 %v880, %v894
        %v918 = vsub.f32 %v886, %v894
        %v919 = vsub.f32 %v892, %v894
        %v920 = vmul.f32 %v896, %v896
        %v921 = vmul.f32 %v897, %v897
        %v922 = vmul.f32 %v898, %v898
        %v923 = vmul.f32 %v899, %v899
        %v924 = vmul.f32 %v900, %v900
        %v925 = vmul.f32 %v901, %v901
        %v926 = vmul.f32 %v902, %v902
        %v927 = vmul.f32 %v903, %v903
        %v928 = vmul.f32 %v904, %v904
        %v929 = vmul.f32 %v905, %v905
        %v930 = vmul.f32 %v906, %v906
        %v931 = vmul.f32 %v907, %v907
        %v932 = vmul.f32 %v908, %v908
        %v933 = vmul.f32 %v909, %v909
        %v934 = vmul.f32 %v910, %v910
        %v935 = vmul.f32 %v911, %v911
        %v936 = vmul.f32 %v912, %v912
        %v937 = vmul.f32 %v913, %v913
        %v938 = vmul.f32 %v914, %v914
        %v939 = vmul.f32 %v915, %v915
        %v940 = vmul.f32 %v916, %v916
        %v941 = vmul.f32 %v917, %v917
        %v942 = vmul.f32 %v918, %v918
        %v943 = vmul.f32 %v919, %v919
        %v944 = vmul.f32 %v920, -4.5
        %v945 = vmul.f32 %v921, -4.5
        %v946 = vmul.f32 %v922, -4.5
        %v947 = vmul.f32 %v923, -4.5
        %v948 = vmul.f32 %v924, -4.5
        %v949 = vmul.f32 %v925, -4.5
        %v950 = vmul.f32 %v926, -4.5
        %v951 = vmul.f32 %v927, -4.5
        %v952 = vmul.f32 %v928, -4.5
        %v953 = vmul.f32 %v929, -4.5
        %v954 = vmul.f32 %v930, -4.5
        %v955 = vmul.f32 %v931, -4.5
        %v956 = vmul.f32 %v932, -4.5
        %v957 = vmul.f32 %v933, -4.5
        %v958 = vmul.f32 %v934, -4.5
        %v959 = vmul.f32 %v935, -4.5
        %v960 = vmul.f32 %v936, -4.5
        %v961 = vmul.f32 %v937, -4.5
        %v962 = vmul.f32 %v938, -4.5
        %v963 = vmul.f32 %v939, -4.5
        %v964 = vmul.f32 %v940, -4.5
        %v965 = vmul.f32 %v941, -4.5
        %v966 = vmul.f32 %v942, -4.5
        %v967 = vmul.f32 %v943, -4.5
        %v968 = vmul.f32 %v944, 1.442695
        %v969 = vpow.pop %v968
        %v970 = vmul.f32 %v945, 1.442695
        %v971 = vpow.pop %v970
        %v972 = vmul.f32 %v946, 1.442695
        %v973 = vpow.pop %v972
        %v974 = vmul.f32 %v947, 1.442695
        %v975 = vpow.pop %v974
        %v976 = vmul.f32 %v948, 1.442695
        %v977 = vpow.pop %v976
        %v978 = vmul.f32 %v949, 1.442695
        %v979 = vpow.pop %v978
        %v980 = vmul.f32 %v950, 1.442695
        %v981 = vpow.pop %v980
        %v982 = vmul.f32 %v951, 1.442695
        %v983 = vpow.pop %v982
        %v984 = vmul.f32 %v952, 1.442695
        %v985 = vpow.pop %v984
        %v986 = vmul.f32 %v953, 1.442695
        %v987 = vpow.pop %v986
        %v988 = vmul.f32 %v954, 1.442695
        %v989 = vpow.pop %v988
        %v990 = vmul.f32 %v955, 1.442695
        %v991 = vpow.pop %v990
        %v992 = vmul.f32 %v956, 1.442695
        %v993 = vpow.pop %v992
        %v994 = vmul.f32 %v957, 1.442695
        %v995 = vpow.pop %v994
        %v996 = vmul.f32 %v958, 1.442695
        %v997 = vpow.pop %v996
        %v998 = vmul.f32 %v959, 1.442695
        %v999 = vpow.pop %v998
        %v1000 = vmul.f32 %v960, 1.442695
        %v1001 = vpow.pop %v1000
        %v1002 = vmul.f32 %v961, 1.442695
        %v1003 = vpow.pop %v1002
        %v1004 = vmul.f32 %v962, 1.442695
        %v1005 = vpow.pop %v1004
        %v1006 = vmul.f32 %v963, 1.442695
        %v1007 = vpow.pop %v1006
        %v1008 = vmul.f32 %v964, 1.442695
        %v1009 = vpow.pop %v1008
        %v1010 = vmul.f32 %v965, 1.442695
        %v1011 = vpow.pop %v1010
        %v1012 = vmul.f32 %v966, 1.442695
        %v1013 = vpow.pop %v1012
        %v1014 = vmul.f32 %v967, 1.442695
        %v1015 = vpow.pop %v1014
        %v1016 = vld [vmem:[%s7] sm:$0xff]
        %v1017 = vld [vmem:[%s7 + $0x8] sm:$0xff]
        %v1018 = vld [vmem:[%s7 + $0x10] sm:$0xff]
        %v1019 = vld [vmem:[%s7 + $0x18] sm:$0xff]
        %v1020 = vld [vmem:[%s7 + $0x20] sm:$0xff]
        %v1021 = vld [vmem:[%s7 + $0x28] sm:$0xff]
        %vm1022 = vcmask 130048
        %v1024 = vsel %vm1022, %v969, 0
        %v1027 = vsel %vm1022, %v971, 0
        %v1030 = vsel %vm1022, %v973, 0
        %v1033 = vsel %vm1022, %v975, 0
        %v1036 = vsel %vm1022, %v977, 0
        %v1039 = vsel %vm1022, %v979, 0
        %v1042 = vsel %vm1022, %v981, 0
        %v1045 = vsel %vm1022, %v983, 0
        %v1048 = vsel %vm1022, %v985, 0
        %v1051 = vsel %vm1022, %v987, 0
        %v1054 = vsel %vm1022, %v989, 0
        %v1057 = vsel %vm1022, %v991, 0
        %v1060 = vsel %vm1022, %v993, 0
        %v1063 = vsel %vm1022, %v995, 0
        %v1066 = vsel %vm1022, %v997, 0
        %v1069 = vsel %vm1022, %v999, 0
        %v1072 = vsel %vm1022, %v1001, 0
        %v1075 = vsel %vm1022, %v1003, 0
        %v1078 = vsel %vm1022, %v1005, 0
        %v1081 = vsel %vm1022, %v1007, 0
        %v1084 = vsel %vm1022, %v1009, 0
        %v1087 = vsel %vm1022, %v1011, 0
        %v1090 = vsel %vm1022, %v1013, 0
        %v1093 = vsel %vm1022, %v1015, 0
        %1095 = vmatpush.msra.mxu0 0.0
        %1096 = vmatpush.msra.mxu0 0.0
        %1097 = vmatpush.msra.mxu0 0.0
        %1098 = vmatpush.msra.mxu0 0.0
        %1099 = vmatpush.msra.mxu0 0.0
        %1100 = vmatpush.msra.mxu0 0.0
        %1101 = vmatpush.msra.mxu0 0.0
        %1102 = vmatpush.msra.mxu0 0.0
        %1103 = vmatpush.msra.mxu0 0.0
        %1104 = vmatpush.msra.mxu0 0.0
        %1105 = vmatpush.msra.mxu0 0.0
        %1106 = vmatpush.msra.mxu0 0.0
        %1107 = vmatpush.msra.mxu0 0.0
        %1108 = vmatpush.msra.mxu0 0.0
        %1109 = vmatpush.msra.mxu0 %v1019
        %1110 = vmatpush.msra.mxu0 %v1016
        %1111 = vmatmul.f32.gmra.mxu0 %v1024
        %v1112 = vpop.f32.mrf.mxu0
        %v1113 = vadd.f32 0.0, %v1112
        %1114 = vmatmul.f32.gmra.mxu0 %v1027
        %v1115 = vpop.f32.mrf.mxu0
        %v1116 = vadd.f32 0.0, %v1115
        %1117 = vmatmul.f32.gmra.mxu0 %v1030
        %v1118 = vpop.f32.mrf.mxu0
        %v1119 = vadd.f32 0.0, %v1118
        %1120 = vmatmul.f32.gmra.mxu0 %v1033
        %v1121 = vpop.f32.mrf.mxu0
        %v1122 = vadd.f32 0.0, %v1121
        %1123 = vmatmul.f32.gmra.mxu0 %v1036
        %v1124 = vpop.f32.mrf.mxu0
        %v1125 = vadd.f32 0.0, %v1124
        %1126 = vmatmul.f32.gmra.mxu0 %v1039
        %v1127 = vpop.f32.mrf.mxu0
        %v1128 = vadd.f32 0.0, %v1127
        %1129 = vmatmul.f32.gmra.mxu0 %v1042
        %v1130 = vpop.f32.mrf.mxu0
        %v1131 = vadd.f32 0.0, %v1130
        %1132 = vmatmul.f32.gmra.mxu0 %v1045
        %v1133 = vpop.f32.mrf.mxu0
        %v1134 = vadd.f32 0.0, %v1133
        %1135 = vmatmul.f32.gmra.mxu0 %v1048
        %v1136 = vpop.f32.mrf.mxu0
        %v1137 = vadd.f32 0.0, %v1136
        %1138 = vmatmul.f32.gmra.mxu0 %v1051
        %v1139 = vpop.f32.mrf.mxu0
        %v1140 = vadd.f32 0.0, %v1139
        %1141 = vmatmul.f32.gmra.mxu0 %v1054
        %v1142 = vpop.f32.mrf.mxu0
        %v1143 = vadd.f32 0.0, %v1142
        %1144 = vmatmul.f32.gmra.mxu0 %v1057
        %v1145 = vpop.f32.mrf.mxu0
        %v1146 = vadd.f32 0.0, %v1145
        %1147 = vmatmul.f32.gmra.mxu0 %v1060
        %v1148 = vpop.f32.mrf.mxu0
        %v1149 = vadd.f32 0.0, %v1148
        %1150 = vmatmul.f32.gmra.mxu0 %v1063
        %v1151 = vpop.f32.mrf.mxu0
        %v1152 = vadd.f32 0.0, %v1151
        %1153 = vmatmul.f32.gmra.mxu0 %v1066
        %v1154 = vpop.f32.mrf.mxu0
        %v1155 = vadd.f32 0.0, %v1154
        %1156 = vmatmul.f32.gmra.mxu0 %v1069
        %v1157 = vpop.f32.mrf.mxu0
        %v1158 = vadd.f32 0.0, %v1157
        %1159 = vmatmul.f32.gmra.mxu0 %v1072
        %v1160 = vpop.f32.mrf.mxu0
        %v1161 = vadd.f32 0.0, %v1160
        %1162 = vmatmul.f32.gmra.mxu0 %v1075
        %v1163 = vpop.f32.mrf.mxu0
        %v1164 = vadd.f32 0.0, %v1163
        %1165 = vmatmul.f32.gmra.mxu0 %v1078
        %v1166 = vpop.f32.mrf.mxu0
        %v1167 = vadd.f32 0.0, %v1166
        %1168 = vmatmul.f32.gmra.mxu0 %v1081
        %v1169 = vpop.f32.mrf.mxu0
        %v1170 = vadd.f32 0.0, %v1169
        %1171 = vmatmul.f32.gmra.mxu0 %v1084
        %v1172 = vpop.f32.mrf.mxu0
        %v1173 = vadd.f32 0.0, %v1172
        %1174 = vmatmul.f32.gmra.mxu0 %v1087
        %v1175 = vpop.f32.mrf.mxu0
        %v1176 = vadd.f32 0.0, %v1175
        %1177 = vmatmul.f32.gmra.mxu0 %v1090
        %v1178 = vpop.f32.mrf.mxu0
        %v1179 = vadd.f32 0.0, %v1178
        %1180 = vmatmul.f32.gmra.mxu0 %v1093
        %v1181 = vpop.f32.mrf.mxu0
        %v1182 = vadd.f32 0.0, %v1181
        %1183 = vdwg.mxu0
        %1184 = vmatpush.msra.mxu0 0.0
        %1185 = vmatpush.msra.mxu0 0.0
        %1186 = vmatpush.msra.mxu0 0.0
        %1187 = vmatpush.msra.mxu0 0.0
        %1188 = vmatpush.msra.mxu0 0.0
        %1189 = vmatpush.msra.mxu0 0.0
        %1190 = vmatpush.msra.mxu0 0.0
        %1191 = vmatpush.msra.mxu0 0.0
        %1192 = vmatpush.msra.mxu0 0.0
        %1193 = vmatpush.msra.mxu0 0.0
        %1194 = vmatpush.msra.mxu0 0.0
        %1195 = vmatpush.msra.mxu0 0.0
        %1196 = vmatpush.msra.mxu0 0.0
        %1197 = vmatpush.msra.mxu0 0.0
        %1198 = vmatpush.msra.mxu0 %v1020
        %1199 = vmatpush.msra.mxu0 %v1017
        %1200 = vmatmul.f32.gmra.mxu0 %v1024
        %v1201 = vpop.f32.mrf.mxu0
        %v1202 = vadd.f32 0.0, %v1201
        %1203 = vmatmul.f32.gmra.mxu0 %v1027
        %v1204 = vpop.f32.mrf.mxu0
        %v1205 = vadd.f32 0.0, %v1204
        %1206 = vmatmul.f32.gmra.mxu0 %v1030
        %v1207 = vpop.f32.mrf.mxu0
        %v1208 = vadd.f32 0.0, %v1207
        %1209 = vmatmul.f32.gmra.mxu0 %v1033
        %v1210 = vpop.f32.mrf.mxu0
        %v1211 = vadd.f32 0.0, %v1210
        %1212 = vmatmul.f32.gmra.mxu0 %v1036
        %v1213 = vpop.f32.mrf.mxu0
        %v1214 = vadd.f32 0.0, %v1213
        %1215 = vmatmul.f32.gmra.mxu0 %v1039
        %v1216 = vpop.f32.mrf.mxu0
        %v1217 = vadd.f32 0.0, %v1216
        %1218 = vmatmul.f32.gmra.mxu0 %v1042
        %v1219 = vpop.f32.mrf.mxu0
        %v1220 = vadd.f32 0.0, %v1219
        %1221 = vmatmul.f32.gmra.mxu0 %v1045
        %v1222 = vpop.f32.mrf.mxu0
        %v1223 = vadd.f32 0.0, %v1222
        %1224 = vmatmul.f32.gmra.mxu0 %v1048
        %v1225 = vpop.f32.mrf.mxu0
        %v1226 = vadd.f32 0.0, %v1225
        %1227 = vmatmul.f32.gmra.mxu0 %v1051
        %v1228 = vpop.f32.mrf.mxu0
        %v1229 = vadd.f32 0.0, %v1228
        %1230 = vmatmul.f32.gmra.mxu0 %v1054
        %v1231 = vpop.f32.mrf.mxu0
        %v1232 = vadd.f32 0.0, %v1231
        %1233 = vmatmul.f32.gmra.mxu0 %v1057
        %v1234 = vpop.f32.mrf.mxu0
        %v1235 = vadd.f32 0.0, %v1234
        %1236 = vmatmul.f32.gmra.mxu0 %v1060
        %v1237 = vpop.f32.mrf.mxu0
        %v1238 = vadd.f32 0.0, %v1237
        %1239 = vmatmul.f32.gmra.mxu0 %v1063
        %v1240 = vpop.f32.mrf.mxu0
        %v1241 = vadd.f32 0.0, %v1240
        %1242 = vmatmul.f32.gmra.mxu0 %v1066
        %v1243 = vpop.f32.mrf.mxu0
        %v1244 = vadd.f32 0.0, %v1243
        %1245 = vmatmul.f32.gmra.mxu0 %v1069
        %v1246 = vpop.f32.mrf.mxu0
        %v1247 = vadd.f32 0.0, %v1246
        %1248 = vmatmul.f32.gmra.mxu0 %v1072
        %v1249 = vpop.f32.mrf.mxu0
        %v1250 = vadd.f32 0.0, %v1249
        %1251 = vmatmul.f32.gmra.mxu0 %v1075
        %v1252 = vpop.f32.mrf.mxu0
        %v1253 = vadd.f32 0.0, %v1252
        %1254 = vmatmul.f32.gmra.mxu0 %v1078
        %v1255 = vpop.f32.mrf.mxu0
        %v1256 = vadd.f32 0.0, %v1255
        %1257 = vmatmul.f32.gmra.mxu0 %v1081
        %v1258 = vpop.f32.mrf.mxu0
        %v1259 = vadd.f32 0.0, %v1258
        %1260 = vmatmul.f32.gmra.mxu0 %v1084
        %v1261 = vpop.f32.mrf.mxu0
        %v1262 = vadd.f32 0.0, %v1261
        %1263 = vmatmul.f32.gmra.mxu0 %v1087
        %v1264 = vpop.f32.mrf.mxu0
        %v1265 = vadd.f32 0.0, %v1264
        %1266 = vmatmul.f32.gmra.mxu0 %v1090
        %v1267 = vpop.f32.mrf.mxu0
        %v1268 = vadd.f32 0.0, %v1267
        %1269 = vmatmul.f32.gmra.mxu0 %v1093
        %v1270 = vpop.f32.mrf.mxu0
        %v1271 = vadd.f32 0.0, %v1270
        %1272 = vdwg.mxu0
        %1273 = vmatpush.msra.mxu0 0.0
        %1274 = vmatpush.msra.mxu0 0.0
        %1275 = vmatpush.msra.mxu0 0.0
        %1276 = vmatpush.msra.mxu0 0.0
        %1277 = vmatpush.msra.mxu0 0.0
        %1278 = vmatpush.msra.mxu0 0.0
        %1279 = vmatpush.msra.mxu0 0.0
        %1280 = vmatpush.msra.mxu0 0.0
        %1281 = vmatpush.msra.mxu0 0.0
        %1282 = vmatpush.msra.mxu0 0.0
        %1283 = vmatpush.msra.mxu0 0.0
        %1284 = vmatpush.msra.mxu0 0.0
        %1285 = vmatpush.msra.mxu0 0.0
        %1286 = vmatpush.msra.mxu0 0.0
        %1287 = vmatpush.msra.mxu0 %v1021
        %1288 = vmatpush.msra.mxu0 %v1018
        %1289 = vmatmul.f32.gmra.mxu0 %v1024
        %v1290 = vpop.f32.mrf.mxu0
        %v1291 = vadd.f32 0.0, %v1290
        %1292 = vmatmul.f32.gmra.mxu0 %v1027
        %v1293 = vpop.f32.mrf.mxu0
        %v1294 = vadd.f32 0.0, %v1293
        %1295 = vmatmul.f32.gmra.mxu0 %v1030
        %v1296 = vpop.f32.mrf.mxu0
        %v1297 = vadd.f32 0.0, %v1296
        %1298 = vmatmul.f32.gmra.mxu0 %v1033
        %v1299 = vpop.f32.mrf.mxu0
        %v1300 = vadd.f32 0.0, %v1299
        %1301 = vmatmul.f32.gmra.mxu0 %v1036
        %v1302 = vpop.f32.mrf.mxu0
        %v1303 = vadd.f32 0.0, %v1302
        %1304 = vmatmul.f32.gmra.mxu0 %v1039
        %v1305 = vpop.f32.mrf.mxu0
        %v1306 = vadd.f32 0.0, %v1305
        %1307 = vmatmul.f32.gmra.mxu0 %v1042
        %v1308 = vpop.f32.mrf.mxu0
        %v1309 = vadd.f32 0.0, %v1308
        %1310 = vmatmul.f32.gmra.mxu0 %v1045
        %v1311 = vpop.f32.mrf.mxu0
        %v1312 = vadd.f32 0.0, %v1311
        %1313 = vmatmul.f32.gmra.mxu0 %v1048
        %v1314 = vpop.f32.mrf.mxu0
        %v1315 = vadd.f32 0.0, %v1314
        %1316 = vmatmul.f32.gmra.mxu0 %v1051
        %v1317 = vpop.f32.mrf.mxu0
        %v1318 = vadd.f32 0.0, %v1317
        %1319 = vmatmul.f32.gmra.mxu0 %v1054
        %v1320 = vpop.f32.mrf.mxu0
        %v1321 = vadd.f32 0.0, %v1320
        %1322 = vmatmul.f32.gmra.mxu0 %v1057
        %v1323 = vpop.f32.mrf.mxu0
        %v1324 = vadd.f32 0.0, %v1323
        %1325 = vmatmul.f32.gmra.mxu0 %v1060
        %v1326 = vpop.f32.mrf.mxu0
        %v1327 = vadd.f32 0.0, %v1326
        %1328 = vmatmul.f32.gmra.mxu0 %v1063
        %v1329 = vpop.f32.mrf.mxu0
        %v1330 = vadd.f32 0.0, %v1329
        %1331 = vmatmul.f32.gmra.mxu0 %v1066
        %v1332 = vpop.f32.mrf.mxu0
        %v1333 = vadd.f32 0.0, %v1332
        %1334 = vmatmul.f32.gmra.mxu0 %v1069
        %v1335 = vpop.f32.mrf.mxu0
        %v1336 = vadd.f32 0.0, %v1335
        %1337 = vmatmul.f32.gmra.mxu0 %v1072
        %v1338 = vpop.f32.mrf.mxu0
        %v1339 = vadd.f32 0.0, %v1338
        %1340 = vmatmul.f32.gmra.mxu0 %v1075
        %v1341 = vpop.f32.mrf.mxu0
        %v1342 = vadd.f32 0.0, %v1341
        %1343 = vmatmul.f32.gmra.mxu0 %v1078
        %v1344 = vpop.f32.mrf.mxu0
        %v1345 = vadd.f32 0.0, %v1344
        %1346 = vmatmul.f32.gmra.mxu0 %v1081
        %v1347 = vpop.f32.mrf.mxu0
        %v1348 = vadd.f32 0.0, %v1347
        %1349 = vmatmul.f32.gmra.mxu0 %v1084
        %v1350 = vpop.f32.mrf.mxu0
        %v1351 = vadd.f32 0.0, %v1350
        %1352 = vmatmul.f32.gmra.mxu0 %v1087
        %v1353 = vpop.f32.mrf.mxu0
        %v1354 = vadd.f32 0.0, %v1353
        %1355 = vmatmul.f32.gmra.mxu0 %v1090
        %v1356 = vpop.f32.mrf.mxu0
        %v1357 = vadd.f32 0.0, %v1356
        %1358 = vmatmul.f32.gmra.mxu0 %v1093
        %v1359 = vpop.f32.mrf.mxu0
        %v1360 = vadd.f32 0.0, %v1359
        %1361 = vdwg.mxu0
        %v1362 = vld [vmem:[%s8] sm:$0x7]
        %v1364 = vperm.slane %v1362, 0
        %v1365 = vperm.slane %v1362, 1
        %v1366 = vperm.slane %v1362, 2
        %v1370 = vadd.f32 %v1113, %v1364
        %v1371 = vadd.f32 %v1202, %v1365
        %v1372 = vadd.f32 %v1291, %v1366
        %v1373 = vadd.f32 %v1116, %v1364
        %v1374 = vadd.f32 %v1205, %v1365
        %v1375 = vadd.f32 %v1294, %v1366
        %v1376 = vadd.f32 %v1119, %v1364
        %v1377 = vadd.f32 %v1208, %v1365
        %v1378 = vadd.f32 %v1297, %v1366
        %v1379 = vadd.f32 %v1122, %v1364
        %v1380 = vadd.f32 %v1211, %v1365
        %v1381 = vadd.f32 %v1300, %v1366
        %v1382 = vadd.f32 %v1125, %v1364
        %v1383 = vadd.f32 %v1214, %v1365
        %v1384 = vadd.f32 %v1303, %v1366
        %v1385 = vadd.f32 %v1128, %v1364
        %v1386 = vadd.f32 %v1217, %v1365
        %v1387 = vadd.f32 %v1306, %v1366
        %v1388 = vadd.f32 %v1131, %v1364
        %v1389 = vadd.f32 %v1220, %v1365
        %v1390 = vadd.f32 %v1309, %v1366
        %v1391 = vadd.f32 %v1134, %v1364
        %v1392 = vadd.f32 %v1223, %v1365
        %v1393 = vadd.f32 %v1312, %v1366
        %v1394 = vadd.f32 %v1137, %v1364
        %v1395 = vadd.f32 %v1226, %v1365
        %v1396 = vadd.f32 %v1315, %v1366
        %v1397 = vadd.f32 %v1140, %v1364
        %v1398 = vadd.f32 %v1229, %v1365
        %v1399 = vadd.f32 %v1318, %v1366
        %v1400 = vadd.f32 %v1143, %v1364
        %v1401 = vadd.f32 %v1232, %v1365
        %v1402 = vadd.f32 %v1321, %v1366
        %v1403 = vadd.f32 %v1146, %v1364
        %v1404 = vadd.f32 %v1235, %v1365
        %v1405 = vadd.f32 %v1324, %v1366
        %v1406 = vadd.f32 %v1149, %v1364
        %v1407 = vadd.f32 %v1238, %v1365
        %v1408 = vadd.f32 %v1327, %v1366
        %v1409 = vadd.f32 %v1152, %v1364
        %v1410 = vadd.f32 %v1241, %v1365
        %v1411 = vadd.f32 %v1330, %v1366
        %v1412 = vadd.f32 %v1155, %v1364
        %v1413 = vadd.f32 %v1244, %v1365
        %v1414 = vadd.f32 %v1333, %v1366
        %v1415 = vadd.f32 %v1158, %v1364
        %v1416 = vadd.f32 %v1247, %v1365
        %v1417 = vadd.f32 %v1336, %v1366
        %v1418 = vadd.f32 %v1161, %v1364
        %v1419 = vadd.f32 %v1250, %v1365
        %v1420 = vadd.f32 %v1339, %v1366
        %v1421 = vadd.f32 %v1164, %v1364
        %v1422 = vadd.f32 %v1253, %v1365
        %v1423 = vadd.f32 %v1342, %v1366
        %v1424 = vadd.f32 %v1167, %v1364
        %v1425 = vadd.f32 %v1256, %v1365
        %v1426 = vadd.f32 %v1345, %v1366
        %v1427 = vadd.f32 %v1170, %v1364
        %v1428 = vadd.f32 %v1259, %v1365
        %v1429 = vadd.f32 %v1348, %v1366
        %v1430 = vadd.f32 %v1173, %v1364
        %v1431 = vadd.f32 %v1262, %v1365
        %v1432 = vadd.f32 %v1351, %v1366
        %v1433 = vadd.f32 %v1176, %v1364
        %v1434 = vadd.f32 %v1265, %v1365
        %v1435 = vadd.f32 %v1354, %v1366
        %v1436 = vadd.f32 %v1179, %v1364
        %v1437 = vadd.f32 %v1268, %v1365
        %v1438 = vadd.f32 %v1357, %v1366
        %v1439 = vadd.f32 %v1182, %v1364
        %v1440 = vadd.f32 %v1271, %v1365
        %v1441 = vadd.f32 %v1360, %v1366
        %v1442 = vperm.slane %v739, 0
        %v1443 = vlaneseq
        %v1444 = vshrl.u32 %v1443, 7
        %1446 = vset.pattern.permute.xlu0 %v1444
        %1447 = vperm.xlu0 %1446, %v1442
        %v1448 = vpop.permute.xlu0 %1447
        %v1449 = vlaneseq
        %v1450 = vshrl.u32 %v1449, 7
        %v1451 = vadd.s32 %v1450, 8
        %1452 = vset.pattern.permute.xlu0 %v1451
        %1453 = vperm.xlu0 %1452, %v1442
        %v1454 = vpop.permute.xlu0 %1453
        %v1455 = vlaneseq
        %v1456 = vshrl.u32 %v1455, 7
        %v1457 = vadd.s32 %v1456, 16
        %1458 = vset.pattern.permute.xlu0 %v1457
        %1459 = vperm.xlu0 %1458, %v1442
        %v1460 = vpop.permute.xlu0 %1459
        %v1461 = vperm.slane %v739, 1
        %v1462 = vlaneseq
        %v1463 = vshrl.u32 %v1462, 7
        %1465 = vset.pattern.permute.xlu0 %v1463
        %1466 = vperm.xlu0 %1465, %v1461
        %v1467 = vpop.permute.xlu0 %1466
        %v1468 = vlaneseq
        %v1469 = vshrl.u32 %v1468, 7
        %v1470 = vadd.s32 %v1469, 8
        %1471 = vset.pattern.permute.xlu0 %v1470
        %1472 = vperm.xlu0 %1471, %v1461
        %v1473 = vpop.permute.xlu0 %1472
        %v1474 = vlaneseq
        %v1475 = vshrl.u32 %v1474, 7
        %v1476 = vadd.s32 %v1475, 16
        %1477 = vset.pattern.permute.xlu0 %v1476
        %1478 = vperm.xlu0 %1477, %v1461
        %v1479 = vpop.permute.xlu0 %1478
        %v1480 = vperm.slane %v739, 2
        %v1481 = vlaneseq
        %v1482 = vshrl.u32 %v1481, 7
        %1484 = vset.pattern.permute.xlu0 %v1482
        %1485 = vperm.xlu0 %1484, %v1480
        %v1486 = vpop.permute.xlu0 %1485
        %v1487 = vlaneseq
        %v1488 = vshrl.u32 %v1487, 7
        %v1489 = vadd.s32 %v1488, 8
        %1490 = vset.pattern.permute.xlu0 %v1489
        %1491 = vperm.xlu0 %1490, %v1480
        %v1492 = vpop.permute.xlu0 %1491
        %v1493 = vlaneseq
        %v1494 = vshrl.u32 %v1493, 7
        %v1495 = vadd.s32 %v1494, 16
        %1496 = vset.pattern.permute.xlu0 %v1495
        %1497 = vperm.xlu0 %1496, %v1480
        %v1498 = vpop.permute.xlu0 %1497
        %v1499 = vperm.slane %v739, 3
        %v1500 = vlaneseq
        %v1501 = vshrl.u32 %v1500, 7
        %1503 = vset.pattern.permute.xlu0 %v1501
        %1504 = vperm.xlu0 %1503, %v1499
        %v1505 = vpop.permute.xlu0 %1504
        %v1506 = vlaneseq
        %v1507 = vshrl.u32 %v1506, 7
        %v1508 = vadd.s32 %v1507, 8
        %1509 = vset.pattern.permute.xlu0 %v1508
        %1510 = vperm.xlu0 %1509, %v1499
        %v1511 = vpop.permute.xlu0 %1510
        %v1512 = vlaneseq
        %v1513 = vshrl.u32 %v1512, 7
        %v1514 = vadd.s32 %v1513, 16
        %1515 = vset.pattern.permute.xlu0 %v1514
        %1516 = vperm.xlu0 %1515, %v1499
        %v1517 = vpop.permute.xlu0 %1516
        %v1518 = vperm.slane %v739, 4
        %v1519 = vlaneseq
        %v1520 = vshrl.u32 %v1519, 7
        %1522 = vset.pattern.permute.xlu0 %v1520
        %1523 = vperm.xlu0 %1522, %v1518
        %v1524 = vpop.permute.xlu0 %1523
        %v1525 = vlaneseq
        %v1526 = vshrl.u32 %v1525, 7
        %v1527 = vadd.s32 %v1526, 8
        %1528 = vset.pattern.permute.xlu0 %v1527
        %1529 = vperm.xlu0 %1528, %v1518
        %v1530 = vpop.permute.xlu0 %1529
        %v1531 = vlaneseq
        %v1532 = vshrl.u32 %v1531, 7
        %v1533 = vadd.s32 %v1532, 16
        %1534 = vset.pattern.permute.xlu0 %v1533
        %1535 = vperm.xlu0 %1534, %v1518
        %v1536 = vpop.permute.xlu0 %1535
        %v1537 = vperm.slane %v739, 5
        %v1538 = vlaneseq
        %v1539 = vshrl.u32 %v1538, 7
        %1541 = vset.pattern.permute.xlu0 %v1539
        %1542 = vperm.xlu0 %1541, %v1537
        %v1543 = vpop.permute.xlu0 %1542
        %v1544 = vlaneseq
        %v1545 = vshrl.u32 %v1544, 7
        %v1546 = vadd.s32 %v1545, 8
        %1547 = vset.pattern.permute.xlu0 %v1546
        %1548 = vperm.xlu0 %1547, %v1537
        %v1549 = vpop.permute.xlu0 %1548
        %v1550 = vlaneseq
        %v1551 = vshrl.u32 %v1550, 7
        %v1552 = vadd.s32 %v1551, 16
        %1553 = vset.pattern.permute.xlu0 %v1552
        %1554 = vperm.xlu0 %1553, %v1537
        %v1555 = vpop.permute.xlu0 %1554
        %v1556 = vperm.slane %v739, 6
        %v1557 = vlaneseq
        %v1558 = vshrl.u32 %v1557, 7
        %1560 = vset.pattern.permute.xlu0 %v1558
        %1561 = vperm.xlu0 %1560, %v1556
        %v1562 = vpop.permute.xlu0 %1561
        %v1563 = vlaneseq
        %v1564 = vshrl.u32 %v1563, 7
        %v1565 = vadd.s32 %v1564, 8
        %1566 = vset.pattern.permute.xlu0 %v1565
        %1567 = vperm.xlu0 %1566, %v1556
        %v1568 = vpop.permute.xlu0 %1567
        %v1569 = vlaneseq
        %v1570 = vshrl.u32 %v1569, 7
        %v1571 = vadd.s32 %v1570, 16
        %1572 = vset.pattern.permute.xlu0 %v1571
        %1573 = vperm.xlu0 %1572, %v1556
        %v1574 = vpop.permute.xlu0 %1573
        %v1575 = vperm.slane %v739, 7
        %v1576 = vlaneseq
        %v1577 = vshrl.u32 %v1576, 7
        %1579 = vset.pattern.permute.xlu0 %v1577
        %1580 = vperm.xlu0 %1579, %v1575
        %v1581 = vpop.permute.xlu0 %1580
        %v1582 = vlaneseq
        %v1583 = vshrl.u32 %v1582, 7
        %v1584 = vadd.s32 %v1583, 8
        %1585 = vset.pattern.permute.xlu0 %v1584
        %1586 = vperm.xlu0 %1585, %v1575
        %v1587 = vpop.permute.xlu0 %1586
        %v1588 = vlaneseq
        %v1589 = vshrl.u32 %v1588, 7
        %v1590 = vadd.s32 %v1589, 16
        %1591 = vset.pattern.permute.xlu0 %v1590
        %1592 = vperm.xlu0 %1591, %v1575
        %v1593 = vpop.permute.xlu0 %1592
        %v1594 = vld [vmem:[%s9] sm:$0x7]
        %v1596 = vperm.slane %v1594, 0
        %v1597 = vperm.slane %v1594, 1
        %v1598 = vperm.slane %v1594, 2
        %v1602 = vmul.f32 %v1448, %v1596
        %v1603 = vmul.f32 %v1448, %v1597
        %v1604 = vmul.f32 %v1448, %v1598
        %v1605 = vmul.f32 %v1454, %v1596
        %v1606 = vmul.f32 %v1454, %v1597
        %v1607 = vmul.f32 %v1454, %v1598
        %v1608 = vmul.f32 %v1460, %v1596
        %v1609 = vmul.f32 %v1460, %v1597
        %v1610 = vmul.f32 %v1460, %v1598
        %v1611 = vmul.f32 %v1467, %v1596
        %v1612 = vmul.f32 %v1467, %v1597
        %v1613 = vmul.f32 %v1467, %v1598
        %v1614 = vmul.f32 %v1473, %v1596
        %v1615 = vmul.f32 %v1473, %v1597
        %v1616 = vmul.f32 %v1473, %v1598
        %v1617 = vmul.f32 %v1479, %v1596
        %v1618 = vmul.f32 %v1479, %v1597
        %v1619 = vmul.f32 %v1479, %v1598
        %v1620 = vmul.f32 %v1486, %v1596
        %v1621 = vmul.f32 %v1486, %v1597
        %v1622 = vmul.f32 %v1486, %v1598
        %v1623 = vmul.f32 %v1492, %v1596
        %v1624 = vmul.f32 %v1492, %v1597
        %v1625 = vmul.f32 %v1492, %v1598
        %v1626 = vmul.f32 %v1498, %v1596
        %v1627 = vmul.f32 %v1498, %v1597
        %v1628 = vmul.f32 %v1498, %v1598
        %v1629 = vmul.f32 %v1505, %v1596
        %v1630 = vmul.f32 %v1505, %v1597
        %v1631 = vmul.f32 %v1505, %v1598
        %v1632 = vmul.f32 %v1511, %v1596
        %v1633 = vmul.f32 %v1511, %v1597
        %v1634 = vmul.f32 %v1511, %v1598
        %v1635 = vmul.f32 %v1517, %v1596
        %v1636 = vmul.f32 %v1517, %v1597
        %v1637 = vmul.f32 %v1517, %v1598
        %v1638 = vmul.f32 %v1524, %v1596
        %v1639 = vmul.f32 %v1524, %v1597
        %v1640 = vmul.f32 %v1524, %v1598
        %v1641 = vmul.f32 %v1530, %v1596
        %v1642 = vmul.f32 %v1530, %v1597
        %v1643 = vmul.f32 %v1530, %v1598
        %v1644 = vmul.f32 %v1536, %v1596
        %v1645 = vmul.f32 %v1536, %v1597
        %v1646 = vmul.f32 %v1536, %v1598
        %v1647 = vmul.f32 %v1543, %v1596
        %v1648 = vmul.f32 %v1543, %v1597
        %v1649 = vmul.f32 %v1543, %v1598
        %v1650 = vmul.f32 %v1549, %v1596
        %v1651 = vmul.f32 %v1549, %v1597
        %v1652 = vmul.f32 %v1549, %v1598
        %v1653 = vmul.f32 %v1555, %v1596
        %v1654 = vmul.f32 %v1555, %v1597
        %v1655 = vmul.f32 %v1555, %v1598
        %v1656 = vmul.f32 %v1562, %v1596
        %v1657 = vmul.f32 %v1562, %v1597
        %v1658 = vmul.f32 %v1562, %v1598
        %v1659 = vmul.f32 %v1568, %v1596
        %v1660 = vmul.f32 %v1568, %v1597
        %v1661 = vmul.f32 %v1568, %v1598
        %v1662 = vmul.f32 %v1574, %v1596
        %v1663 = vmul.f32 %v1574, %v1597
        %v1664 = vmul.f32 %v1574, %v1598
        %v1665 = vmul.f32 %v1581, %v1596
        %v1666 = vmul.f32 %v1581, %v1597
        %v1667 = vmul.f32 %v1581, %v1598
        %v1668 = vmul.f32 %v1587, %v1596
        %v1669 = vmul.f32 %v1587, %v1597
        %v1670 = vmul.f32 %v1587, %v1598
        %v1671 = vmul.f32 %v1593, %v1596
        %v1672 = vmul.f32 %v1593, %v1597
        %v1673 = vmul.f32 %v1593, %v1598
        %v1674 = vadd.f32 %v1370, %v1602
        %v1675 = vadd.f32 %v1371, %v1603
        %v1676 = vadd.f32 %v1372, %v1604
        %v1677 = vadd.f32 %v1373, %v1605
        %v1678 = vadd.f32 %v1374, %v1606
        %v1679 = vadd.f32 %v1375, %v1607
        %v1680 = vadd.f32 %v1376, %v1608
        %v1681 = vadd.f32 %v1377, %v1609
        %v1682 = vadd.f32 %v1378, %v1610
        %v1683 = vadd.f32 %v1379, %v1611
        %v1684 = vadd.f32 %v1380, %v1612
        %v1685 = vadd.f32 %v1381, %v1613
        %v1686 = vadd.f32 %v1382, %v1614
        %v1687 = vadd.f32 %v1383, %v1615
        %v1688 = vadd.f32 %v1384, %v1616
        %v1689 = vadd.f32 %v1385, %v1617
        %v1690 = vadd.f32 %v1386, %v1618
        %v1691 = vadd.f32 %v1387, %v1619
        %v1692 = vadd.f32 %v1388, %v1620
        %v1693 = vadd.f32 %v1389, %v1621
        %v1694 = vadd.f32 %v1390, %v1622
        %v1695 = vadd.f32 %v1391, %v1623
        %v1696 = vadd.f32 %v1392, %v1624
        %v1697 = vadd.f32 %v1393, %v1625
        %v1698 = vadd.f32 %v1394, %v1626
        %v1699 = vadd.f32 %v1395, %v1627
        %v1700 = vadd.f32 %v1396, %v1628
        %v1701 = vadd.f32 %v1397, %v1629
        %v1702 = vadd.f32 %v1398, %v1630
        %v1703 = vadd.f32 %v1399, %v1631
        %v1704 = vadd.f32 %v1400, %v1632
        %v1705 = vadd.f32 %v1401, %v1633
        %v1706 = vadd.f32 %v1402, %v1634
        %v1707 = vadd.f32 %v1403, %v1635
        %v1708 = vadd.f32 %v1404, %v1636
        %v1709 = vadd.f32 %v1405, %v1637
        %v1710 = vadd.f32 %v1406, %v1638
        %v1711 = vadd.f32 %v1407, %v1639
        %v1712 = vadd.f32 %v1408, %v1640
        %v1713 = vadd.f32 %v1409, %v1641
        %v1714 = vadd.f32 %v1410, %v1642
        %v1715 = vadd.f32 %v1411, %v1643
        %v1716 = vadd.f32 %v1412, %v1644
        %v1717 = vadd.f32 %v1413, %v1645
        %v1718 = vadd.f32 %v1414, %v1646
        %v1719 = vadd.f32 %v1415, %v1647
        %v1720 = vadd.f32 %v1416, %v1648
        %v1721 = vadd.f32 %v1417, %v1649
        %v1722 = vadd.f32 %v1418, %v1650
        %v1723 = vadd.f32 %v1419, %v1651
        %v1724 = vadd.f32 %v1420, %v1652
        %v1725 = vadd.f32 %v1421, %v1653
        %v1726 = vadd.f32 %v1422, %v1654
        %v1727 = vadd.f32 %v1423, %v1655
        %v1728 = vadd.f32 %v1424, %v1656
        %v1729 = vadd.f32 %v1425, %v1657
        %v1730 = vadd.f32 %v1426, %v1658
        %v1731 = vadd.f32 %v1427, %v1659
        %v1732 = vadd.f32 %v1428, %v1660
        %v1733 = vadd.f32 %v1429, %v1661
        %v1734 = vadd.f32 %v1430, %v1662
        %v1735 = vadd.f32 %v1431, %v1663
        %v1736 = vadd.f32 %v1432, %v1664
        %v1737 = vadd.f32 %v1433, %v1665
        %v1738 = vadd.f32 %v1434, %v1666
        %v1739 = vadd.f32 %v1435, %v1667
        %v1740 = vadd.f32 %v1436, %v1668
        %v1741 = vadd.f32 %v1437, %v1669
        %v1742 = vadd.f32 %v1438, %v1670
        %v1743 = vadd.f32 %v1439, %v1671
        %v1744 = vadd.f32 %v1440, %v1672
        %v1745 = vadd.f32 %v1441, %v1673
        %v1746 = vperm.slane %v730, 0
        %v1747 = vlaneseq
        %v1748 = vshrl.u32 %v1747, 7
        %1750 = vset.pattern.permute.xlu0 %v1748
        %1751 = vperm.xlu0 %1750, %v1746
        %v1752 = vpop.permute.xlu0 %1751
        %v1753 = vlaneseq
        %v1754 = vshrl.u32 %v1753, 7
        %v1755 = vadd.s32 %v1754, 8
        %1756 = vset.pattern.permute.xlu0 %v1755
        %1757 = vperm.xlu0 %1756, %v1746
        %v1758 = vpop.permute.xlu0 %1757
        %v1759 = vlaneseq
        %v1760 = vshrl.u32 %v1759, 7
        %v1761 = vadd.s32 %v1760, 16
        %1762 = vset.pattern.permute.xlu0 %v1761
        %1763 = vperm.xlu0 %1762, %v1746
        %v1764 = vpop.permute.xlu0 %1763
        %v1765 = vperm.slane %v730, 1
        %v1766 = vlaneseq
        %v1767 = vshrl.u32 %v1766, 7
        %1769 = vset.pattern.permute.xlu0 %v1767
        %1770 = vperm.xlu0 %1769, %v1765
        %v1771 = vpop.permute.xlu0 %1770
        %v1772 = vlaneseq
        %v1773 = vshrl.u32 %v1772, 7
        %v1774 = vadd.s32 %v1773, 8
        %1775 = vset.pattern.permute.xlu0 %v1774
        %1776 = vperm.xlu0 %1775, %v1765
        %v1777 = vpop.permute.xlu0 %1776
        %v1778 = vlaneseq
        %v1779 = vshrl.u32 %v1778, 7
        %v1780 = vadd.s32 %v1779, 16
        %1781 = vset.pattern.permute.xlu0 %v1780
        %1782 = vperm.xlu0 %1781, %v1765
        %v1783 = vpop.permute.xlu0 %1782
        %v1784 = vperm.slane %v730, 2
        %v1785 = vlaneseq
        %v1786 = vshrl.u32 %v1785, 7
        %1788 = vset.pattern.permute.xlu0 %v1786
        %1789 = vperm.xlu0 %1788, %v1784
        %v1790 = vpop.permute.xlu0 %1789
        %v1791 = vlaneseq
        %v1792 = vshrl.u32 %v1791, 7
        %v1793 = vadd.s32 %v1792, 8
        %1794 = vset.pattern.permute.xlu0 %v1793
        %1795 = vperm.xlu0 %1794, %v1784
        %v1796 = vpop.permute.xlu0 %1795
        %v1797 = vlaneseq
        %v1798 = vshrl.u32 %v1797, 7
        %v1799 = vadd.s32 %v1798, 16
        %1800 = vset.pattern.permute.xlu0 %v1799
        %1801 = vperm.xlu0 %1800, %v1784
        %v1802 = vpop.permute.xlu0 %1801
        %v1803 = vperm.slane %v730, 3
        %v1804 = vlaneseq
        %v1805 = vshrl.u32 %v1804, 7
        %1807 = vset.pattern.permute.xlu0 %v1805
        %1808 = vperm.xlu0 %1807, %v1803
        %v1809 = vpop.permute.xlu0 %1808
        %v1810 = vlaneseq
        %v1811 = vshrl.u32 %v1810, 7
        %v1812 = vadd.s32 %v1811, 8
        %1813 = vset.pattern.permute.xlu0 %v1812
        %1814 = vperm.xlu0 %1813, %v1803
        %v1815 = vpop.permute.xlu0 %1814
        %v1816 = vlaneseq
        %v1817 = vshrl.u32 %v1816, 7
        %v1818 = vadd.s32 %v1817, 16
        %1819 = vset.pattern.permute.xlu0 %v1818
        %1820 = vperm.xlu0 %1819, %v1803
        %v1821 = vpop.permute.xlu0 %1820
        %v1822 = vperm.slane %v730, 4
        %v1823 = vlaneseq
        %v1824 = vshrl.u32 %v1823, 7
        %1826 = vset.pattern.permute.xlu0 %v1824
        %1827 = vperm.xlu0 %1826, %v1822
        %v1828 = vpop.permute.xlu0 %1827
        %v1829 = vlaneseq
        %v1830 = vshrl.u32 %v1829, 7
        %v1831 = vadd.s32 %v1830, 8
        %1832 = vset.pattern.permute.xlu0 %v1831
        %1833 = vperm.xlu0 %1832, %v1822
        %v1834 = vpop.permute.xlu0 %1833
        %v1835 = vlaneseq
        %v1836 = vshrl.u32 %v1835, 7
        %v1837 = vadd.s32 %v1836, 16
        %1838 = vset.pattern.permute.xlu0 %v1837
        %1839 = vperm.xlu0 %1838, %v1822
        %v1840 = vpop.permute.xlu0 %1839
        %v1841 = vperm.slane %v730, 5
        %v1842 = vlaneseq
        %v1843 = vshrl.u32 %v1842, 7
        %1845 = vset.pattern.permute.xlu0 %v1843
        %1846 = vperm.xlu0 %1845, %v1841
        %v1847 = vpop.permute.xlu0 %1846
        %v1848 = vlaneseq
        %v1849 = vshrl.u32 %v1848, 7
        %v1850 = vadd.s32 %v1849, 8
        %1851 = vset.pattern.permute.xlu0 %v1850
        %1852 = vperm.xlu0 %1851, %v1841
        %v1853 = vpop.permute.xlu0 %1852
        %v1854 = vlaneseq
        %v1855 = vshrl.u32 %v1854, 7
        %v1856 = vadd.s32 %v1855, 16
        %1857 = vset.pattern.permute.xlu0 %v1856
        %1858 = vperm.xlu0 %1857, %v1841
        %v1859 = vpop.permute.xlu0 %1858
        %v1860 = vperm.slane %v730, 6
        %v1861 = vlaneseq
        %v1862 = vshrl.u32 %v1861, 7
        %1864 = vset.pattern.permute.xlu0 %v1862
        %1865 = vperm.xlu0 %1864, %v1860
        %v1866 = vpop.permute.xlu0 %1865
        %v1867 = vlaneseq
        %v1868 = vshrl.u32 %v1867, 7
        %v1869 = vadd.s32 %v1868, 8
        %1870 = vset.pattern.permute.xlu0 %v1869
        %1871 = vperm.xlu0 %1870, %v1860
        %v1872 = vpop.permute.xlu0 %1871
        %v1873 = vlaneseq
        %v1874 = vshrl.u32 %v1873, 7
        %v1875 = vadd.s32 %v1874, 16
        %1876 = vset.pattern.permute.xlu0 %v1875
        %1877 = vperm.xlu0 %1876, %v1860
        %v1878 = vpop.permute.xlu0 %1877
        %v1879 = vperm.slane %v730, 7
        %v1880 = vlaneseq
        %v1881 = vshrl.u32 %v1880, 7
        %1883 = vset.pattern.permute.xlu0 %v1881
        %1884 = vperm.xlu0 %1883, %v1879
        %v1885 = vpop.permute.xlu0 %1884
        %v1886 = vlaneseq
        %v1887 = vshrl.u32 %v1886, 7
        %v1888 = vadd.s32 %v1887, 8
        %1889 = vset.pattern.permute.xlu0 %v1888
        %1890 = vperm.xlu0 %1889, %v1879
        %v1891 = vpop.permute.xlu0 %1890
        %v1892 = vlaneseq
        %v1893 = vshrl.u32 %v1892, 7
        %v1894 = vadd.s32 %v1893, 16
        %1895 = vset.pattern.permute.xlu0 %v1894
        %1896 = vperm.xlu0 %1895, %v1879
        %v1897 = vpop.permute.xlu0 %1896
        %v1898 = vmul.f32 %v1674, %v1752
        %v1899 = vmul.f32 %v1675, %v1752
        %v1900 = vmul.f32 %v1676, %v1752
        %v1901 = vmul.f32 %v1677, %v1758
        %v1902 = vmul.f32 %v1678, %v1758
        %v1903 = vmul.f32 %v1679, %v1758
        %v1904 = vmul.f32 %v1680, %v1764
        %v1905 = vmul.f32 %v1681, %v1764
        %v1906 = vmul.f32 %v1682, %v1764
        %v1907 = vmul.f32 %v1683, %v1771
        %v1908 = vmul.f32 %v1684, %v1771
        %v1909 = vmul.f32 %v1685, %v1771
        %v1910 = vmul.f32 %v1686, %v1777
        %v1911 = vmul.f32 %v1687, %v1777
        %v1912 = vmul.f32 %v1688, %v1777
        %v1913 = vmul.f32 %v1689, %v1783
        %v1914 = vmul.f32 %v1690, %v1783
        %v1915 = vmul.f32 %v1691, %v1783
        %v1916 = vmul.f32 %v1692, %v1790
        %v1917 = vmul.f32 %v1693, %v1790
        %v1918 = vmul.f32 %v1694, %v1790
        %v1919 = vmul.f32 %v1695, %v1796
        %v1920 = vmul.f32 %v1696, %v1796
        %v1921 = vmul.f32 %v1697, %v1796
        %v1922 = vmul.f32 %v1698, %v1802
        %v1923 = vmul.f32 %v1699, %v1802
        %v1924 = vmul.f32 %v1700, %v1802
        %v1925 = vmul.f32 %v1701, %v1809
        %v1926 = vmul.f32 %v1702, %v1809
        %v1927 = vmul.f32 %v1703, %v1809
        %v1928 = vmul.f32 %v1704, %v1815
        %v1929 = vmul.f32 %v1705, %v1815
        %v1930 = vmul.f32 %v1706, %v1815
        %v1931 = vmul.f32 %v1707, %v1821
        %v1932 = vmul.f32 %v1708, %v1821
        %v1933 = vmul.f32 %v1709, %v1821
        %v1934 = vmul.f32 %v1710, %v1828
        %v1935 = vmul.f32 %v1711, %v1828
        %v1936 = vmul.f32 %v1712, %v1828
        %v1937 = vmul.f32 %v1713, %v1834
        %v1938 = vmul.f32 %v1714, %v1834
        %v1939 = vmul.f32 %v1715, %v1834
        %v1940 = vmul.f32 %v1716, %v1840
        %v1941 = vmul.f32 %v1717, %v1840
        %v1942 = vmul.f32 %v1718, %v1840
        %v1943 = vmul.f32 %v1719, %v1847
        %v1944 = vmul.f32 %v1720, %v1847
        %v1945 = vmul.f32 %v1721, %v1847
        %v1946 = vmul.f32 %v1722, %v1853
        %v1947 = vmul.f32 %v1723, %v1853
        %v1948 = vmul.f32 %v1724, %v1853
        %v1949 = vmul.f32 %v1725, %v1859
        %v1950 = vmul.f32 %v1726, %v1859
        %v1951 = vmul.f32 %v1727, %v1859
        %v1952 = vmul.f32 %v1728, %v1866
        %v1953 = vmul.f32 %v1729, %v1866
        %v1954 = vmul.f32 %v1730, %v1866
        %v1955 = vmul.f32 %v1731, %v1872
        %v1956 = vmul.f32 %v1732, %v1872
        %v1957 = vmul.f32 %v1733, %v1872
        %v1958 = vmul.f32 %v1734, %v1878
        %v1959 = vmul.f32 %v1735, %v1878
        %v1960 = vmul.f32 %v1736, %v1878
        %v1961 = vmul.f32 %v1737, %v1885
        %v1962 = vmul.f32 %v1738, %v1885
        %v1963 = vmul.f32 %v1739, %v1885
        %v1964 = vmul.f32 %v1740, %v1891
        %v1965 = vmul.f32 %v1741, %v1891
        %v1966 = vmul.f32 %v1742, %v1891
        %v1967 = vmul.f32 %v1743, %v1897
        %v1968 = vmul.f32 %v1744, %v1897
        %v1969 = vmul.f32 %v1745, %v1897
        %s1970 = sshra.s32 %s558, 3
        %s1971 = sand.u32 %s558, 7
        %s1972 = smul.u32 %s1970, 3
        %s1973 = smul.addr %s1972, 8
        %s1974 = scalar_lea.vmem %s4, %s1973
        %v1975 = vld [vmem:[%s1974] sm:$0xff]
        %v1976 = vld [vmem:[%s1974 + $0x8] sm:$0xff]
        %v1977 = vld [vmem:[%s1974 + $0x10] sm:$0xff]
        %v1978 = vld [vmem:[%s1974 + $0x18] sm:$0xff]
        %v1979 = vld [vmem:[%s1974 + $0x20] sm:$0xff]
        %v1980 = vld [vmem:[%s1974 + $0x28] sm:$0xff]
        %v1981 = vld [vmem:[%s1974 + $0x30] sm:$0xff]
        %v1982 = vld [vmem:[%s1974 + $0x38] sm:$0xff]
        %v1983 = vld [vmem:[%s1974 + $0x40] sm:$0xff]
        %s1984 = scalar_lea.vmem %s5, %s558
        %v1985 = vld [vmem:[%s1984] sm:$0xff]
        %v1986 = vld [vmem:[%s1984 + $0x8] sm:$0xff]
        %v1987 = vld [vmem:[%s1984 + $0x10] sm:$0xff]
        %v1988 = vld [vmem:[%s1984 + $0x18] sm:$0xff]
        %v1989 = vld [vmem:[%s1984 + $0x20] sm:$0xff]
        %v1990 = vld [vmem:[%s1984 + $0x28] sm:$0xff]
        %v1991 = vld [vmem:[%s1984 + $0x30] sm:$0xff]
        %v1992 = vld [vmem:[%s1984 + $0x38] sm:$0xff]
        %v1993 = vld [vmem:[%s1984 + $0x40] sm:$0xff]
        %v1994 = vmul.f32 %v1898, %v1975
        %v1995 = vmul.f32 %v1899, %v1976
        %v1996 = vmul.f32 %v1900, %v1977
        %v1997 = vmul.f32 %v1901, %v1978
        %v1998 = vmul.f32 %v1902, %v1979
        %v1999 = vmul.f32 %v1903, %v1980
        %v2000 = vmul.f32 %v1904, %v1981
        %v2001 = vmul.f32 %v1905, %v1982
        %v2002 = vmul.f32 %v1906, %v1983
        %v2003 = vmul.f32 %v1907, %v1975
        %v2004 = vmul.f32 %v1908, %v1976
        %v2005 = vmul.f32 %v1909, %v1977
        %v2006 = vmul.f32 %v1910, %v1978
        %v2007 = vmul.f32 %v1911, %v1979
        %v2008 = vmul.f32 %v1912, %v1980
        %v2009 = vmul.f32 %v1913, %v1981
        %v2010 = vmul.f32 %v1914, %v1982
        %v2011 = vmul.f32 %v1915, %v1983
        %v2012 = vmul.f32 %v1916, %v1975
        %v2013 = vmul.f32 %v1917, %v1976
        %v2014 = vmul.f32 %v1918, %v1977
        %v2015 = vmul.f32 %v1919, %v1978
        %v2016 = vmul.f32 %v1920, %v1979
        %v2017 = vmul.f32 %v1921, %v1980
        %v2018 = vmul.f32 %v1922, %v1981
        %v2019 = vmul.f32 %v1923, %v1982
        %v2020 = vmul.f32 %v1924, %v1983
        %v2021 = vmul.f32 %v1925, %v1975
        %v2022 = vmul.f32 %v1926, %v1976
        %v2023 = vmul.f32 %v1927, %v1977
        %v2024 = vmul.f32 %v1928, %v1978
        %v2025 = vmul.f32 %v1929, %v1979
        %v2026 = vmul.f32 %v1930, %v1980
        %v2027 = vmul.f32 %v1931, %v1981
        %v2028 = vmul.f32 %v1932, %v1982
        %v2029 = vmul.f32 %v1933, %v1983
        %v2030 = vmul.f32 %v1934, %v1975
        %v2031 = vmul.f32 %v1935, %v1976
        %v2032 = vmul.f32 %v1936, %v1977
        %v2033 = vmul.f32 %v1937, %v1978
        %v2034 = vmul.f32 %v1938, %v1979
        %v2035 = vmul.f32 %v1939, %v1980
        %v2036 = vmul.f32 %v1940, %v1981
        %v2037 = vmul.f32 %v1941, %v1982
        %v2038 = vmul.f32 %v1942, %v1983
        %v2039 = vmul.f32 %v1943, %v1975
        %v2040 = vmul.f32 %v1944, %v1976
        %v2041 = vmul.f32 %v1945, %v1977
        %v2042 = vmul.f32 %v1946, %v1978
        %v2043 = vmul.f32 %v1947, %v1979
        %v2044 = vmul.f32 %v1948, %v1980
        %v2045 = vmul.f32 %v1949, %v1981
        %v2046 = vmul.f32 %v1950, %v1982
        %v2047 = vmul.f32 %v1951, %v1983
        %v2048 = vmul.f32 %v1952, %v1975
        %v2049 = vmul.f32 %v1953, %v1976
        %v2050 = vmul.f32 %v1954, %v1977
        %v2051 = vmul.f32 %v1955, %v1978
        %v2052 = vmul.f32 %v1956, %v1979
        %v2053 = vmul.f32 %v1957, %v1980
        %v2054 = vmul.f32 %v1958, %v1981
        %v2055 = vmul.f32 %v1959, %v1982
        %v2056 = vmul.f32 %v1960, %v1983
        %v2057 = vmul.f32 %v1961, %v1975
        %v2058 = vmul.f32 %v1962, %v1976
        %v2059 = vmul.f32 %v1963, %v1977
        %v2060 = vmul.f32 %v1964, %v1978
        %v2061 = vmul.f32 %v1965, %v1979
        %v2062 = vmul.f32 %v1966, %v1980
        %v2063 = vmul.f32 %v1967, %v1981
        %v2064 = vmul.f32 %v1968, %v1982
        %v2065 = vmul.f32 %v1969, %v1983
        %v2066 = vld [vmem:[%s497] sm:$0xff]
        %v2067 = vadd.f32 %v1994, %v1997
        %v2068 = vadd.f32 %v2067, %v2000
        %v2069 = vrot.slane %v2068, 4
        %v2070 = vadd.f32 %v2068, %v2069
        %v2071 = vrot.slane %v2070, 2
        %v2072 = vadd.f32 %v2070, %v2071
        %v2073 = vrot.slane %v2072, 1
        %v2074 = vadd.f32 %v2072, %v2073
        %v2075 = vadd.f32 %v2003, %v2006
        %v2076 = vadd.f32 %v2075, %v2009
        %v2077 = vrot.slane %v2076, 4
        %v2078 = vadd.f32 %v2076, %v2077
        %v2079 = vrot.slane %v2078, 2
        %v2080 = vadd.f32 %v2078, %v2079
        %v2081 = vrot.slane %v2080, 1
        %v2082 = vadd.f32 %v2080, %v2081
        %v2083 = vadd.f32 %v2012, %v2015
        %v2084 = vadd.f32 %v2083, %v2018
        %v2085 = vrot.slane %v2084, 4
        %v2086 = vadd.f32 %v2084, %v2085
        %v2087 = vrot.slane %v2086, 2
        %v2088 = vadd.f32 %v2086, %v2087
        %v2089 = vrot.slane %v2088, 1
        %v2090 = vadd.f32 %v2088, %v2089
        %v2091 = vadd.f32 %v2021, %v2024
        %v2092 = vadd.f32 %v2091, %v2027
        %v2093 = vrot.slane %v2092, 4
        %v2094 = vadd.f32 %v2092, %v2093
        %v2095 = vrot.slane %v2094, 2
        %v2096 = vadd.f32 %v2094, %v2095
        %v2097 = vrot.slane %v2096, 1
        %v2098 = vadd.f32 %v2096, %v2097
        %v2099 = vadd.f32 %v2030, %v2033
        %v2100 = vadd.f32 %v2099, %v2036
        %v2101 = vrot.slane %v2100, 4
        %v2102 = vadd.f32 %v2100, %v2101
        %v2103 = vrot.slane %v2102, 2
        %v2104 = vadd.f32 %v2102, %v2103
        %v2105 = vrot.slane %v2104, 1
        %v2106 = vadd.f32 %v2104, %v2105
        %v2107 = vadd.f32 %v2039, %v2042
        %v2108 = vadd.f32 %v2107, %v2045
        %v2109 = vrot.slane %v2108, 4
        %v2110 = vadd.f32 %v2108, %v2109
        %v2111 = vrot.slane %v2110, 2
        %v2112 = vadd.f32 %v2110, %v2111
        %v2113 = vrot.slane %v2112, 1
        %v2114 = vadd.f32 %v2112, %v2113
        %v2115 = vadd.f32 %v2048, %v2051
        %v2116 = vadd.f32 %v2115, %v2054
        %v2117 = vrot.slane %v2116, 4
        %v2118 = vadd.f32 %v2116, %v2117
        %v2119 = vrot.slane %v2118, 2
        %v2120 = vadd.f32 %v2118, %v2119
        %v2121 = vrot.slane %v2120, 1
        %v2122 = vadd.f32 %v2120, %v2121
        %v2123 = vadd.f32 %v2057, %v2060
        %v2124 = vadd.f32 %v2123, %v2063
        %v2125 = vrot.slane %v2124, 4
        %v2126 = vadd.f32 %v2124, %v2125
        %v2127 = vrot.slane %v2126, 2
        %v2128 = vadd.f32 %v2126, %v2127
        %v2129 = vrot.slane %v2128, 1
        %v2130 = vadd.f32 %v2128, %v2129
        %vm2139 = vcmask 1041409
        %v2140 = vsel %vm2139, %v2082, %v2074
        %vm2141 = vcmask 1042434
        %v2142 = vsel %vm2141, %v2090, %v2140
        %vm2143 = vcmask 1043459
        %v2144 = vsel %vm2143, %v2098, %v2142
        %vm2145 = vcmask 1044484
        %v2146 = vsel %vm2145, %v2106, %v2144
        %vm2147 = vcmask 1045509
        %v2148 = vsel %vm2147, %v2114, %v2146
        %vm2149 = vcmask 1046534
        %v2150 = vsel %vm2149, %v2122, %v2148
        %vm2151 = vcmask 1047559
        %v2152 = vsel %vm2151, %v2130, %v2150
        %v2154 = vadd.f32 %v2066, %v2152
        %2155 = vst [vmem:[%s497] sm:$0xff] %v2154
        %v2156 = vperm.slane %v550, 0
        %v2157 = vlaneseq
        %v2158 = vshrl.u32 %v2157, 7
        %2160 = vset.pattern.permute.xlu0 %v2158
        %2161 = vperm.xlu0 %2160, %v2156
        %v2162 = vpop.permute.xlu0 %2161
        %v2163 = vlaneseq
        %v2164 = vshrl.u32 %v2163, 7
        %v2165 = vadd.s32 %v2164, 8
        %2166 = vset.pattern.permute.xlu0 %v2165
        %2167 = vperm.xlu0 %2166, %v2156
        %v2168 = vpop.permute.xlu0 %2167
        %v2169 = vlaneseq
        %v2170 = vshrl.u32 %v2169, 7
        %v2171 = vadd.s32 %v2170, 16
        %2172 = vset.pattern.permute.xlu0 %v2171
        %2173 = vperm.xlu0 %2172, %v2156
        %v2174 = vpop.permute.xlu0 %2173
        %v2175 = vperm.slane %v550, 1
        %v2176 = vlaneseq
        %v2177 = vshrl.u32 %v2176, 7
        %2179 = vset.pattern.permute.xlu0 %v2177
        %2180 = vperm.xlu0 %2179, %v2175
        %v2181 = vpop.permute.xlu0 %2180
        %v2182 = vlaneseq
        %v2183 = vshrl.u32 %v2182, 7
        %v2184 = vadd.s32 %v2183, 8
        %2185 = vset.pattern.permute.xlu0 %v2184
        %2186 = vperm.xlu0 %2185, %v2175
        %v2187 = vpop.permute.xlu0 %2186
        %v2188 = vlaneseq
        %v2189 = vshrl.u32 %v2188, 7
        %v2190 = vadd.s32 %v2189, 16
        %2191 = vset.pattern.permute.xlu0 %v2190
        %2192 = vperm.xlu0 %2191, %v2175
        %v2193 = vpop.permute.xlu0 %2192
        %v2194 = vperm.slane %v550, 2
        %v2195 = vlaneseq
        %v2196 = vshrl.u32 %v2195, 7
        %2198 = vset.pattern.permute.xlu0 %v2196
        %2199 = vperm.xlu0 %2198, %v2194
        %v2200 = vpop.permute.xlu0 %2199
        %v2201 = vlaneseq
        %v2202 = vshrl.u32 %v2201, 7
        %v2203 = vadd.s32 %v2202, 8
        %2204 = vset.pattern.permute.xlu0 %v2203
        %2205 = vperm.xlu0 %2204, %v2194
        %v2206 = vpop.permute.xlu0 %2205
        %v2207 = vlaneseq
        %v2208 = vshrl.u32 %v2207, 7
        %v2209 = vadd.s32 %v2208, 16
        %2210 = vset.pattern.permute.xlu0 %v2209
        %2211 = vperm.xlu0 %2210, %v2194
        %v2212 = vpop.permute.xlu0 %2211
        %v2213 = vperm.slane %v550, 3
        %v2214 = vlaneseq
        %v2215 = vshrl.u32 %v2214, 7
        %2217 = vset.pattern.permute.xlu0 %v2215
        %2218 = vperm.xlu0 %2217, %v2213
        %v2219 = vpop.permute.xlu0 %2218
        %v2220 = vlaneseq
        %v2221 = vshrl.u32 %v2220, 7
        %v2222 = vadd.s32 %v2221, 8
        %2223 = vset.pattern.permute.xlu0 %v2222
        %2224 = vperm.xlu0 %2223, %v2213
        %v2225 = vpop.permute.xlu0 %2224
        %v2226 = vlaneseq
        %v2227 = vshrl.u32 %v2226, 7
        %v2228 = vadd.s32 %v2227, 16
        %2229 = vset.pattern.permute.xlu0 %v2228
        %2230 = vperm.xlu0 %2229, %v2213
        %v2231 = vpop.permute.xlu0 %2230
        %v2232 = vperm.slane %v550, 4
        %v2233 = vlaneseq
        %v2234 = vshrl.u32 %v2233, 7
        %2236 = vset.pattern.permute.xlu0 %v2234
        %2237 = vperm.xlu0 %2236, %v2232
        %v2238 = vpop.permute.xlu0 %2237
        %v2239 = vlaneseq
        %v2240 = vshrl.u32 %v2239, 7
        %v2241 = vadd.s32 %v2240, 8
        %2242 = vset.pattern.permute.xlu0 %v2241
        %2243 = vperm.xlu0 %2242, %v2232
        %v2244 = vpop.permute.xlu0 %2243
        %v2245 = vlaneseq
        %v2246 = vshrl.u32 %v2245, 7
        %v2247 = vadd.s32 %v2246, 16
        %2248 = vset.pattern.permute.xlu0 %v2247
        %2249 = vperm.xlu0 %2248, %v2232
        %v2250 = vpop.permute.xlu0 %2249
        %v2251 = vperm.slane %v550, 5
        %v2252 = vlaneseq
        %v2253 = vshrl.u32 %v2252, 7
        %2255 = vset.pattern.permute.xlu0 %v2253
        %2256 = vperm.xlu0 %2255, %v2251
        %v2257 = vpop.permute.xlu0 %2256
        %v2258 = vlaneseq
        %v2259 = vshrl.u32 %v2258, 7
        %v2260 = vadd.s32 %v2259, 8
        %2261 = vset.pattern.permute.xlu0 %v2260
        %2262 = vperm.xlu0 %2261, %v2251
        %v2263 = vpop.permute.xlu0 %2262
        %v2264 = vlaneseq
        %v2265 = vshrl.u32 %v2264, 7
        %v2266 = vadd.s32 %v2265, 16
        %2267 = vset.pattern.permute.xlu0 %v2266
        %2268 = vperm.xlu0 %2267, %v2251
        %v2269 = vpop.permute.xlu0 %2268
        %v2270 = vperm.slane %v550, 6
        %v2271 = vlaneseq
        %v2272 = vshrl.u32 %v2271, 7
        %2274 = vset.pattern.permute.xlu0 %v2272
        %2275 = vperm.xlu0 %2274, %v2270
        %v2276 = vpop.permute.xlu0 %2275
        %v2277 = vlaneseq
        %v2278 = vshrl.u32 %v2277, 7
        %v2279 = vadd.s32 %v2278, 8
        %2280 = vset.pattern.permute.xlu0 %v2279
        %2281 = vperm.xlu0 %2280, %v2270
        %v2282 = vpop.permute.xlu0 %2281
        %v2283 = vlaneseq
        %v2284 = vshrl.u32 %v2283, 7
        %v2285 = vadd.s32 %v2284, 16
        %2286 = vset.pattern.permute.xlu0 %v2285
        %2287 = vperm.xlu0 %2286, %v2270
        %v2288 = vpop.permute.xlu0 %2287
        %v2289 = vperm.slane %v550, 7
        %v2290 = vlaneseq
        %v2291 = vshrl.u32 %v2290, 7
        %2293 = vset.pattern.permute.xlu0 %v2291
        %2294 = vperm.xlu0 %2293, %v2289
        %v2295 = vpop.permute.xlu0 %2294
        %v2296 = vlaneseq
        %v2297 = vshrl.u32 %v2296, 7
        %v2298 = vadd.s32 %v2297, 8
        %2299 = vset.pattern.permute.xlu0 %v2298
        %2300 = vperm.xlu0 %2299, %v2289
        %v2301 = vpop.permute.xlu0 %2300
        %v2302 = vlaneseq
        %v2303 = vshrl.u32 %v2302, 7
        %v2304 = vadd.s32 %v2303, 16
        %2305 = vset.pattern.permute.xlu0 %v2304
        %2306 = vperm.xlu0 %2305, %v2289
        %v2307 = vpop.permute.xlu0 %2306
        %v2308 = vmul.f32 %v1995, %v2162
        %v2309 = vmul.f32 %v1998, %v2168
        %v2310 = vmul.f32 %v2001, %v2174
        %v2311 = vmul.f32 %v2004, %v2181
        %v2312 = vmul.f32 %v2007, %v2187
        %v2313 = vmul.f32 %v2010, %v2193
        %v2314 = vmul.f32 %v2013, %v2200
        %v2315 = vmul.f32 %v2016, %v2206
        %v2316 = vmul.f32 %v2019, %v2212
        %v2317 = vmul.f32 %v2022, %v2219
        %v2318 = vmul.f32 %v2025, %v2225
        %v2319 = vmul.f32 %v2028, %v2231
        %v2320 = vmul.f32 %v2031, %v2238
        %v2321 = vmul.f32 %v2034, %v2244
        %v2322 = vmul.f32 %v2037, %v2250
        %v2323 = vmul.f32 %v2040, %v2257
        %v2324 = vmul.f32 %v2043, %v2263
        %v2325 = vmul.f32 %v2046, %v2269
        %v2326 = vmul.f32 %v2049, %v2276
        %v2327 = vmul.f32 %v2052, %v2282
        %v2328 = vmul.f32 %v2055, %v2288
        %v2329 = vmul.f32 %v2058, %v2295
        %v2330 = vmul.f32 %v2061, %v2301
        %v2331 = vmul.f32 %v2064, %v2307
        %v2332 = vmul.f32 %v1996, %v1985
        %v2333 = vmul.f32 %v1999, %v1986
        %v2334 = vmul.f32 %v2002, %v1987
        %v2335 = vmul.f32 %v2005, %v1985
        %v2336 = vmul.f32 %v2008, %v1986
        %v2337 = vmul.f32 %v2011, %v1987
        %v2338 = vmul.f32 %v2014, %v1985
        %v2339 = vmul.f32 %v2017, %v1986
        %v2340 = vmul.f32 %v2020, %v1987
        %v2341 = vmul.f32 %v2023, %v1985
        %v2342 = vmul.f32 %v2026, %v1986
        %v2343 = vmul.f32 %v2029, %v1987
        %v2344 = vmul.f32 %v2032, %v1985
        %v2345 = vmul.f32 %v2035, %v1986
        %v2346 = vmul.f32 %v2038, %v1987
        %v2347 = vmul.f32 %v2041, %v1985
        %v2348 = vmul.f32 %v2044, %v1986
        %v2349 = vmul.f32 %v2047, %v1987
        %v2350 = vmul.f32 %v2050, %v1985
        %v2351 = vmul.f32 %v2053, %v1986
        %v2352 = vmul.f32 %v2056, %v1987
        %v2353 = vmul.f32 %v2059, %v1985
        %v2354 = vmul.f32 %v2062, %v1986
        %v2355 = vmul.f32 %v2065, %v1987
        %v2356 = vadd.f32 %v2308, %v2332
        %v2357 = vadd.f32 %v2309, %v2333
        %v2358 = vadd.f32 %v2310, %v2334
        %v2359 = vadd.f32 %v2311, %v2335
        %v2360 = vadd.f32 %v2312, %v2336
        %v2361 = vadd.f32 %v2313, %v2337
        %v2362 = vadd.f32 %v2314, %v2338
        %v2363 = vadd.f32 %v2315, %v2339
        %v2364 = vadd.f32 %v2316, %v2340
        %v2365 = vadd.f32 %v2317, %v2341
        %v2366 = vadd.f32 %v2318, %v2342
        %v2367 = vadd.f32 %v2319, %v2343
        %v2368 = vadd.f32 %v2320, %v2344
        %v2369 = vadd.f32 %v2321, %v2345
        %v2370 = vadd.f32 %v2322, %v2346
        %v2371 = vadd.f32 %v2323, %v2347
        %v2372 = vadd.f32 %v2324, %v2348
        %v2373 = vadd.f32 %v2325, %v2349
        %v2374 = vadd.f32 %v2326, %v2350
        %v2375 = vadd.f32 %v2327, %v2351
        %v2376 = vadd.f32 %v2328, %v2352
        %v2377 = vadd.f32 %v2329, %v2353
        %v2378 = vadd.f32 %v2330, %v2354
        %v2379 = vadd.f32 %v2331, %v2355
        %v2380 = vadd.f32 %v2356, %v2357
        %v2381 = vadd.f32 %v2380, %v2358
        %v2382 = vrot.slane %v2381, 4
        %v2383 = vadd.f32 %v2381, %v2382
        %v2384 = vrot.slane %v2383, 2
        %v2385 = vadd.f32 %v2383, %v2384
        %v2386 = vrot.slane %v2385, 1
        %v2387 = vadd.f32 %v2385, %v2386
        %v2388 = vadd.f32 %v2359, %v2360
        %v2389 = vadd.f32 %v2388, %v2361
        %v2390 = vrot.slane %v2389, 4
        %v2391 = vadd.f32 %v2389, %v2390
        %v2392 = vrot.slane %v2391, 2
        %v2393 = vadd.f32 %v2391, %v2392
        %v2394 = vrot.slane %v2393, 1
        %v2395 = vadd.f32 %v2393, %v2394
        %v2396 = vadd.f32 %v2362, %v2363
        %v2397 = vadd.f32 %v2396, %v2364
        %v2398 = vrot.slane %v2397, 4
        %v2399 = vadd.f32 %v2397, %v2398
        %v2400 = vrot.slane %v2399, 2
        %v2401 = vadd.f32 %v2399, %v2400
        %v2402 = vrot.slane %v2401, 1
        %v2403 = vadd.f32 %v2401, %v2402
        %v2404 = vadd.f32 %v2365, %v2366
        %v2405 = vadd.f32 %v2404, %v2367
        %v2406 = vrot.slane %v2405, 4
        %v2407 = vadd.f32 %v2405, %v2406
        %v2408 = vrot.slane %v2407, 2
        %v2409 = vadd.f32 %v2407, %v2408
        %v2410 = vrot.slane %v2409, 1
        %v2411 = vadd.f32 %v2409, %v2410
        %v2412 = vadd.f32 %v2368, %v2369
        %v2413 = vadd.f32 %v2412, %v2370
        %v2414 = vrot.slane %v2413, 4
        %v2415 = vadd.f32 %v2413, %v2414
        %v2416 = vrot.slane %v2415, 2
        %v2417 = vadd.f32 %v2415, %v2416
        %v2418 = vrot.slane %v2417, 1
        %v2419 = vadd.f32 %v2417, %v2418
        %v2420 = vadd.f32 %v2371, %v2372
        %v2421 = vadd.f32 %v2420, %v2373
        %v2422 = vrot.slane %v2421, 4
        %v2423 = vadd.f32 %v2421, %v2422
        %v2424 = vrot.slane %v2423, 2
        %v2425 = vadd.f32 %v2423, %v2424
        %v2426 = vrot.slane %v2425, 1
        %v2427 = vadd.f32 %v2425, %v2426
        %v2428 = vadd.f32 %v2374, %v2375
        %v2429 = vadd.f32 %v2428, %v2376
        %v2430 = vrot.slane %v2429, 4
        %v2431 = vadd.f32 %v2429, %v2430
        %v2432 = vrot.slane %v2431, 2
        %v2433 = vadd.f32 %v2431, %v2432
        %v2434 = vrot.slane %v2433, 1
        %v2435 = vadd.f32 %v2433, %v2434
        %v2436 = vadd.f32 %v2377, %v2378
        %v2437 = vadd.f32 %v2436, %v2379
        %v2438 = vrot.slane %v2437, 4
        %v2439 = vadd.f32 %v2437, %v2438
        %v2440 = vrot.slane %v2439, 2
        %v2441 = vadd.f32 %v2439, %v2440
        %v2442 = vrot.slane %v2441, 1
        %v2443 = vadd.f32 %v2441, %v2442
        %v2444 = vperm.slane %v551, 0
        %v2445 = vlaneseq
        %v2446 = vshrl.u32 %v2445, 7
        %2448 = vset.pattern.permute.xlu0 %v2446
        %2449 = vperm.xlu0 %2448, %v2444
        %v2450 = vpop.permute.xlu0 %2449
        %v2451 = vlaneseq
        %v2452 = vshrl.u32 %v2451, 7
        %v2453 = vadd.s32 %v2452, 8
        %2454 = vset.pattern.permute.xlu0 %v2453
        %2455 = vperm.xlu0 %2454, %v2444
        %v2456 = vpop.permute.xlu0 %2455
        %v2457 = vlaneseq
        %v2458 = vshrl.u32 %v2457, 7
        %v2459 = vadd.s32 %v2458, 16
        %2460 = vset.pattern.permute.xlu0 %v2459
        %2461 = vperm.xlu0 %2460, %v2444
        %v2462 = vpop.permute.xlu0 %2461
        %v2463 = vperm.slane %v551, 1
        %v2464 = vlaneseq
        %v2465 = vshrl.u32 %v2464, 7
        %2467 = vset.pattern.permute.xlu0 %v2465
        %2468 = vperm.xlu0 %2467, %v2463
        %v2469 = vpop.permute.xlu0 %2468
        %v2470 = vlaneseq
        %v2471 = vshrl.u32 %v2470, 7
        %v2472 = vadd.s32 %v2471, 8
        %2473 = vset.pattern.permute.xlu0 %v2472
        %2474 = vperm.xlu0 %2473, %v2463
        %v2475 = vpop.permute.xlu0 %2474
        %v2476 = vlaneseq
        %v2477 = vshrl.u32 %v2476, 7
        %v2478 = vadd.s32 %v2477, 16
        %2479 = vset.pattern.permute.xlu0 %v2478
        %2480 = vperm.xlu0 %2479, %v2463
        %v2481 = vpop.permute.xlu0 %2480
        %v2482 = vperm.slane %v551, 2
        %v2483 = vlaneseq
        %v2484 = vshrl.u32 %v2483, 7
        %2486 = vset.pattern.permute.xlu0 %v2484
        %2487 = vperm.xlu0 %2486, %v2482
        %v2488 = vpop.permute.xlu0 %2487
        %v2489 = vlaneseq
        %v2490 = vshrl.u32 %v2489, 7
        %v2491 = vadd.s32 %v2490, 8
        %2492 = vset.pattern.permute.xlu0 %v2491
        %2493 = vperm.xlu0 %2492, %v2482
        %v2494 = vpop.permute.xlu0 %2493
        %v2495 = vlaneseq
        %v2496 = vshrl.u32 %v2495, 7
        %v2497 = vadd.s32 %v2496, 16
        %2498 = vset.pattern.permute.xlu0 %v2497
        %2499 = vperm.xlu0 %2498, %v2482
        %v2500 = vpop.permute.xlu0 %2499
        %v2501 = vperm.slane %v551, 3
        %v2502 = vlaneseq
        %v2503 = vshrl.u32 %v2502, 7
        %2505 = vset.pattern.permute.xlu0 %v2503
        %2506 = vperm.xlu0 %2505, %v2501
        %v2507 = vpop.permute.xlu0 %2506
        %v2508 = vlaneseq
        %v2509 = vshrl.u32 %v2508, 7
        %v2510 = vadd.s32 %v2509, 8
        %2511 = vset.pattern.permute.xlu0 %v2510
        %2512 = vperm.xlu0 %2511, %v2501
        %v2513 = vpop.permute.xlu0 %2512
        %v2514 = vlaneseq
        %v2515 = vshrl.u32 %v2514, 7
        %v2516 = vadd.s32 %v2515, 16
        %2517 = vset.pattern.permute.xlu0 %v2516
        %2518 = vperm.xlu0 %2517, %v2501
        %v2519 = vpop.permute.xlu0 %2518
        %v2520 = vperm.slane %v551, 4
        %v2521 = vlaneseq
        %v2522 = vshrl.u32 %v2521, 7
        %2524 = vset.pattern.permute.xlu0 %v2522
        %2525 = vperm.xlu0 %2524, %v2520
        %v2526 = vpop.permute.xlu0 %2525
        %v2527 = vlaneseq
        %v2528 = vshrl.u32 %v2527, 7
        %v2529 = vadd.s32 %v2528, 8
        %2530 = vset.pattern.permute.xlu0 %v2529
        %2531 = vperm.xlu0 %2530, %v2520
        %v2532 = vpop.permute.xlu0 %2531
        %v2533 = vlaneseq
        %v2534 = vshrl.u32 %v2533, 7
        %v2535 = vadd.s32 %v2534, 16
        %2536 = vset.pattern.permute.xlu0 %v2535
        %2537 = vperm.xlu0 %2536, %v2520
        %v2538 = vpop.permute.xlu0 %2537
        %v2539 = vperm.slane %v551, 5
        %v2540 = vlaneseq
        %v2541 = vshrl.u32 %v2540, 7
        %2543 = vset.pattern.permute.xlu0 %v2541
        %2544 = vperm.xlu0 %2543, %v2539
        %v2545 = vpop.permute.xlu0 %2544
        %v2546 = vlaneseq
        %v2547 = vshrl.u32 %v2546, 7
        %v2548 = vadd.s32 %v2547, 8
        %2549 = vset.pattern.permute.xlu0 %v2548
        %2550 = vperm.xlu0 %2549, %v2539
        %v2551 = vpop.permute.xlu0 %2550
        %v2552 = vlaneseq
        %v2553 = vshrl.u32 %v2552, 7
        %v2554 = vadd.s32 %v2553, 16
        %2555 = vset.pattern.permute.xlu0 %v2554
        %2556 = vperm.xlu0 %2555, %v2539
        %v2557 = vpop.permute.xlu0 %2556
        %v2558 = vperm.slane %v551, 6
        %v2559 = vlaneseq
        %v2560 = vshrl.u32 %v2559, 7
        %2562 = vset.pattern.permute.xlu0 %v2560
        %2563 = vperm.xlu0 %2562, %v2558
        %v2564 = vpop.permute.xlu0 %2563
        %v2565 = vlaneseq
        %v2566 = vshrl.u32 %v2565, 7
        %v2567 = vadd.s32 %v2566, 8
        %2568 = vset.pattern.permute.xlu0 %v2567
        %2569 = vperm.xlu0 %2568, %v2558
        %v2570 = vpop.permute.xlu0 %2569
        %v2571 = vlaneseq
        %v2572 = vshrl.u32 %v2571, 7
        %v2573 = vadd.s32 %v2572, 16
        %2574 = vset.pattern.permute.xlu0 %v2573
        %2575 = vperm.xlu0 %2574, %v2558
        %v2576 = vpop.permute.xlu0 %2575
        %v2577 = vperm.slane %v551, 7
        %v2578 = vlaneseq
        %v2579 = vshrl.u32 %v2578, 7
        %2581 = vset.pattern.permute.xlu0 %v2579
        %2582 = vperm.xlu0 %2581, %v2577
        %v2583 = vpop.permute.xlu0 %2582
        %v2584 = vlaneseq
        %v2585 = vshrl.u32 %v2584, 7
        %v2586 = vadd.s32 %v2585, 8
        %2587 = vset.pattern.permute.xlu0 %v2586
        %2588 = vperm.xlu0 %2587, %v2577
        %v2589 = vpop.permute.xlu0 %2588
        %v2590 = vlaneseq
        %v2591 = vshrl.u32 %v2590, 7
        %v2592 = vadd.s32 %v2591, 16
        %2593 = vset.pattern.permute.xlu0 %v2592
        %2594 = vperm.xlu0 %2593, %v2577
        %v2595 = vpop.permute.xlu0 %2594
        %v2596 = vmul.f32 %v1995, %v2450
        %v2597 = vmul.f32 %v1998, %v2456
        %v2598 = vmul.f32 %v2001, %v2462
        %v2599 = vmul.f32 %v2004, %v2469
        %v2600 = vmul.f32 %v2007, %v2475
        %v2601 = vmul.f32 %v2010, %v2481
        %v2602 = vmul.f32 %v2013, %v2488
        %v2603 = vmul.f32 %v2016, %v2494
        %v2604 = vmul.f32 %v2019, %v2500
        %v2605 = vmul.f32 %v2022, %v2507
        %v2606 = vmul.f32 %v2025, %v2513
        %v2607 = vmul.f32 %v2028, %v2519
        %v2608 = vmul.f32 %v2031, %v2526
        %v2609 = vmul.f32 %v2034, %v2532
        %v2610 = vmul.f32 %v2037, %v2538
        %v2611 = vmul.f32 %v2040, %v2545
        %v2612 = vmul.f32 %v2043, %v2551
        %v2613 = vmul.f32 %v2046, %v2557
        %v2614 = vmul.f32 %v2049, %v2564
        %v2615 = vmul.f32 %v2052, %v2570
        %v2616 = vmul.f32 %v2055, %v2576
        %v2617 = vmul.f32 %v2058, %v2583
        %v2618 = vmul.f32 %v2061, %v2589
        %v2619 = vmul.f32 %v2064, %v2595
        %v2620 = vmul.f32 %v1996, %v1988
        %v2621 = vmul.f32 %v1999, %v1989
        %v2622 = vmul.f32 %v2002, %v1990
        %v2623 = vmul.f32 %v2005, %v1988
        %v2624 = vmul.f32 %v2008, %v1989
        %v2625 = vmul.f32 %v2011, %v1990
        %v2626 = vmul.f32 %v2014, %v1988
        %v2627 = vmul.f32 %v2017, %v1989
        %v2628 = vmul.f32 %v2020, %v1990
        %v2629 = vmul.f32 %v2023, %v1988
        %v2630 = vmul.f32 %v2026, %v1989
        %v2631 = vmul.f32 %v2029, %v1990
        %v2632 = vmul.f32 %v2032, %v1988
        %v2633 = vmul.f32 %v2035, %v1989
        %v2634 = vmul.f32 %v2038, %v1990
        %v2635 = vmul.f32 %v2041, %v1988
        %v2636 = vmul.f32 %v2044, %v1989
        %v2637 = vmul.f32 %v2047, %v1990
        %v2638 = vmul.f32 %v2050, %v1988
        %v2639 = vmul.f32 %v2053, %v1989
        %v2640 = vmul.f32 %v2056, %v1990
        %v2641 = vmul.f32 %v2059, %v1988
        %v2642 = vmul.f32 %v2062, %v1989
        %v2643 = vmul.f32 %v2065, %v1990
        %v2644 = vadd.f32 %v2596, %v2620
        %v2645 = vadd.f32 %v2597, %v2621
        %v2646 = vadd.f32 %v2598, %v2622
        %v2647 = vadd.f32 %v2599, %v2623
        %v2648 = vadd.f32 %v2600, %v2624
        %v2649 = vadd.f32 %v2601, %v2625
        %v2650 = vadd.f32 %v2602, %v2626
        %v2651 = vadd.f32 %v2603, %v2627
        %v2652 = vadd.f32 %v2604, %v2628
        %v2653 = vadd.f32 %v2605, %v2629
        %v2654 = vadd.f32 %v2606, %v2630
        %v2655 = vadd.f32 %v2607, %v2631
        %v2656 = vadd.f32 %v2608, %v2632
        %v2657 = vadd.f32 %v2609, %v2633
        %v2658 = vadd.f32 %v2610, %v2634
        %v2659 = vadd.f32 %v2611, %v2635
        %v2660 = vadd.f32 %v2612, %v2636
        %v2661 = vadd.f32 %v2613, %v2637
        %v2662 = vadd.f32 %v2614, %v2638
        %v2663 = vadd.f32 %v2615, %v2639
        %v2664 = vadd.f32 %v2616, %v2640
        %v2665 = vadd.f32 %v2617, %v2641
        %v2666 = vadd.f32 %v2618, %v2642
        %v2667 = vadd.f32 %v2619, %v2643
        %v2668 = vadd.f32 %v2644, %v2645
        %v2669 = vadd.f32 %v2668, %v2646
        %v2670 = vrot.slane %v2669, 4
        %v2671 = vadd.f32 %v2669, %v2670
        %v2672 = vrot.slane %v2671, 2
        %v2673 = vadd.f32 %v2671, %v2672
        %v2674 = vrot.slane %v2673, 1
        %v2675 = vadd.f32 %v2673, %v2674
        %v2676 = vadd.f32 %v2647, %v2648
        %v2677 = vadd.f32 %v2676, %v2649
        %v2678 = vrot.slane %v2677, 4
        %v2679 = vadd.f32 %v2677, %v2678
        %v2680 = vrot.slane %v2679, 2
        %v2681 = vadd.f32 %v2679, %v2680
        %v2682 = vrot.slane %v2681, 1
        %v2683 = vadd.f32 %v2681, %v2682
        %v2684 = vadd.f32 %v2650, %v2651
        %v2685 = vadd.f32 %v2684, %v2652
        %v2686 = vrot.slane %v2685, 4
        %v2687 = vadd.f32 %v2685, %v2686
        %v2688 = vrot.slane %v2687, 2
        %v2689 = vadd.f32 %v2687, %v2688
        %v2690 = vrot.slane %v2689, 1
        %v2691 = vadd.f32 %v2689, %v2690
        %v2692 = vadd.f32 %v2653, %v2654
        %v2693 = vadd.f32 %v2692, %v2655
        %v2694 = vrot.slane %v2693, 4
        %v2695 = vadd.f32 %v2693, %v2694
        %v2696 = vrot.slane %v2695, 2
        %v2697 = vadd.f32 %v2695, %v2696
        %v2698 = vrot.slane %v2697, 1
        %v2699 = vadd.f32 %v2697, %v2698
        %v2700 = vadd.f32 %v2656, %v2657
        %v2701 = vadd.f32 %v2700, %v2658
        %v2702 = vrot.slane %v2701, 4
        %v2703 = vadd.f32 %v2701, %v2702
        %v2704 = vrot.slane %v2703, 2
        %v2705 = vadd.f32 %v2703, %v2704
        %v2706 = vrot.slane %v2705, 1
        %v2707 = vadd.f32 %v2705, %v2706
        %v2708 = vadd.f32 %v2659, %v2660
        %v2709 = vadd.f32 %v2708, %v2661
        %v2710 = vrot.slane %v2709, 4
        %v2711 = vadd.f32 %v2709, %v2710
        %v2712 = vrot.slane %v2711, 2
        %v2713 = vadd.f32 %v2711, %v2712
        %v2714 = vrot.slane %v2713, 1
        %v2715 = vadd.f32 %v2713, %v2714
        %v2716 = vadd.f32 %v2662, %v2663
        %v2717 = vadd.f32 %v2716, %v2664
        %v2718 = vrot.slane %v2717, 4
        %v2719 = vadd.f32 %v2717, %v2718
        %v2720 = vrot.slane %v2719, 2
        %v2721 = vadd.f32 %v2719, %v2720
        %v2722 = vrot.slane %v2721, 1
        %v2723 = vadd.f32 %v2721, %v2722
        %v2724 = vadd.f32 %v2665, %v2666
        %v2725 = vadd.f32 %v2724, %v2667
        %v2726 = vrot.slane %v2725, 4
        %v2727 = vadd.f32 %v2725, %v2726
        %v2728 = vrot.slane %v2727, 2
        %v2729 = vadd.f32 %v2727, %v2728
        %v2730 = vrot.slane %v2729, 1
        %v2731 = vadd.f32 %v2729, %v2730
        %v2732 = vperm.slane %v552, 0
        %v2733 = vlaneseq
        %v2734 = vshrl.u32 %v2733, 7
        %2736 = vset.pattern.permute.xlu0 %v2734
        %2737 = vperm.xlu0 %2736, %v2732
        %v2738 = vpop.permute.xlu0 %2737
        %v2739 = vlaneseq
        %v2740 = vshrl.u32 %v2739, 7
        %v2741 = vadd.s32 %v2740, 8
        %2742 = vset.pattern.permute.xlu0 %v2741
        %2743 = vperm.xlu0 %2742, %v2732
        %v2744 = vpop.permute.xlu0 %2743
        %v2745 = vlaneseq
        %v2746 = vshrl.u32 %v2745, 7
        %v2747 = vadd.s32 %v2746, 16
        %2748 = vset.pattern.permute.xlu0 %v2747
        %2749 = vperm.xlu0 %2748, %v2732
        %v2750 = vpop.permute.xlu0 %2749
        %v2751 = vperm.slane %v552, 1
        %v2752 = vlaneseq
        %v2753 = vshrl.u32 %v2752, 7
        %2755 = vset.pattern.permute.xlu0 %v2753
        %2756 = vperm.xlu0 %2755, %v2751
        %v2757 = vpop.permute.xlu0 %2756
        %v2758 = vlaneseq
        %v2759 = vshrl.u32 %v2758, 7
        %v2760 = vadd.s32 %v2759, 8
        %2761 = vset.pattern.permute.xlu0 %v2760
        %2762 = vperm.xlu0 %2761, %v2751
        %v2763 = vpop.permute.xlu0 %2762
        %v2764 = vlaneseq
        %v2765 = vshrl.u32 %v2764, 7
        %v2766 = vadd.s32 %v2765, 16
        %2767 = vset.pattern.permute.xlu0 %v2766
        %2768 = vperm.xlu0 %2767, %v2751
        %v2769 = vpop.permute.xlu0 %2768
        %v2770 = vperm.slane %v552, 2
        %v2771 = vlaneseq
        %v2772 = vshrl.u32 %v2771, 7
        %2774 = vset.pattern.permute.xlu0 %v2772
        %2775 = vperm.xlu0 %2774, %v2770
        %v2776 = vpop.permute.xlu0 %2775
        %v2777 = vlaneseq
        %v2778 = vshrl.u32 %v2777, 7
        %v2779 = vadd.s32 %v2778, 8
        %2780 = vset.pattern.permute.xlu0 %v2779
        %2781 = vperm.xlu0 %2780, %v2770
        %v2782 = vpop.permute.xlu0 %2781
        %v2783 = vlaneseq
        %v2784 = vshrl.u32 %v2783, 7
        %v2785 = vadd.s32 %v2784, 16
        %2786 = vset.pattern.permute.xlu0 %v2785
        %2787 = vperm.xlu0 %2786, %v2770
        %v2788 = vpop.permute.xlu0 %2787
        %v2789 = vperm.slane %v552, 3
        %v2790 = vlaneseq
        %v2791 = vshrl.u32 %v2790, 7
        %2793 = vset.pattern.permute.xlu0 %v2791
        %2794 = vperm.xlu0 %2793, %v2789
        %v2795 = vpop.permute.xlu0 %2794
        %v2796 = vlaneseq
        %v2797 = vshrl.u32 %v2796, 7
        %v2798 = vadd.s32 %v2797, 8
        %2799 = vset.pattern.permute.xlu0 %v2798
        %2800 = vperm.xlu0 %2799, %v2789
        %v2801 = vpop.permute.xlu0 %2800
        %v2802 = vlaneseq
        %v2803 = vshrl.u32 %v2802, 7
        %v2804 = vadd.s32 %v2803, 16
        %2805 = vset.pattern.permute.xlu0 %v2804
        %2806 = vperm.xlu0 %2805, %v2789
        %v2807 = vpop.permute.xlu0 %2806
        %v2808 = vperm.slane %v552, 4
        %v2809 = vlaneseq
        %v2810 = vshrl.u32 %v2809, 7
        %2812 = vset.pattern.permute.xlu0 %v2810
        %2813 = vperm.xlu0 %2812, %v2808
        %v2814 = vpop.permute.xlu0 %2813
        %v2815 = vlaneseq
        %v2816 = vshrl.u32 %v2815, 7
        %v2817 = vadd.s32 %v2816, 8
        %2818 = vset.pattern.permute.xlu0 %v2817
        %2819 = vperm.xlu0 %2818, %v2808
        %v2820 = vpop.permute.xlu0 %2819
        %v2821 = vlaneseq
        %v2822 = vshrl.u32 %v2821, 7
        %v2823 = vadd.s32 %v2822, 16
        %2824 = vset.pattern.permute.xlu0 %v2823
        %2825 = vperm.xlu0 %2824, %v2808
        %v2826 = vpop.permute.xlu0 %2825
        %v2827 = vperm.slane %v552, 5
        %v2828 = vlaneseq
        %v2829 = vshrl.u32 %v2828, 7
        %2831 = vset.pattern.permute.xlu0 %v2829
        %2832 = vperm.xlu0 %2831, %v2827
        %v2833 = vpop.permute.xlu0 %2832
        %v2834 = vlaneseq
        %v2835 = vshrl.u32 %v2834, 7
        %v2836 = vadd.s32 %v2835, 8
        %2837 = vset.pattern.permute.xlu0 %v2836
        %2838 = vperm.xlu0 %2837, %v2827
        %v2839 = vpop.permute.xlu0 %2838
        %v2840 = vlaneseq
        %v2841 = vshrl.u32 %v2840, 7
        %v2842 = vadd.s32 %v2841, 16
        %2843 = vset.pattern.permute.xlu0 %v2842
        %2844 = vperm.xlu0 %2843, %v2827
        %v2845 = vpop.permute.xlu0 %2844
        %v2846 = vperm.slane %v552, 6
        %v2847 = vlaneseq
        %v2848 = vshrl.u32 %v2847, 7
        %2850 = vset.pattern.permute.xlu0 %v2848
        %2851 = vperm.xlu0 %2850, %v2846
        %v2852 = vpop.permute.xlu0 %2851
        %v2853 = vlaneseq
        %v2854 = vshrl.u32 %v2853, 7
        %v2855 = vadd.s32 %v2854, 8
        %2856 = vset.pattern.permute.xlu0 %v2855
        %2857 = vperm.xlu0 %2856, %v2846
        %v2858 = vpop.permute.xlu0 %2857
        %v2859 = vlaneseq
        %v2860 = vshrl.u32 %v2859, 7
        %v2861 = vadd.s32 %v2860, 16
        %2862 = vset.pattern.permute.xlu0 %v2861
        %2863 = vperm.xlu0 %2862, %v2846
        %v2864 = vpop.permute.xlu0 %2863
        %v2865 = vperm.slane %v552, 7
        %v2866 = vlaneseq
        %v2867 = vshrl.u32 %v2866, 7
        %2869 = vset.pattern.permute.xlu0 %v2867
        %2870 = vperm.xlu0 %2869, %v2865
        %v2871 = vpop.permute.xlu0 %2870
        %v2872 = vlaneseq
        %v2873 = vshrl.u32 %v2872, 7
        %v2874 = vadd.s32 %v2873, 8
        %2875 = vset.pattern.permute.xlu0 %v2874
        %2876 = vperm.xlu0 %2875, %v2865
        %v2877 = vpop.permute.xlu0 %2876
        %v2878 = vlaneseq
        %v2879 = vshrl.u32 %v2878, 7
        %v2880 = vadd.s32 %v2879, 16
        %2881 = vset.pattern.permute.xlu0 %v2880
        %2882 = vperm.xlu0 %2881, %v2865
        %v2883 = vpop.permute.xlu0 %2882
        %v2884 = vmul.f32 %v1995, %v2738
        %v2885 = vmul.f32 %v1998, %v2744
        %v2886 = vmul.f32 %v2001, %v2750
        %v2887 = vmul.f32 %v2004, %v2757
        %v2888 = vmul.f32 %v2007, %v2763
        %v2889 = vmul.f32 %v2010, %v2769
        %v2890 = vmul.f32 %v2013, %v2776
        %v2891 = vmul.f32 %v2016, %v2782
        %v2892 = vmul.f32 %v2019, %v2788
        %v2893 = vmul.f32 %v2022, %v2795
        %v2894 = vmul.f32 %v2025, %v2801
        %v2895 = vmul.f32 %v2028, %v2807
        %v2896 = vmul.f32 %v2031, %v2814
        %v2897 = vmul.f32 %v2034, %v2820
        %v2898 = vmul.f32 %v2037, %v2826
        %v2899 = vmul.f32 %v2040, %v2833
        %v2900 = vmul.f32 %v2043, %v2839
        %v2901 = vmul.f32 %v2046, %v2845
        %v2902 = vmul.f32 %v2049, %v2852
        %v2903 = vmul.f32 %v2052, %v2858
        %v2904 = vmul.f32 %v2055, %v2864
        %v2905 = vmul.f32 %v2058, %v2871
        %v2906 = vmul.f32 %v2061, %v2877
        %v2907 = vmul.f32 %v2064, %v2883
        %v2908 = vmul.f32 %v1996, %v1991
        %v2909 = vmul.f32 %v1999, %v1992
        %v2910 = vmul.f32 %v2002, %v1993
        %v2911 = vmul.f32 %v2005, %v1991
        %v2912 = vmul.f32 %v2008, %v1992
        %v2913 = vmul.f32 %v2011, %v1993
        %v2914 = vmul.f32 %v2014, %v1991
        %v2915 = vmul.f32 %v2017, %v1992
        %v2916 = vmul.f32 %v2020, %v1993
        %v2917 = vmul.f32 %v2023, %v1991
        %v2918 = vmul.f32 %v2026, %v1992
        %v2919 = vmul.f32 %v2029, %v1993
        %v2920 = vmul.f32 %v2032, %v1991
        %v2921 = vmul.f32 %v2035, %v1992
        %v2922 = vmul.f32 %v2038, %v1993
        %v2923 = vmul.f32 %v2041, %v1991
        %v2924 = vmul.f32 %v2044, %v1992
        %v2925 = vmul.f32 %v2047, %v1993
        %v2926 = vmul.f32 %v2050, %v1991
        %v2927 = vmul.f32 %v2053, %v1992
        %v2928 = vmul.f32 %v2056, %v1993
        %v2929 = vmul.f32 %v2059, %v1991
        %v2930 = vmul.f32 %v2062, %v1992
        %v2931 = vmul.f32 %v2065, %v1993
        %v2932 = vadd.f32 %v2884, %v2908
        %v2933 = vadd.f32 %v2885, %v2909
        %v2934 = vadd.f32 %v2886, %v2910
        %v2935 = vadd.f32 %v2887, %v2911
        %v2936 = vadd.f32 %v2888, %v2912
        %v2937 = vadd.f32 %v2889, %v2913
        %v2938 = vadd.f32 %v2890, %v2914
        %v2939 = vadd.f32 %v2891, %v2915
        %v2940 = vadd.f32 %v2892, %v2916
        %v2941 = vadd.f32 %v2893, %v2917
        %v2942 = vadd.f32 %v2894, %v2918
        %v2943 = vadd.f32 %v2895, %v2919
        %v2944 = vadd.f32 %v2896, %v2920
        %v2945 = vadd.f32 %v2897, %v2921
        %v2946 = vadd.f32 %v2898, %v2922
        %v2947 = vadd.f32 %v2899, %v2923
        %v2948 = vadd.f32 %v2900, %v2924
        %v2949 = vadd.f32 %v2901, %v2925
        %v2950 = vadd.f32 %v2902, %v2926
        %v2951 = vadd.f32 %v2903, %v2927
        %v2952 = vadd.f32 %v2904, %v2928
        %v2953 = vadd.f32 %v2905, %v2929
        %v2954 = vadd.f32 %v2906, %v2930
        %v2955 = vadd.f32 %v2907, %v2931
        %v2956 = vadd.f32 %v2932, %v2933
        %v2957 = vadd.f32 %v2956, %v2934
        %v2958 = vrot.slane %v2957, 4
        %v2959 = vadd.f32 %v2957, %v2958
        %v2960 = vrot.slane %v2959, 2
        %v2961 = vadd.f32 %v2959, %v2960
        %v2962 = vrot.slane %v2961, 1
        %v2963 = vadd.f32 %v2961, %v2962
        %v2964 = vadd.f32 %v2935, %v2936
        %v2965 = vadd.f32 %v2964, %v2937
        %v2966 = vrot.slane %v2965, 4
        %v2967 = vadd.f32 %v2965, %v2966
        %v2968 = vrot.slane %v2967, 2
        %v2969 = vadd.f32 %v2967, %v2968
        %v2970 = vrot.slane %v2969, 1
        %v2971 = vadd.f32 %v2969, %v2970
        %v2972 = vadd.f32 %v2938, %v2939
        %v2973 = vadd.f32 %v2972, %v2940
        %v2974 = vrot.slane %v2973, 4
        %v2975 = vadd.f32 %v2973, %v2974
        %v2976 = vrot.slane %v2975, 2
        %v2977 = vadd.f32 %v2975, %v2976
        %v2978 = vrot.slane %v2977, 1
        %v2979 = vadd.f32 %v2977, %v2978
        %v2980 = vadd.f32 %v2941, %v2942
        %v2981 = vadd.f32 %v2980, %v2943
        %v2982 = vrot.slane %v2981, 4
        %v2983 = vadd.f32 %v2981, %v2982
        %v2984 = vrot.slane %v2983, 2
        %v2985 = vadd.f32 %v2983, %v2984
        %v2986 = vrot.slane %v2985, 1
        %v2987 = vadd.f32 %v2985, %v2986
        %v2988 = vadd.f32 %v2944, %v2945
        %v2989 = vadd.f32 %v2988, %v2946
        %v2990 = vrot.slane %v2989, 4
        %v2991 = vadd.f32 %v2989, %v2990
        %v2992 = vrot.slane %v2991, 2
        %v2993 = vadd.f32 %v2991, %v2992
        %v2994 = vrot.slane %v2993, 1
        %v2995 = vadd.f32 %v2993, %v2994
        %v2996 = vadd.f32 %v2947, %v2948
        %v2997 = vadd.f32 %v2996, %v2949
        %v2998 = vrot.slane %v2997, 4
        %v2999 = vadd.f32 %v2997, %v2998
        %v3000 = vrot.slane %v2999, 2
        %v3001 = vadd.f32 %v2999, %v3000
        %v3002 = vrot.slane %v3001, 1
        %v3003 = vadd.f32 %v3001, %v3002
        %v3004 = vadd.f32 %v2950, %v2951
        %v3005 = vadd.f32 %v3004, %v2952
        %v3006 = vrot.slane %v3005, 4
        %v3007 = vadd.f32 %v3005, %v3006
        %v3008 = vrot.slane %v3007, 2
        %v3009 = vadd.f32 %v3007, %v3008
        %v3010 = vrot.slane %v3009, 1
        %v3011 = vadd.f32 %v3009, %v3010
        %v3012 = vadd.f32 %v2953, %v2954
        %v3013 = vadd.f32 %v3012, %v2955
        %v3014 = vrot.slane %v3013, 4
        %v3015 = vadd.f32 %v3013, %v3014
        %v3016 = vrot.slane %v3015, 2
        %v3017 = vadd.f32 %v3015, %v3016
        %v3018 = vrot.slane %v3017, 1
        %v3019 = vadd.f32 %v3017, %v3018
        %v3020 = vld [vmem:[%s481] sm:$0xff]
        %v3021 = vld [vmem:[%s481 + $0x8] sm:$0xff]
        %v3022 = vld [vmem:[%s481 + $0x10] sm:$0xff]
        %v3047 = vrot.slane %v2395, 7
        %v3048 = vsel %vm2139, %v3047, %v2387
        %v3049 = vrot.slane %v2403, 6
        %v3050 = vsel %vm2141, %v3049, %v3048
        %v3051 = vrot.slane %v2411, 5
        %v3052 = vsel %vm2143, %v3051, %v3050
        %v3053 = vrot.slane %v2419, 4
        %v3054 = vsel %vm2145, %v3053, %v3052
        %v3055 = vrot.slane %v2427, 3
        %v3056 = vsel %vm2147, %v3055, %v3054
        %v3057 = vrot.slane %v2435, 2
        %v3058 = vsel %vm2149, %v3057, %v3056
        %v3059 = vrot.slane %v2443, 1
        %v3060 = vsel %vm2151, %v3059, %v3058
        %v3061 = vrot.slane %v2683, 7
        %v3062 = vsel %vm2139, %v3061, %v2675
        %v3063 = vrot.slane %v2691, 6
        %v3064 = vsel %vm2141, %v3063, %v3062
        %v3065 = vrot.slane %v2699, 5
        %v3066 = vsel %vm2143, %v3065, %v3064
        %v3067 = vrot.slane %v2707, 4
        %v3068 = vsel %vm2145, %v3067, %v3066
        %v3069 = vrot.slane %v2715, 3
        %v3070 = vsel %vm2147, %v3069, %v3068
        %v3071 = vrot.slane %v2723, 2
        %v3072 = vsel %vm2149, %v3071, %v3070
        %v3073 = vrot.slane %v2731, 1
        %v3074 = vsel %vm2151, %v3073, %v3072
        %v3075 = vrot.slane %v2971, 7
        %v3076 = vsel %vm2139, %v3075, %v2963
        %v3077 = vrot.slane %v2979, 6
        %v3078 = vsel %vm2141, %v3077, %v3076
        %v3079 = vrot.slane %v2987, 5
        %v3080 = vsel %vm2143, %v3079, %v3078
        %v3081 = vrot.slane %v2995, 4
        %v3082 = vsel %vm2145, %v3081, %v3080
        %v3083 = vrot.slane %v3003, 3
        %v3084 = vsel %vm2147, %v3083, %v3082
        %v3085 = vrot.slane %v3011, 2
        %v3086 = vsel %vm2149, %v3085, %v3084
        %v3087 = vrot.slane %v3019, 1
        %v3088 = vsel %vm2151, %v3087, %v3086
        %v3092 = vadd.f32 %v3020, %v3060
        %v3093 = vadd.f32 %v3021, %v3074
        %v3094 = vadd.f32 %v3022, %v3088
        %3095 = vst [vmem:[%s481] sm:$0xff] %v3092
        %3096 = vst [vmem:[%s481 + $0x8] sm:$0xff] %v3093
        %3097 = vst [vmem:[%s481 + $0x10] sm:$0xff] %v3094
        %p3098 = scmp.lt.s32.totalorder %s27, 2
        %s3099 = scalar_select %p3098, %s27, 2
        %s3100 = smul.addr %s3099, 8
        %s3101 = scalar_lea.vmem %s10, %s3100
        %s3102 = sand.u32 %s299, 1
        %s3103 = sand.u32 %s299, 1
        %s3104 = smul.addr %s3103, 24
        %s3105 = scalar_lea.vmem [#allocation3], %s3104
        // Predicated region
        $region103: #{painn_forward.7} parent=93 // pred_check
          %p3106 = pneg %p283
        $region104: #{painn_forward.7} parent=93 // pred_check_branch
          %3108 = sbr.rel (%p3106) target = $region106
        $region105: #{painn_forward.7} parent=93 // pred_region
          _
        $region106: #{painn_forward.7} parent=93 // pred_fallthru
          _
        // Predicated region
        $region107: #{painn_forward.7} parent=93 // pred_check
          %p3109 = pneg %p309
        $region108: #{painn_forward.7} parent=93 // pred_check_branch
          %3111 = sbr.rel (%p3109) target = $region110
        $region109: #{painn_forward.7} parent=93 // pred_region
          %s3112 = smul.addr %s27, 8
          %s3113 = scalar_lea.vmem %s11, %s3112
          // Predicated region
          $region111: #{painn_forward.7} parent=109 // pred_check
            _
          $region112: #{painn_forward.7} parent=109 // pred_check_branch
            %3115 = sbr.rel (0) target = $region114
          $region113: #{painn_forward.7} parent=109 // pred_region
            // Predicated region
            $region115: #{painn_forward.7} parent=113 // pred_check
              _
            $region116: #{painn_forward.7} parent=113 // pred_check_branch
              %3117 = sbr.rel (0) target = $region118
            $region117: #{painn_forward.7} parent=113 // pred_region
              // Predicated region
              $region130: #{painn_forward.7} parent=117 // pred_check
                _
              $region131: #{painn_forward.7} parent=117 // pred_check_branch
                %3137 = sbr.rel (0) target = $region133
              $region132: #{painn_forward.7} parent=117 // pred_region
                loop: start=0, step=1, limit=1
                $region134: #{painn_forward.7} parent=132 // loop_pre_header
                  _
                $region135: #{painn_forward.7} parent=132 // loop_header
                  %s3139 = sphi 0, %s3143
                  %p3140 = scmp.ge.s32.totalorder %s3139, 1
                  %s3144 = sphi %s3105, %s3105
                  %s3145 = sphi %s3113, %s3113
                $region136: #{painn_forward.7} parent=132 // loop_header_branch
                  %3142 = sbr.rel (%p3140) target = $region140
                $region137: #{painn_forward.7} parent=132 // loop_body
                  %v3146 = vld [vmem:[%s3144] sm:$0xff]
                  %3147 = vst [vmem:[%s3145] sm:$0xff] %v3146
                  %v3148 = vld [vmem:[%s3144 + $0x8] sm:$0xff]
                  %3149 = vst [vmem:[%s3145 + $0x18] sm:$0xff] %v3148
                  %v3150 = vld [vmem:[%s3144 + $0x10] sm:$0xff]
                  %3151 = vst [vmem:[%s3145 + $0x30] sm:$0xff] %v3150
                $region138: #{painn_forward.7} parent=132 // loop_footer
                  %s3143 = sadd.s32 1, %s3139
                $region139: #{painn_forward.7} parent=132 // loop_footer_branch
                  %3138 = sbr.rel target = $region135
                $region140: #{painn_forward.7} parent=132 // loop_exit
                  _
              $region133: #{painn_forward.7} parent=117 // pred_fallthru
                _
              // Predicated region
              $region141: #{painn_forward.7} parent=117 // pred_check
                _
              $region142: #{painn_forward.7} parent=117 // pred_check_branch
                %3153 = sbr.rel target = $region144
              $region143: #{painn_forward.7} parent=117 // pred_region
                _
              $region144: #{painn_forward.7} parent=117 // pred_fallthru
                _
            $region118: #{painn_forward.7} parent=113 // pred_fallthru
              _
            // Predicated region
            $region119: #{painn_forward.7} parent=113 // pred_check
              _
            $region120: #{painn_forward.7} parent=113 // pred_check_branch
              %3119 = sbr.rel target = $region122
            $region121: #{painn_forward.7} parent=113 // pred_region
              %s3121 = ssub.s32 256, 1
              loop: start=0, step=1, limit=1
              $region123: #{painn_forward.7} parent=121 // loop_pre_header
                _
              $region124: #{painn_forward.7} parent=121 // loop_header
                %s3123 = sphi 0, %s3127
                %p3124 = scmp.ge.s32.totalorder %s3123, 1
                %s3128 = sphi %s3105, %s3105
                %s3129 = sphi %s3113, %s3113
              $region125: #{painn_forward.7} parent=121 // loop_header_branch
                %3126 = sbr.rel (%p3124) target = $region129
              $region126: #{painn_forward.7} parent=121 // loop_body
                %v3130 = vld [vmem:[%s3128] sm:%s3121]
                %3131 = vst [vmem:[%s3129] sm:%s3121] %v3130
                %v3132 = vld [vmem:[%s3128 + $0x8] sm:%s3121]
                %3133 = vst [vmem:[%s3129 + $0x18] sm:%s3121] %v3132
                %v3134 = vld [vmem:[%s3128 + $0x10] sm:%s3121]
                %3135 = vst [vmem:[%s3129 + $0x30] sm:%s3121] %v3134
              $region127: #{painn_forward.7} parent=121 // loop_footer
                %s3127 = sadd.s32 1, %s3123
              $region128: #{painn_forward.7} parent=121 // loop_footer_branch
                %3122 = sbr.rel target = $region124
              $region129: #{painn_forward.7} parent=121 // loop_exit
                _
            $region122: #{painn_forward.7} parent=113 // pred_fallthru
              _
          $region114: #{painn_forward.7} parent=109 // pred_fallthru
            _
          %3154 = vnop
        $region110: #{painn_forward.7} parent=93 // pred_fallthru
          _
      $region94: #{painn_forward.7} parent=5 // pred_fallthru
        _
      %p3155 = scmp.le.s32.totalorder 2, %s18
      // Predicated region
      $region145: #{painn_forward.7} parent=5 // pred_check
        %p3156 = pneg %p3155
      $region146: #{painn_forward.7} parent=5 // pred_check_branch
        %3158 = sbr.rel (%p3156) target = $region148
      $region147: #{painn_forward.7} parent=5 // pred_region
        %s3159 = ssub.s32 %s18, 2
        // Predicated region
        $region149: #{painn_forward.7} parent=147 // pred_check
          %p3160 = pneg %p289
        $region150: #{painn_forward.7} parent=147 // pred_check_branch
          %3162 = sbr.rel (%p3160) target = $region152
        $region151: #{painn_forward.7} parent=147 // pred_region
          %p3163 = scmp.lt.s32.totalorder %s29, 2
          %s3164 = scalar_select %p3163, %s29, 2
          %s3165 = smul.addr %s3164, 8
          %s3166 = scalar_lea.vmem %s10, %s3165
        $region152: #{painn_forward.7} parent=147 // pred_fallthru
          _
        // Predicated region
        $region153: #{painn_forward.7} parent=147 // pred_check
          %p3167 = pneg %p315
        $region154: #{painn_forward.7} parent=147 // pred_check_branch
          %3169 = sbr.rel (%p3167) target = $region156
        $region155: #{painn_forward.7} parent=147 // pred_region
          %s3170 = sand.u32 %s300, 1
          %s3171 = sand.u32 %s300, 1
          %s3172 = smul.addr %s3171, 24
          %s3173 = scalar_lea.vmem [#allocation3], %s3172
        $region156: #{painn_forward.7} parent=147 // pred_fallthru
          _
      $region148: #{painn_forward.7} parent=5 // pred_fallthru
        _
    $region6: #{painn_forward.7} parent=1 // loop_footer
      %s22 = sadd.s32 1, %s18
    $region7: #{painn_forward.7} parent=1 // loop_footer_branch
      %17 = sbr.rel target = $region3
    $region8: #{painn_forward.7} parent=1 // loop_exit
      _

// kernel: painn_forward.11
$region0: #{painn_forward.11}
  #allocation0 [shape = 'u32[]', space=smem, size = 0x4, offset = 0x4, fixed_abs, tag = 'smem constant byte address 0x4 - core index']
  #allocation1 [shape = 'u32[72,128]{1,0:T(1,128)}', space=vmem, size = 0x9000, scoped, tag = 'internal scratch']
  %s0 = inlined_call_operand.vmem [shape: f32[24,128], index: 0, kind: input, shape index: {}]
  %s1 = inlined_call_operand.vmem [shape: f32[3,24,128], index: 1, kind: input, shape index: {}]
  %s2 = inlined_call_operand.hbm [shape: f32[128,256], index: 2, kind: input, shape index: {}]
  %s3 = inlined_call_operand.hbm [shape: f32[256,128], index: 3, kind: input, shape index: {}]
  %s4 = inlined_call_operand.vmem [shape: f32[1,128], index: 4, kind: input, shape index: {}]
  %s5 = inlined_call_operand.hbm [shape: f32[128,384], index: 5, kind: input, shape index: {}]
  %s6 = inlined_call_operand.vmem [shape: f32[1,384], index: 6, kind: input, shape index: {}]
  %s7 = inlined_call_operand.vmem [shape: f32[1,128], index: 7, kind: input, shape index: {}]
  %s8 = inlined_call_operand.vmem [shape: f32[1,128], index: 8, kind: input, shape index: {}]
  %s9 = inlined_call_operand.vmem [shape: f32[24,128], index: 9, kind: output, shape index: {0}]
  %s10 = inlined_call_operand.hbm [shape: f32[3,24,128], index: 10, kind: output, shape index: {1}]
  %11 = xla_tuple %s9, %s10
  %s12 = sld [smem:[#allocation0]]
  $region66: #{painn_forward.11} parent=0
    _
  %s14 = ssub.s32 1, %s12
  %s15 = scalar_select 0, %s14, %s12
  $region1: #{painn_forward.11} parent=0
    #allocation2 [shape = 'u8[131072]{0}', space=vmem, size = 0x20000, scoped, tag = 'input window, operand 2, single buffered']
    #allocation3 [shape = 's32[1]{0}', space=sflag, size = 0x4, scoped, tag = 'scoped memory for painn_forward.11']
    #allocation4 [shape = 's32[1]{0}', space=sflag, size = 0x4, scoped, tag = 'scoped memory for painn_forward.11']
    #allocation5 [shape = 'u8[131072]{0}', space=vmem, size = 0x20000, scoped, tag = 'input window, operand 3, single buffered']
    #allocation6 [shape = 's32[1]{0}', space=sflag, size = 0x4, scoped, tag = 'scoped memory for painn_forward.11']
    #allocation7 [shape = 'u8[196608]{0}', space=vmem, size = 0x30000, scoped, tag = 'input window, operand 5, single buffered']
    #allocation8 [shape = 'u8[36864]{0}', space=vmem, size = 0x9000, scoped, tag = 'output window, operand 1, single buffered']
    %16 = vsyncpa [#allocation3], 0
    %17 = vsyncpa [#allocation6], 0
    %18 = vsyncpa [#allocation4], 0
    // Predicated region
    $region2: #{painn_forward.11} parent=1 // pred_check
      _
    $region3: #{painn_forward.11} parent=1 // pred_check_branch
      %20 = sbr.rel (0) target = $region5
    $region4: #{painn_forward.11} parent=1 // pred_region
      _
    $region5: #{painn_forward.11} parent=1 // pred_fallthru
      _
    // Predicated region
    $region6: #{painn_forward.11} parent=1 // pred_check
      _
    $region7: #{painn_forward.11} parent=1 // pred_check_branch
      %22 = sbr.rel (0) target = $region9
    $region8: #{painn_forward.11} parent=1 // pred_region
      _
    $region9: #{painn_forward.11} parent=1 // pred_fallthru
      _
    // Predicated region
    $region10: #{painn_forward.11} parent=1 // pred_check
      _
    $region11: #{painn_forward.11} parent=1 // pred_check_branch
      %24 = sbr.rel (0) target = $region13
    $region12: #{painn_forward.11} parent=1 // pred_region
      %26 = vsyncadd [#allocation3], 0
      %s27 = sshll.u32 %s2, 4
      %s28 = int_to_ptr.hbm [resolvable:$true] %s27
      %s29 = sshll.u32 [#allocation2], 4
      %s30 = int_to_ptr.vmem [resolvable:$true] %s29
      %35 = dma.hbm_to_vmem [thread:$0]  %s28, 4096, %s30, [#allocation3], 256, 256, 16
    $region13: #{painn_forward.11} parent=1 // pred_fallthru
      _
    // Predicated region
    $region14: #{painn_forward.11} parent=1 // pred_check
      _
    $region15: #{painn_forward.11} parent=1 // pred_check_branch
      %37 = sbr.rel (0) target = $region17
    $region16: #{painn_forward.11} parent=1 // pred_region
      %39 = vsyncadd [#allocation6], 0
      %s40 = sshll.u32 %s3, 4
      %s41 = int_to_ptr.hbm [resolvable:$true] %s40
      %s42 = sshll.u32 [#allocation5], 4
      %s43 = int_to_ptr.vmem [resolvable:$true] %s42
      %48 = dma.hbm_to_vmem [thread:$0]  %s41, 4096, %s43, [#allocation6], 128, 128, 8
    $region17: #{painn_forward.11} parent=1 // pred_fallthru
      _
    // Predicated region
    $region18: #{painn_forward.11} parent=1 // pred_check
      _
    $region19: #{painn_forward.11} parent=1 // pred_check_branch
      %50 = sbr.rel (0) target = $region21
    $region20: #{painn_forward.11} parent=1 // pred_region
      _
    $region21: #{painn_forward.11} parent=1 // pred_fallthru
      _
    // Predicated region
    $region22: #{painn_forward.11} parent=1 // pred_check
      _
    $region23: #{painn_forward.11} parent=1 // pred_check_branch
      %52 = sbr.rel (0) target = $region25
    $region24: #{painn_forward.11} parent=1 // pred_region
      %54 = vsyncadd [#allocation6], 0
      %s55 = sshll.u32 %s5, 4
      %s56 = int_to_ptr.hbm [resolvable:$true] %s55
      %s57 = sshll.u32 [#allocation7], 4
      %s58 = int_to_ptr.vmem [resolvable:$true] %s57
      %63 = dma.hbm_to_vmem [thread:$0]  %s56, 6144, %s58, [#allocation6], 384, 384, 24
    $region25: #{painn_forward.11} parent=1 // pred_fallthru
      _
    // Predicated region
    $region26: #{painn_forward.11} parent=1 // pred_check
      _
    $region27: #{painn_forward.11} parent=1 // pred_check_branch
      %65 = sbr.rel (0) target = $region29
    $region28: #{painn_forward.11} parent=1 // pred_region
      _
    $region29: #{painn_forward.11} parent=1 // pred_fallthru
      _
    // Predicated region
    $region30: #{painn_forward.11} parent=1 // pred_check
      _
    $region31: #{painn_forward.11} parent=1 // pred_check_branch
      %67 = sbr.rel (0) target = $region33
    $region32: #{painn_forward.11} parent=1 // pred_region
      _
    $region33: #{painn_forward.11} parent=1 // pred_fallthru
      _
    // Predicated region
    $region34: #{painn_forward.11} parent=1 // pred_check
      _
    $region35: #{painn_forward.11} parent=1 // pred_check_branch
      %69 = sbr.rel (0) target = $region37
    $region36: #{painn_forward.11} parent=1 // pred_region
      _
    $region37: #{painn_forward.11} parent=1 // pred_fallthru
      _
    // Predicated region
    $region38: #{painn_forward.11} parent=1 // pred_check
      _
    $region39: #{painn_forward.11} parent=1 // pred_check_branch
      %71 = sbr.rel (0) target = $region41
    $region40: #{painn_forward.11} parent=1 // pred_region
      %73 = dma.done [#allocation3], 4096
    $region41: #{painn_forward.11} parent=1 // pred_fallthru
      _
    // Predicated region
    $region42: #{painn_forward.11} parent=1 // pred_check
      _
    $region43: #{painn_forward.11} parent=1 // pred_check_branch
      %75 = sbr.rel (0) target = $region45
    $region44: #{painn_forward.11} parent=1 // pred_region
      %77 = dma.done [#allocation6], 4096
    $region45: #{painn_forward.11} parent=1 // pred_fallthru
      _
    // Predicated region
    $region46: #{painn_forward.11} parent=1 // pred_check
      _
    $region47: #{painn_forward.11} parent=1 // pred_check_branch
      %79 = sbr.rel (0) target = $region49
    $region48: #{painn_forward.11} parent=1 // pred_region
      %81 = dma.done [#allocation6], 6144
    $region49: #{painn_forward.11} parent=1 // pred_fallthru
      _
    %v82 = vld [vmem:[%s0] sm:$0xff]
    %v83 = vld [vmem:[%s0 + $0x8] sm:$0xff]
    %v84 = vld [vmem:[%s0 + $0x10] sm:$0xff]
    %v85 = vld [vmem:[%s1] sm:$0xff]
    %v86 = vld [vmem:[%s1 + $0x8] sm:$0xff]
    %v87 = vld [vmem:[%s1 + $0x10] sm:$0xff]
    %v88 = vld [vmem:[%s1 + $0x18] sm:$0xff]
    %v89 = vld [vmem:[%s1 + $0x20] sm:$0xff]
    %v90 = vld [vmem:[%s1 + $0x28] sm:$0xff]
    %v91 = vld [vmem:[%s1 + $0x30] sm:$0xff]
    %v92 = vld [vmem:[%s1 + $0x38] sm:$0xff]
    %v93 = vld [vmem:[%s1 + $0x40] sm:$0xff]
    %v94 = vld [vmem:[#allocation2] sm:$0xff]
    %v95 = vld [vmem:[#allocation2 + $0x8] sm:$0xff]
    %v96 = vld [vmem:[#allocation2 + $0x10] sm:$0xff]
    %v97 = vld [vmem:[#allocation2 + $0x18] sm:$0xff]
    %v98 = vld [vmem:[#allocation2 + $0x20] sm:$0xff]
    %v99 = vld [vmem:[#allocation2 + $0x28] sm:$0xff]
    %v100 = vld [vmem:[#allocation2 + $0x30] sm:$0xff]
    %v101 = vld [vmem:[#allocation2 + $0x38] sm:$0xff]
    %v102 = vld [vmem:[#allocation2 + $0x40] sm:$0xff]
    %v103 = vld [vmem:[#allocation2 + $0x48] sm:$0xff]
    %v104 = vld [vmem:[#allocation2 + $0x50] sm:$0xff]
    %v105 = vld [vmem:[#allocation2 + $0x58] sm:$0xff]
    %v106 = vld [vmem:[#allocation2 + $0x60] sm:$0xff]
    %v107 = vld [vmem:[#allocation2 + $0x68] sm:$0xff]
    %v108 = vld [vmem:[#allocation2 + $0x70] sm:$0xff]
    %v109 = vld [vmem:[#allocation2 + $0x78] sm:$0xff]
    %v110 = vld [vmem:[#allocation2 + $0x80] sm:$0xff]
    %v111 = vld [vmem:[#allocation2 + $0x88] sm:$0xff]
    %v112 = vld [vmem:[#allocation2 + $0x90] sm:$0xff]
    %v113 = vld [vmem:[#allocation2 + $0x98] sm:$0xff]
    %v114 = vld [vmem:[#allocation2 + $0xa0] sm:$0xff]
    %v115 = vld [vmem:[#allocation2 + $0xa8] sm:$0xff]
    %v116 = vld [vmem:[#allocation2 + $0xb0] sm:$0xff]
    %v117 = vld [vmem:[#allocation2 + $0xb8] sm:$0xff]
    %v118 = vld [vmem:[#allocation2 + $0xc0] sm:$0xff]
    %v119 = vld [vmem:[#allocation2 + $0xc8] sm:$0xff]
    %v120 = vld [vmem:[#allocation2 + $0xd0] sm:$0xff]
    %v121 = vld [vmem:[#allocation2 + $0xd8] sm:$0xff]
    %v122 = vld [vmem:[#allocation2 + $0xe0] sm:$0xff]
    %v123 = vld [vmem:[#allocation2 + $0xe8] sm:$0xff]
    %v124 = vld [vmem:[#allocation2 + $0xf0] sm:$0xff]
    %v125 = vld [vmem:[#allocation2 + $0xf8] sm:$0xff]
    %126 = vmatpush.msra.mxu0 %v124
    %127 = vmatpush.msra.mxu0 %v122
    %128 = vmatpush.msra.mxu0 %v120
    %129 = vmatpush.msra.mxu0 %v118
    %130 = vmatpush.msra.mxu0 %v116
    %131 = vmatpush.msra.mxu0 %v114
    %132 = vmatpush.msra.mxu0 %v112
    %133 = vmatpush.msra.mxu0 %v110
    %134 = vmatpush.msra.mxu0 %v108
    %135 = vmatpush.msra.mxu0 %v106
    %136 = vmatpush.msra.mxu0 %v104
    %137 = vmatpush.msra.mxu0 %v102
    %138 = vmatpush.msra.mxu0 %v100
    %139 = vmatpush.msra.mxu0 %v98
    %140 = vmatpush.msra.mxu0 %v96
    %141 = vmatpush.msra.mxu0 %v94
    %142 = vmatmul.f32.gmra.mxu0 %v85
    %v143 = vpop.f32.mrf.mxu0
    %v144 = vadd.f32 0.0, %v143
    %145 = vmatmul.f32.gmra.mxu0 %v86
    %v146 = vpop.f32.mrf.mxu0
    %v147 = vadd.f32 0.0, %v146
    %148 = vmatmul.f32.gmra.mxu0 %v87
    %v149 = vpop.f32.mrf.mxu0
    %v150 = vadd.f32 0.0, %v149
    %151 = vmatmul.f32.gmra.mxu0 %v88
    %v152 = vpop.f32.mrf.mxu0
    %v153 = vadd.f32 0.0, %v152
    %154 = vmatmul.f32.gmra.mxu0 %v89
    %v155 = vpop.f32.mrf.mxu0
    %v156 = vadd.f32 0.0, %v155
    %157 = vmatmul.f32.gmra.mxu0 %v90
    %v158 = vpop.f32.mrf.mxu0
    %v159 = vadd.f32 0.0, %v158
    %160 = vmatmul.f32.gmra.mxu0 %v91
    %v161 = vpop.f32.mrf.mxu0
    %v162 = vadd.f32 0.0, %v161
    %163 = vmatmul.f32.gmra.mxu0 %v92
    %v164 = vpop.f32.mrf.mxu0
    %v165 = vadd.f32 0.0, %v164
    %166 = vmatmul.f32.gmra.mxu0 %v93
    %v167 = vpop.f32.mrf.mxu0
    %v168 = vadd.f32 0.0, %v167
    %169 = vdwg.mxu0
    %170 = vmatpush.msra.mxu0 %v125
    %171 = vmatpush.msra.mxu0 %v123
    %172 = vmatpush.msra.mxu0 %v121
    %173 = vmatpush.msra.mxu0 %v119
    %174 = vmatpush.msra.mxu0 %v117
    %175 = vmatpush.msra.mxu0 %v115
    %176 = vmatpush.msra.mxu0 %v113
    %177 = vmatpush.msra.mxu0 %v111
    %178 = vmatpush.msra.mxu0 %v109
    %179 = vmatpush.msra.mxu0 %v107
    %180 = vmatpush.msra.mxu0 %v105
    %181 = vmatpush.msra.mxu0 %v103
    %182 = vmatpush.msra.mxu0 %v101
    %183 = vmatpush.msra.mxu0 %v99
    %184 = vmatpush.msra.mxu0 %v97
    %185 = vmatpush.msra.mxu0 %v95
    %186 = vmatmul.f32.gmra.mxu0 %v85
    %v187 = vpop.f32.mrf.mxu0
    %v188 = vadd.f32 0.0, %v187
    %189 = vmatmul.f32.gmra.mxu0 %v86
    %v190 = vpop.f32.mrf.mxu0
    %v191 = vadd.f32 0.0, %v190
    %192 = vmatmul.f32.gmra.mxu0 %v87
    %v193 = vpop.f32.mrf.mxu0
    %v194 = vadd.f32 0.0, %v193
    %195 = vmatmul.f32.gmra.mxu0 %v88
    %v196 = vpop.f32.mrf.mxu0
    %v197 = vadd.f32 0.0, %v196
    %198 = vmatmul.f32.gmra.mxu0 %v89
    %v199 = vpop.f32.mrf.mxu0
    %v200 = vadd.f32 0.0, %v199
    %201 = vmatmul.f32.gmra.mxu0 %v90
    %v202 = vpop.f32.mrf.mxu0
    %v203 = vadd.f32 0.0, %v202
    %204 = vmatmul.f32.gmra.mxu0 %v91
    %v205 = vpop.f32.mrf.mxu0
    %v206 = vadd.f32 0.0, %v205
    %207 = vmatmul.f32.gmra.mxu0 %v92
    %v208 = vpop.f32.mrf.mxu0
    %v209 = vadd.f32 0.0, %v208
    %210 = vmatmul.f32.gmra.mxu0 %v93
    %v211 = vpop.f32.mrf.mxu0
    %v212 = vadd.f32 0.0, %v211
    %213 = vdwg.mxu0
    %v214 = vmul.f32 %v144, %v144
    %v215 = vmul.f32 %v147, %v147
    %v216 = vmul.f32 %v150, %v150
    %v217 = vmul.f32 %v153, %v153
    %v218 = vmul.f32 %v156, %v156
    %v219 = vmul.f32 %v159, %v159
    %v220 = vmul.f32 %v162, %v162
    %v221 = vmul.f32 %v165, %v165
    %v222 = vmul.f32 %v168, %v168
    %v223 = vadd.f32 %v214, %v217
    %v224 = vadd.f32 %v223, %v220
    %v225 = vadd.f32 %v215, %v218
    %v226 = vadd.f32 %v225, %v221
    %v227 = vadd.f32 %v216, %v219
    %v228 = vadd.f32 %v227, %v222
    %v229 = vadd.f32 %v224, 1e-08
    %v230 = vadd.f32 %v226, 1e-08
    %v231 = vadd.f32 %v228, 1e-08
    %v232 = vrsqrt.pop %v229
    %v233 = vmul.f32 %v232, %v229
    %v234 = vmul.f32 %v233, %v232
    %v235 = vmul.f32 0.5, %v234
    %v236 = vsub.f32 1.5, %v235
    %v237 = vmul.f32 %v232, %v236
    %v238 = vmul.f32 %v229, %v237
    %vm239 = vcmp.eq.f32.partialorder %v229, inf
    %v240 = vsel %vm239, %v229, %v238
    %vm241 = vcmp.eq.f32.partialorder %v229, 0.0
    %v242 = vand.u32 %v229, 2147483648
    %v243 = vsel %vm241, %v242, %v240
    %v244 = vrsqrt.pop %v230
    %v245 = vmul.f32 %v244, %v230
    %v246 = vmul.f32 %v245, %v244
    %v247 = vmul.f32 0.5, %v246
    %v248 = vsub.f32 1.5, %v247
    %v249 = vmul.f32 %v244, %v248
    %v250 = vmul.f32 %v230, %v249
    %vm251 = vcmp.eq.f32.partialorder %v230, inf
    %v252 = vsel %vm251, %v230, %v250
    %vm253 = vcmp.eq.f32.partialorder %v230, 0.0
    %v254 = vand.u32 %v230, 2147483648
    %v255 = vsel %vm253, %v254, %v252
    %v256 = vrsqrt.pop %v231
    %v257 = vmul.f32 %v256, %v231
    %v258 = vmul.f32 %v257, %v256
    %v259 = vmul.f32 0.5, %v258
    %v260 = vsub.f32 1.5, %v259
    %v261 = vmul.f32 %v256, %v260
    %v262 = vmul.f32 %v231, %v261
    %vm263 = vcmp.eq.f32.partialorder %v231, inf
    %v264 = vsel %vm263, %v231, %v262
    %vm265 = vcmp.eq.f32.partialorder %v231, 0.0
    %v266 = vand.u32 %v231, 2147483648
    %v267 = vsel %vm265, %v266, %v264
    %v268 = vld [vmem:[#allocation5] sm:$0xff]
    %v269 = vld [vmem:[#allocation5 + $0x8] sm:$0xff]
    %v270 = vld [vmem:[#allocation5 + $0x10] sm:$0xff]
    %v271 = vld [vmem:[#allocation5 + $0x18] sm:$0xff]
    %v272 = vld [vmem:[#allocation5 + $0x20] sm:$0xff]
    %v273 = vld [vmem:[#allocation5 + $0x28] sm:$0xff]
    %v274 = vld [vmem:[#allocation5 + $0x30] sm:$0xff]
    %v275 = vld [vmem:[#allocation5 + $0x38] sm:$0xff]
    %v276 = vld [vmem:[#allocation5 + $0x40] sm:$0xff]
    %v277 = vld [vmem:[#allocation5 + $0x48] sm:$0xff]
    %v278 = vld [vmem:[#allocation5 + $0x50] sm:$0xff]
    %v279 = vld [vmem:[#allocation5 + $0x58] sm:$0xff]
    %v280 = vld [vmem:[#allocation5 + $0x60] sm:$0xff]
    %v281 = vld [vmem:[#allocation5 + $0x68] sm:$0xff]
    %v282 = vld [vmem:[#allocation5 + $0x70] sm:$0xff]
    %v283 = vld [vmem:[#allocation5 + $0x78] sm:$0xff]
    %v284 = vld [vmem:[#allocation5 + $0x80] sm:$0xff]
    %v285 = vld [vmem:[#allocation5 + $0x88] sm:$0xff]
    %v286 = vld [vmem:[#allocation5 + $0x90] sm:$0xff]
    %v287 = vld [vmem:[#allocation5 + $0x98] sm:$0xff]
    %v288 = vld [vmem:[#allocation5 + $0xa0] sm:$0xff]
    %v289 = vld [vmem:[#allocation5 + $0xa8] sm:$0xff]
    %v290 = vld [vmem:[#allocation5 + $0xb0] sm:$0xff]
    %v291 = vld [vmem:[#allocation5 + $0xb8] sm:$0xff]
    %v292 = vld [vmem:[#allocation5 + $0xc0] sm:$0xff]
    %v293 = vld [vmem:[#allocation5 + $0xc8] sm:$0xff]
    %v294 = vld [vmem:[#allocation5 + $0xd0] sm:$0xff]
    %v295 = vld [vmem:[#allocation5 + $0xd8] sm:$0xff]
    %v296 = vld [vmem:[#allocation5 + $0xe0] sm:$0xff]
    %v297 = vld [vmem:[#allocation5 + $0xe8] sm:$0xff]
    %v298 = vld [vmem:[#allocation5 + $0xf0] sm:$0xff]
    %v299 = vld [vmem:[#allocation5 + $0xf8] sm:$0xff]
    %v300 = vld [vmem:[%s4] sm:$0x1]
    %v302 = vperm.slane %v300, 0
    %304 = vmatpush.msra.mxu0 %v283
    %305 = vmatpush.msra.mxu0 %v282
    %306 = vmatpush.msra.mxu0 %v281
    %307 = vmatpush.msra.mxu0 %v280
    %308 = vmatpush.msra.mxu0 %v279
    %309 = vmatpush.msra.mxu0 %v278
    %310 = vmatpush.msra.mxu0 %v277
    %311 = vmatpush.msra.mxu0 %v276
    %312 = vmatpush.msra.mxu0 %v275
    %313 = vmatpush.msra.mxu0 %v274
    %314 = vmatpush.msra.mxu0 %v273
    %315 = vmatpush.msra.mxu0 %v272
    %316 = vmatpush.msra.mxu0 %v271
    %317 = vmatpush.msra.mxu0 %v270
    %318 = vmatpush.msra.mxu0 %v269
    %319 = vmatpush.msra.mxu0 %v268
    %320 = vmatmul.f32.gmra.mxu0 %v82
    %v321 = vpop.f32.mrf.mxu0
    %v322 = vadd.f32 %v302, %v321
    %323 = vmatmul.f32.gmra.mxu0 %v83
    %v324 = vpop.f32.mrf.mxu0
    %v325 = vadd.f32 %v302, %v324
    %326 = vmatmul.f32.gmra.mxu0 %v84
    %v327 = vpop.f32.mrf.mxu0
    %v328 = vadd.f32 %v302, %v327
    %329 = vdwg.mxu0
    %330 = vmatpush.msra.mxu0 %v299
    %331 = vmatpush.msra.mxu0 %v298
    %332 = vmatpush.msra.mxu0 %v297
    %333 = vmatpush.msra.mxu0 %v296
    %334 = vmatpush.msra.mxu0 %v295
    %335 = vmatpush.msra.mxu0 %v294
    %336 = vmatpush.msra.mxu0 %v293
    %337 = vmatpush.msra.mxu0 %v292
    %338 = vmatpush.msra.mxu0 %v291
    %339 = vmatpush.msra.mxu0 %v290
    %340 = vmatpush.msra.mxu0 %v289
    %341 = vmatpush.msra.mxu0 %v288
    %342 = vmatpush.msra.mxu0 %v287
    %343 = vmatpush.msra.mxu0 %v286
    %344 = vmatpush.msra.mxu0 %v285
    %345 = vmatpush.msra.mxu0 %v284
    %346 = vmatmul.f32.gmra.mxu0 %v243
    %v347 = vpop.f32.mrf.mxu0
    %v348 = vadd.f32 %v322, %v347
    %349 = vmatmul.f32.gmra.mxu0 %v255
    %v350 = vpop.f32.mrf.mxu0
    %v351 = vadd.f32 %v325, %v350
    %352 = vmatmul.f32.gmra.mxu0 %v267
    %v353 = vpop.f32.mrf.mxu0
    %v354 = vadd.f32 %v328, %v353
    %355 = vdwg.mxu0
    %v356 = vxor.u32 %v348, 2147483648
    %v357 = vxor.u32 %v351, 2147483648
    %v358 = vxor.u32 %v354, 2147483648
    %v359 = vmul.f32 %v356, 1.442695
    %v360 = vpow.pop %v359
    %v361 = vmul.f32 %v357, 1.442695
    %v362 = vpow.pop %v361
    %v363 = vmul.f32 %v358, 1.442695
    %v364 = vpow.pop %v363
    %v365 = vadd.f32 %v360, 1.0
    %v366 = vadd.f32 %v362, 1.0
    %v367 = vadd.f32 %v364, 1.0
    %v368 = vrcp.pop %v365
    %v369 = vmul.f32 %v365, %v368
    %v370 = vsub.f32 1.0, %v369
    %v371 = vmul.f32 %v368, %v370
    %v372 = vadd.f32 %v368, %v371
    %vm373 = vweird.f32 %v365
    %vm374 = vweird.f32 %v368
    %vm375 = vmor %vm373, %vm374
    %v376 = vsel %vm375, %v368, %v372
    %v377 = vand.u32 2147483647, %v365
    %vm378 = vcmp.eq.f32.partialorder %v377, 8.507059e+37
    %v379 = vand.u32 %v365, 2147483648
    %v380 = vor.u32 1.1754944e-38, %v379
    %v381 = vsel %vm378, %v380, %v376
    %v382 = vmul.f32 1.0, %v381
    %v383 = vrcp.pop %v366
    %v384 = vmul.f32 %v366, %v383
    %v385 = vsub.f32 1.0, %v384
    %v386 = vmul.f32 %v383, %v385
    %v387 = vadd.f32 %v383, %v386
    %vm388 = vweird.f32 %v366
    %vm389 = vweird.f32 %v383
    %vm390 = vmor %vm388, %vm389
    %v391 = vsel %vm390, %v383, %v387
    %v392 = vand.u32 2147483647, %v366
    %vm393 = vcmp.eq.f32.partialorder %v392, 8.507059e+37
    %v394 = vand.u32 %v366, 2147483648
    %v395 = vor.u32 1.1754944e-38, %v394
    %v396 = vsel %vm393, %v395, %v391
    %v397 = vmul.f32 1.0, %v396
    %v398 = vrcp.pop %v367
    %v399 = vmul.f32 %v367, %v398
    %v400 = vsub.f32 1.0, %v399
    %v401 = vmul.f32 %v398, %v400
    %v402 = vadd.f32 %v398, %v401
    %vm403 = vweird.f32 %v367
    %vm404 = vweird.f32 %v398
    %vm405 = vmor %vm403, %vm404
    %v406 = vsel %vm405, %v398, %v402
    %v407 = vand.u32 2147483647, %v367
    %vm408 = vcmp.eq.f32.partialorder %v407, 8.507059e+37
    %v409 = vand.u32 %v367, 2147483648
    %v410 = vor.u32 1.1754944e-38, %v409
    %v411 = vsel %vm408, %v410, %v406
    %v412 = vmul.f32 1.0, %v411
    %v413 = vmul.f32 %v348, %v382
    %v414 = vmul.f32 %v351, %v397
    %v415 = vmul.f32 %v354, %v412
    %v416 = vld [vmem:[#allocation7] sm:$0xff]
    %v417 = vld [vmem:[#allocation7 + $0x8] sm:$0xff]
    %v418 = vld [vmem:[#allocation7 + $0x10] sm:$0xff]
    %v419 = vld [vmem:[#allocation7 + $0x18] sm:$0xff]
    %v420 = vld [vmem:[#allocation7 + $0x20] sm:$0xff]
    %v421 = vld [vmem:[#allocation7 + $0x28] sm:$0xff]
    %v422 = vld [vmem:[#allocation7 + $0x30] sm:$0xff]
    %v423 = vld [vmem:[#allocation7 + $0x38] sm:$0xff]
    %v424 = vld [vmem:[#allocation7 + $0x40] sm:$0xff]
    %v425 = vld [vmem:[#allocation7 + $0x48] sm:$0xff]
    %v426 = vld [vmem:[#allocation7 + $0x50] sm:$0xff]
    %v427 = vld [vmem:[#allocation7 + $0x58] sm:$0xff]
    %v428 = vld [vmem:[#allocation7 + $0x60] sm:$0xff]
    %v429 = vld [vmem:[#allocation7 + $0x68] sm:$0xff]
    %v430 = vld [vmem:[#allocation7 + $0x70] sm:$0xff]
    %v431 = vld [vmem:[#allocation7 + $0x78] sm:$0xff]
    %v432 = vld [vmem:[#allocation7 + $0x80] sm:$0xff]
    %v433 = vld [vmem:[#allocation7 + $0x88] sm:$0xff]
    %v434 = vld [vmem:[#allocation7 + $0x90] sm:$0xff]
    %v435 = vld [vmem:[#allocation7 + $0x98] sm:$0xff]
    %v436 = vld [vmem:[#allocation7 + $0xa0] sm:$0xff]
    %v437 = vld [vmem:[#allocation7 + $0xa8] sm:$0xff]
    %v438 = vld [vmem:[#allocation7 + $0xb0] sm:$0xff]
    %v439 = vld [vmem:[#allocation7 + $0xb8] sm:$0xff]
    %v440 = vld [vmem:[#allocation7 + $0xc0] sm:$0xff]
    %v441 = vld [vmem:[#allocation7 + $0xc8] sm:$0xff]
    %v442 = vld [vmem:[#allocation7 + $0xd0] sm:$0xff]
    %v443 = vld [vmem:[#allocation7 + $0xd8] sm:$0xff]
    %v444 = vld [vmem:[#allocation7 + $0xe0] sm:$0xff]
    %v445 = vld [vmem:[#allocation7 + $0xe8] sm:$0xff]
    %v446 = vld [vmem:[#allocation7 + $0xf0] sm:$0xff]
    %v447 = vld [vmem:[#allocation7 + $0xf8] sm:$0xff]
    %v448 = vld [vmem:[#allocation7 + $0x100] sm:$0xff]
    %v449 = vld [vmem:[#allocation7 + $0x108] sm:$0xff]
    %v450 = vld [vmem:[#allocation7 + $0x110] sm:$0xff]
    %v451 = vld [vmem:[#allocation7 + $0x118] sm:$0xff]
    %v452 = vld [vmem:[#allocation7 + $0x120] sm:$0xff]
    %v453 = vld [vmem:[#allocation7 + $0x128] sm:$0xff]
    %v454 = vld [vmem:[#allocation7 + $0x130] sm:$0xff]
    %v455 = vld [vmem:[#allocation7 + $0x138] sm:$0xff]
    %v456 = vld [vmem:[#allocation7 + $0x140] sm:$0xff]
    %v457 = vld [vmem:[#allocation7 + $0x148] sm:$0xff]
    %v458 = vld [vmem:[#allocation7 + $0x150] sm:$0xff]
    %v459 = vld [vmem:[#allocation7 + $0x158] sm:$0xff]
    %v460 = vld [vmem:[#allocation7 + $0x160] sm:$0xff]
    %v461 = vld [vmem:[#allocation7 + $0x168] sm:$0xff]
    %v462 = vld [vmem:[#allocation7 + $0x170] sm:$0xff]
    %v463 = vld [vmem:[#allocation7 + $0x178] sm:$0xff]
    %v464 = vld [vmem:[%s6] sm:$0x7]
    %v466 = vperm.slane %v464, 0
    %v467 = vperm.slane %v464, 1
    %v468 = vperm.slane %v464, 2
    %472 = vmatpush.msra.mxu0 %v461
    %473 = vmatpush.msra.mxu0 %v458
    %474 = vmatpush.msra.mxu0 %v455
    %475 = vmatpush.msra.mxu0 %v452
    %476 = vmatpush.msra.mxu0 %v449
    %477 = vmatpush.msra.mxu0 %v446
    %478 = vmatpush.msra.mxu0 %v443
    %479 = vmatpush.msra.mxu0 %v440
    %480 = vmatpush.msra.mxu0 %v437
    %481 = vmatpush.msra.mxu0 %v434
    %482 = vmatpush.msra.mxu0 %v431
    %483 = vmatpush.msra.mxu0 %v428
    %484 = vmatpush.msra.mxu0 %v425
    %485 = vmatpush.msra.mxu0 %v422
    %486 = vmatpush.msra.mxu0 %v419
    %487 = vmatpush.msra.mxu0 %v416
    %488 = vmatmul.f32.gmra.mxu0 %v413
    %v489 = vpop.f32.mrf.mxu0
    %v490 = vadd.f32 %v466, %v489
    %491 = vmatmul.f32.gmra.mxu0 %v414
    %v492 = vpop.f32.mrf.mxu0
    %v493 = vadd.f32 %v466, %v492
    %494 = vmatmul.f32.gmra.mxu0 %v415
    %v495 = vpop.f32.mrf.mxu0
    %v496 = vadd.f32 %v466, %v495
    %497 = vdwg.mxu0
    %498 = vmatpush.msra.mxu0 %v462
    %499 = vmatpush.msra.mxu0 %v459
    %500 = vmatpush.msra.mxu0 %v456
    %501 = vmatpush.msra.mxu0 %v453
    %502 = vmatpush.msra.mxu0 %v450
    %503 = vmatpush.msra.mxu0 %v447
    %504 = vmatpush.msra.mxu0 %v444
    %505 = vmatpush.msra.mxu0 %v441
    %506 = vmatpush.msra.mxu0 %v438
    %507 = vmatpush.msra.mxu0 %v435
    %508 = vmatpush.msra.mxu0 %v432
    %509 = vmatpush.msra.mxu0 %v429
    %510 = vmatpush.msra.mxu0 %v426
    %511 = vmatpush.msra.mxu0 %v423
    %512 = vmatpush.msra.mxu0 %v420
    %513 = vmatpush.msra.mxu0 %v417
    %514 = vmatmul.f32.gmra.mxu0 %v413
    %v515 = vpop.f32.mrf.mxu0
    %v516 = vadd.f32 %v467, %v515
    %517 = vmatmul.f32.gmra.mxu0 %v414
    %v518 = vpop.f32.mrf.mxu0
    %v519 = vadd.f32 %v467, %v518
    %520 = vmatmul.f32.gmra.mxu0 %v415
    %v521 = vpop.f32.mrf.mxu0
    %v522 = vadd.f32 %v467, %v521
    %523 = vdwg.mxu0
    %524 = vmatpush.msra.mxu0 %v463
    %525 = vmatpush.msra.mxu0 %v460
    %526 = vmatpush.msra.mxu0 %v457
    %527 = vmatpush.msra.mxu0 %v454
    %528 = vmatpush.msra.mxu0 %v451
    %529 = vmatpush.msra.mxu0 %v448
    %530 = vmatpush.msra.mxu0 %v445
    %531 = vmatpush.msra.mxu0 %v442
    %532 = vmatpush.msra.mxu0 %v439
    %533 = vmatpush.msra.mxu0 %v436
    %534 = vmatpush.msra.mxu0 %v433
    %535 = vmatpush.msra.mxu0 %v430
    %536 = vmatpush.msra.mxu0 %v427
    %537 = vmatpush.msra.mxu0 %v424
    %538 = vmatpush.msra.mxu0 %v421
    %539 = vmatpush.msra.mxu0 %v418
    %540 = vmatmul.f32.gmra.mxu0 %v413
    %v541 = vpop.f32.mrf.mxu0
    %v542 = vadd.f32 %v468, %v541
    %543 = vmatmul.f32.gmra.mxu0 %v414
    %v544 = vpop.f32.mrf.mxu0
    %v545 = vadd.f32 %v468, %v544
    %546 = vmatmul.f32.gmra.mxu0 %v415
    %v547 = vpop.f32.mrf.mxu0
    %v548 = vadd.f32 %v468, %v547
    %549 = vdwg.mxu0
    %v550 = vmul.f32 %v144, %v188
    %v551 = vmul.f32 %v147, %v191
    %v552 = vmul.f32 %v150, %v194
    %v553 = vmul.f32 %v153, %v197
    %v554 = vmul.f32 %v156, %v200
    %v555 = vmul.f32 %v159, %v203
    %v556 = vmul.f32 %v162, %v206
    %v557 = vmul.f32 %v165, %v209
    %v558 = vmul.f32 %v168, %v212
    %v559 = vadd.f32 %v550, %v553
    %v560 = vadd.f32 %v559, %v556
    %v561 = vadd.f32 %v551, %v554
    %v562 = vadd.f32 %v561, %v557
    %v563 = vadd.f32 %v552, %v555
    %v564 = vadd.f32 %v563, %v558
    %v565 = vadd.f32 %v82, %v490
    %v566 = vadd.f32 %v83, %v493
    %v567 = vadd.f32 %v84, %v496
    %v568 = vmul.f32 %v542, %v560
    %v569 = vmul.f32 %v545, %v562
    %v570 = vmul.f32 %v548, %v564
    %v571 = vadd.f32 %v565, %v568
    %v572 = vadd.f32 %v566, %v569
    %v573 = vadd.f32 %v567, %v570
    %574 = vadd.xlane.f32.xlu0 %v571
    %v575 = vpop.xlane.xlu0 %574
    %576 = vadd.xlane.f32.xlu0 %v572
    %v577 = vpop.xlane.xlu0 %576
    %578 = vadd.xlane.f32.xlu0 %v573
    %v579 = vpop.xlane.xlu0 %578
    %v580 = vrcp.pop 128.0
    %v581 = vmul.f32 128.0, %v580
    %v582 = vsub.f32 1.0, %v581
    %v583 = vmul.f32 %v580, %v582
    %v584 = vadd.f32 %v580, %v583
    %vm585 = vweird.f32 %v580
    %v586 = vsel %vm585, %v580, %v584
    %v587 = vmul.f32 %v575, %v586
    %v588 = vmul.f32 %v577, %v586
    %v589 = vmul.f32 %v579, %v586
    %v590 = vsub.f32 %v571, %v587
    %v591 = vsub.f32 %v572, %v588
    %v592 = vsub.f32 %v573, %v589
    %v593 = vmul.f32 %v590, %v590
    %v594 = vmul.f32 %v591, %v591
    %v595 = vmul.f32 %v592, %v592
    %596 = vadd.xlane.f32.xlu0 %v593
    %v597 = vpop.xlane.xlu0 %596
    %598 = vadd.xlane.f32.xlu0 %v594
    %v599 = vpop.xlane.xlu0 %598
    %600 = vadd.xlane.f32.xlu0 %v595
    %v601 = vpop.xlane.xlu0 %600
    %v602 = vmul.f32 %v597, %v586
    %v603 = vmul.f32 %v599, %v586
    %v604 = vmul.f32 %v601, %v586
    %v605 = vadd.f32 %v602, 1e-05
    %v606 = vadd.f32 %v603, 1e-05
    %v607 = vadd.f32 %v604, 1e-05
    %v608 = vrsqrt.pop %v605
    %v609 = vmul.f32 %v608, %v605
    %v610 = vmul.f32 %v609, %v608
    %v611 = vmul.f32 0.5, %v610
    %v612 = vsub.f32 1.5, %v611
    %v613 = vmul.f32 %v608, %v612
    %vm614 = vweird.f32 %v605
    %vm615 = vweird.f32 %v608
    %vm616 = vmor %vm614, %vm615
    %v617 = vsel %vm616, %v608, %v613
    %v618 = vrsqrt.pop %v606
    %v619 = vmul.f32 %v618, %v606
    %v620 = vmul.f32 %v619, %v618
    %v621 = vmul.f32 0.5, %v620
    %v622 = vsub.f32 1.5, %v621
    %v623 = vmul.f32 %v618, %v622
    %vm624 = vweird.f32 %v606
    %vm625 = vweird.f32 %v618
    %vm626 = vmor %vm624, %vm625
    %v627 = vsel %vm626, %v618, %v623
    %v628 = vrsqrt.pop %v607
    %v629 = vmul.f32 %v628, %v607
    %v630 = vmul.f32 %v629, %v628
    %v631 = vmul.f32 0.5, %v630
    %v632 = vsub.f32 1.5, %v631
    %v633 = vmul.f32 %v628, %v632
    %vm634 = vweird.f32 %v607
    %vm635 = vweird.f32 %v628
    %vm636 = vmor %vm634, %vm635
    %v637 = vsel %vm636, %v628, %v633
    %v638 = vmul.f32 %v590, %v617
    %v639 = vmul.f32 %v591, %v627
    %v640 = vmul.f32 %v592, %v637
    %v641 = vld [vmem:[%s7] sm:$0x1]
    %v643 = vperm.slane %v641, 0
    %v645 = vmul.f32 %v638, %v643
    %v646 = vmul.f32 %v639, %v643
    %v647 = vmul.f32 %v640, %v643
    %v648 = vld [vmem:[%s8] sm:$0x1]
    %v650 = vperm.slane %v648, 0
    %v652 = vadd.f32 %v645, %v650
    %v653 = vadd.f32 %v646, %v650
    %v654 = vadd.f32 %v647, %v650
    %655 = vst [vmem:[%s9] sm:$0xff] %v652
    %656 = vst [vmem:[%s9 + $0x8] sm:$0xff] %v653
    %657 = vst [vmem:[%s9 + $0x10] sm:$0xff] %v654
    %v658 = vmul.f32 %v516, %v188
    %v659 = vmul.f32 %v519, %v191
    %v660 = vmul.f32 %v522, %v194
    %v661 = vmul.f32 %v516, %v197
    %v662 = vmul.f32 %v519, %v200
    %v663 = vmul.f32 %v522, %v203
    %v664 = vmul.f32 %v516, %v206
    %v665 = vmul.f32 %v519, %v209
    %v666 = vmul.f32 %v522, %v212
    %v667 = vadd.f32 %v85, %v658
    %v668 = vadd.f32 %v86, %v659
    %v669 = vadd.f32 %v87, %v660
    %v670 = vadd.f32 %v88, %v661
    %v671 = vadd.f32 %v89, %v662
    %v672 = vadd.f32 %v90, %v663
    %v673 = vadd.f32 %v91, %v664
    %v674 = vadd.f32 %v92, %v665
    %v675 = vadd.f32 %v93, %v666
    %v676 = vmul.f32 %v667, %v667
    %v677 = vmul.f32 %v668, %v668
    %v678 = vmul.f32 %v669, %v669
    %v679 = vmul.f32 %v670, %v670
    %v680 = vmul.f32 %v671, %v671
    %v681 = vmul.f32 %v672, %v672
    %v682 = vmul.f32 %v673, %v673
    %v683 = vmul.f32 %v674, %v674
    %v684 = vmul.f32 %v675, %v675
    %v685 = vadd.f32 %v676, %v679
    %v686 = vadd.f32 %v685, %v682
    %v687 = vadd.f32 %v677, %v680
    %v688 = vadd.f32 %v687, %v683
    %v689 = vadd.f32 %v678, %v681
    %v690 = vadd.f32 %v689, %v684
    %v691 = vadd.f32 %v686, 1e-08
    %v692 = vadd.f32 %v688, 1e-08
    %v693 = vadd.f32 %v690, 1e-08
    %v694 = vrsqrt.pop %v691
    %v695 = vmul.f32 %v694, %v691
    %v696 = vmul.f32 %v695, %v694
    %v697 = vmul.f32 0.5, %v696
    %v698 = vsub.f32 1.5, %v697
    %v699 = vmul.f32 %v694, %v698
    %vm700 = vweird.f32 %v691
    %vm701 = vweird.f32 %v694
    %vm702 = vmor %vm700, %vm701
    %v703 = vsel %vm702, %v694, %v699
    %v704 = vrsqrt.pop %v692
    %v705 = vmul.f32 %v704, %v692
    %v706 = vmul.f32 %v705, %v704
    %v707 = vmul.f32 0.5, %v706
    %v708 = vsub.f32 1.5, %v707
    %v709 = vmul.f32 %v704, %v708
    %vm710 = vweird.f32 %v692
    %vm711 = vweird.f32 %v704
    %vm712 = vmor %vm710, %vm711
    %v713 = vsel %vm712, %v704, %v709
    %v714 = vrsqrt.pop %v693
    %v715 = vmul.f32 %v714, %v693
    %v716 = vmul.f32 %v715, %v714
    %v717 = vmul.f32 0.5, %v716
    %v718 = vsub.f32 1.5, %v717
    %v719 = vmul.f32 %v714, %v718
    %vm720 = vweird.f32 %v693
    %vm721 = vweird.f32 %v714
    %vm722 = vmor %vm720, %vm721
    %v723 = vsel %vm722, %v714, %v719
    %v724 = vmul.f32 %v667, %v703
    %v725 = vmul.f32 %v668, %v713
    %v726 = vmul.f32 %v669, %v723
    %v727 = vmul.f32 %v670, %v703
    %v728 = vmul.f32 %v671, %v713
    %v729 = vmul.f32 %v672, %v723
    %v730 = vmul.f32 %v673, %v703
    %v731 = vmul.f32 %v674, %v713
    %v732 = vmul.f32 %v675, %v723
    %733 = vst [vmem:[#allocation8] sm:$0xff] %v724
    %734 = vst [vmem:[#allocation8 + $0x8] sm:$0xff] %v725
    %735 = vst [vmem:[#allocation8 + $0x10] sm:$0xff] %v726
    %736 = vst [vmem:[#allocation8 + $0x18] sm:$0xff] %v727
    %737 = vst [vmem:[#allocation8 + $0x20] sm:$0xff] %v728
    %738 = vst [vmem:[#allocation8 + $0x28] sm:$0xff] %v729
    %739 = vst [vmem:[#allocation8 + $0x30] sm:$0xff] %v730
    %740 = vst [vmem:[#allocation8 + $0x38] sm:$0xff] %v731
    %741 = vst [vmem:[#allocation8 + $0x40] sm:$0xff] %v732
    // Predicated region
    $region50: #{painn_forward.11} parent=1 // pred_check
      _
    $region51: #{painn_forward.11} parent=1 // pred_check_branch
      %743 = sbr.rel (0) target = $region53
    $region52: #{painn_forward.11} parent=1 // pred_region
      _
    $region53: #{painn_forward.11} parent=1 // pred_fallthru
      _
    // Predicated region
    $region54: #{painn_forward.11} parent=1 // pred_check
      _
    $region55: #{painn_forward.11} parent=1 // pred_check_branch
      %745 = sbr.rel (0) target = $region57
    $region56: #{painn_forward.11} parent=1 // pred_region
      %747 = vsyncadd [#allocation4], 0
      %s748 = sshll.u32 [#allocation8], 4
      %s749 = int_to_ptr.vmem [resolvable:$true] %s748
      %s750 = sshll.u32 %s10, 4
      %s751 = int_to_ptr.hbm [resolvable:$true] %s750
      %756 = dma.vmem_to_hbm [thread:$0]  %s749, 1152, %s751, [#allocation4], 128, 128, 8
    $region57: #{painn_forward.11} parent=1 // pred_fallthru
      _
    // Predicated region
    $region58: #{painn_forward.11} parent=1 // pred_check
      _
    $region59: #{painn_forward.11} parent=1 // pred_check_branch
      %758 = sbr.rel (0) target = $region61
    $region60: #{painn_forward.11} parent=1 // pred_region
      _
    $region61: #{painn_forward.11} parent=1 // pred_fallthru
      _
    // Predicated region
    $region62: #{painn_forward.11} parent=1 // pred_check
      _
    $region63: #{painn_forward.11} parent=1 // pred_check_branch
      %760 = sbr.rel (0) target = $region65
    $region64: #{painn_forward.11} parent=1 // pred_region
      %762 = dma.done [#allocation4], 1152
    $region65: #{painn_forward.11} parent=1 // pred_fallthru
      _
    %763 = vsyncpa [#allocation3], 1
    %764 = vsyncpa [#allocation6], 1
    %765 = vsyncpa [#allocation4], 1

</llo_original>
